<compile_context>
chip_gen: v5e
topology: v5e:2x2
jax: 0.10.0
libtpu: 0.0.40
codegen_flags: <defaults>
</compile_context>

<pallas_src>
import functools
import math

import jax
import jax.numpy as jnp
import numpy as np
from jax.experimental import pallas as pl
from jax.experimental.pallas import tpu as pltpu


def _pos_enc_kernel(emb_ref, out_ref, *, F, temperature):
    """Sinusoid expansion for one (batch-block, channel-tile) grid step.

    emb_ref: (bB, 2, HW) float32 -- [y_embed | x_embed], flattened row-major
             over (H, W) so HW is the lane dimension.
    out_ref: (bB, 2, tF, HW) out_dtype -- channels c*tF .. c*tF+tF-1 of
             pos_y (slot 0) and pos_x (slot 1).
    """
    tF = out_ref.shape[2]
    c = pl.program_id(1)

    # Per-channel scale / phase generated in-kernel (no padded (F,1,1) inputs).
    #   dim_t[k]  = temperature ** (2*(k//2)/F)
    #   channel k: even -> sin(e/dim_t[k]); odd -> cos(e/dim_t[k])
    #              == sin(e * inv_dim_t[k] + phase[k]),  phase = (k & 1)*pi/2
    ch = jax.lax.broadcasted_iota(jnp.int32, (tF, 1), 0) + c * tF          # (tF, 1)
    pair = (ch >> 1).astype(jnp.float32)
    inv_dim_t = jnp.exp(pair * (-2.0 * math.log(temperature) / F))         # (tF, 1)
    phase = (ch & 1).astype(jnp.float32) * (0.5 * math.pi)                 # (tF, 1)

    emb = emb_ref[...]                                                     # (bB, 2, HW)
    # Single fused argument tensor -> single sin stream -> single store.
    arg = emb[:, :, None, :] * inv_dim_t[None, None] + phase[None, None]   # (bB,2,tF,HW)
    out_ref[...] = jnp.sin(arg).astype(out_ref.dtype)


def _round_up(n, m):
    return ((n + m - 1) // m) * m


def _choose_tiles(B, F, HW, out_itemsize):
    """Pick channel tile tF (divides F), batch block bB (divides B) and an
    optional vmem limit from a padded-shape VMEM estimate (lane dim rounded to
    128, sublane dim to 8, blocks double-buffered)."""
    HW_pad = _round_up(HW, 128)

    def out_block_bytes(bB, tF):
        return bB * 2 * _round_up(tF, 8) * HW_pad * out_itemsize

    def est_bytes(bB, tF):
        out_blk = out_block_bytes(bB, tF)
        in_blk = bB * 8 * HW_pad * 4                      # (bB, 2->8, HW) f32
        live = 2 * bB * 2 * tF * HW_pad * 4               # f32 arg + sin result
        return 2 * out_blk + 2 * in_blk + live

    budget = 12 * 1024 * 1024    # stays under every chip's default scoped-VMEM limit

    cands = [t for t in range(F, 0, -1) if F % t == 0 and (t % 8 == 0 or t == F)]
    tF = cands[-1]                                         # smallest legal tile
    for t in cands:                                        # largest that fits
        if est_bytes(1, t) <= budget:
            tF = t
            break

    bB = 1                                                 # pack tiny batches
    while (B % (bB * 2) == 0 and est_bytes(bB * 2, tF) <= budget
           and out_block_bytes(bB, tF) < 256 * 1024):
        bB *= 2

    vmem_limit = None
    total = est_bytes(bB, tF)
    if total > budget:
        # Huge H*W: even the smallest legal tile overflows the default scoped
        # limit. Raise it, leaving >=16 MiB headroom under v7x's 64 MiB VMEM.
        vmem_limit = min(_round_up(int(total * 1.25), 1024), 48 * 1024 * 1024)
    return tF, bB, vmem_limit


def positional_encoding_2d(mask, num_pos_feats=64, temperature=10000,
                           normalize=False, scale=None, out_dtype=jnp.float32):
    """mask: (B, H, W) bool. Returns (B, 2*num_pos_feats, H, W) in out_dtype."""
    if scale is not None and normalize is False:
        raise ValueError('normalize should be True if scale is passed')
    if scale is None:
        scale = 2 * math.pi

    B, H, W = mask.shape
    F = int(num_pos_feats)
    HW = H * W

    # Cheap preamble (one small fused XLA pass over (B, H, W), ~2/F of the
    # kernel's HBM traffic): cumsums + optional normalization, then flatten so
    # the kernel only ever sees lane-dense (..., HW) operands.
    not_mask = (~mask).astype(jnp.float32)
    y_embed = jnp.cumsum(not_mask, axis=1)
    x_embed = jnp.cumsum(not_mask, axis=2)
    if normalize:
        eps = 1e-06
        y_embed = (y_embed - 0.5) / (y_embed[:, -1:, :] + eps) * scale
        x_embed = (x_embed - 0.5) / (x_embed[:, :, -1:] + eps) * scale
    embeds = jnp.stack([y_embed, x_embed], axis=1).reshape(B, 2, HW)

    out_itemsize = jnp.dtype(out_dtype).itemsize
    tF, bB, vmem_limit = _choose_tiles(B, F, HW, out_itemsize)

    kernel = functools.partial(_pos_enc_kernel, F=F,
                               temperature=float(temperature))

    cp_kwargs = dict(dimension_semantics=("parallel", "parallel"))
    if vmem_limit is not None:
        cp_kwargs["vmem_limit_bytes"] = vmem_limit

    out = pl.pallas_call(
        kernel,
        out_shape=jax.ShapeDtypeStruct((B, 2, F, HW), out_dtype),
        grid_spec=pltpu.PrefetchScalarGridSpec(
            num_scalar_prefetch=0,
            grid=(B // bB, F // tF),
            in_specs=[pl.BlockSpec((bB, 2, HW), lambda b, c: (b, 0, 0))],
            out_specs=pl.BlockSpec((bB, 2, tF, HW), lambda b, c: (b, 0, c, 0)),
        ),
        compiler_params=pltpu.CompilerParams(**cp_kwargs),
    )(embeds)

    # (B, 2, F, HW) -> (B, 2F, H, W): contiguous metadata reshape (free).
    # First F channels are pos_y, next F pos_x, matching the reference concat.
    return out.reshape(B, 2 * F, H, W)


def _reference(mask, num_pos_feats, temperature, normalize, scale):
    """Pure-JAX transcription of the PyTorch forward, for verification."""
    if scale is None:
        scale = 2 * math.pi
    not_mask = (~mask).astype(jnp.float32)
    y_embed = jnp.cumsum(not_mask, axis=1)
    x_embed = jnp.cumsum(not_mask, axis=2)
    if normalize:
        eps = 1e-06
        y_embed = (y_embed - 0.5) / (y_embed[:, -1:, :] + eps) * scale
        x_embed = (x_embed - 0.5) / (x_embed[:, :, -1:] + eps) * scale
    dim_t = jnp.arange(num_pos_feats, dtype=jnp.float32)
    dim_t = float(temperature) ** (2.0 * jnp.floor(dim_t / 2.0) / num_pos_feats)
    pos_x = x_embed[:, :, :, None] / dim_t
    pos_y = y_embed[:, :, :, None] / dim_t
    B, H, W, _ = pos_x.shape
    pos_x = jnp.stack((jnp.sin(pos_x[:, :, :, 0::2]), jnp.cos(pos_x[:, :, :, 1::2])),
                      axis=4).reshape(B, H, W, -1)
    pos_y = jnp.stack((jnp.sin(pos_y[:, :, :, 0::2]), jnp.cos(pos_y[:, :, :, 1::2])),
                      axis=4).reshape(B, H, W, -1)
    pos = jnp.concatenate((pos_y, pos_x), axis=3).transpose(0, 3, 1, 2)
    return pos


if __name__ == "__main__":
    B, C, H, W = 2, 4, 16, 16
    num_pos_feats = 32
    temperature = 10000

    key = jax.random.PRNGKey(0)
    kx, km = jax.random.split(key)
    # x is only used for device/dtype in the original module; built for parity.
    x = jax.random.normal(kx, (B, C, H, W), dtype=jnp.float32)
    mask = jax.random.bernoulli(km, 0.3, (B, H, W))

    for normalize, scale in ((False, None), (True, None)):
        fn = jax.jit(functools.partial(
            positional_encoding_2d, num_pos_feats=num_pos_feats,
            temperature=temperature, normalize=normalize, scale=scale))
        pos = jax.block_until_ready(fn(mask))
        ref = _reference(mask, num_pos_feats, temperature, normalize, scale)
        assert pos.shape == (B, 2 * num_pos_feats, H, W), pos.shape
        np.testing.assert_allclose(np.asarray(pos), np.asarray(ref),
                                   rtol=1e-4, atol=1e-4)

    print("KERNEL_OK")
</pallas_src>

<mosaic_0001>
module attributes {stable_mosaic.version = 11 : i64} {
  func.func @_pos_enc_kernel(%arg0: i32, %arg1: i32, %arg2: memref<2x2x256xf32, #tpu.memory_space<vmem>>, %arg3: memref<2x2x32x256xf32, #tpu.memory_space<vmem>>) attributes {dimension_semantics = [#tpu.dimension_semantics<parallel>, #tpu.dimension_semantics<parallel>], iteration_bounds = array<i64: 1, 1>, scalar_prefetch = 0 : i64, scratch_operands = 0 : i64, tpu.core_type = #tpu.core_type<tc>, window_params = [{transform_indices = @transform_0, window_bounds = array<i64: 2, 2, 256>}, {transform_indices = @transform_1, window_bounds = array<i64: 2, 2, 32, 256>}]} {
    %0 = tpu.iota {dimensions = array<i32: 0>} : vector<32x1xi32>
    %c32_i32 = arith.constant 32 : i32
    %1 = arith.muli %arg1, %c32_i32 : i32
    %2 = vector.broadcast %1 : i32 to vector<32x1xi32>
    %3 = arith.addi %0, %2 : vector<32x1xi32>
    %c1_i32 = arith.constant 1 : i32
    %4 = vector.broadcast %c1_i32 : i32 to vector<32x1xi32>
    %5 = arith.shrsi %3, %4 : vector<32x1xi32>
    %6 = arith.sitofp %5 : vector<32x1xi32> to vector<32x1xf32>
    %cst = arith.constant -0.575646281 : f32
    %7 = vector.broadcast %cst : f32 to vector<32x1xf32>
    %8 = arith.mulf %6, %7 : vector<32x1xf32>
    %9 = math.exp %8 : vector<32x1xf32>
    %c1_i32_0 = arith.constant 1 : i32
    %10 = vector.broadcast %c1_i32_0 : i32 to vector<32x1xi32>
    %11 = arith.andi %3, %10 : vector<32x1xi32>
    %12 = arith.sitofp %11 : vector<32x1xi32> to vector<32x1xf32>
    %cst_1 = arith.constant 1.57079637 : f32
    %13 = vector.broadcast %cst_1 : f32 to vector<32x1xf32>
    %14 = arith.mulf %12, %13 : vector<32x1xf32>
    %c0 = arith.constant 0 : index
    %c0_2 = arith.constant 0 : index
    %c0_3 = arith.constant 0 : index
    %15 = vector.load %arg2[%c0, %c0_2, %c0_3] : memref<2x2x256xf32, #tpu.memory_space<vmem>>, vector<2x2x256xf32>
    %16 = vector.shape_cast %15 : vector<2x2x256xf32> to vector<2x2x1x256xf32>
    %17 = vector.shape_cast %9 : vector<32x1xf32> to vector<1x1x32x1xf32>
    %18 = vector.broadcast %16 : vector<2x2x1x256xf32> to vector<2x2x32x256xf32>
    %19 = vector.broadcast %17 : vector<1x1x32x1xf32> to vector<2x2x32x256xf32>
    %20 = arith.mulf %18, %19 : vector<2x2x32x256xf32>
    %21 = vector.shape_cast %14 : vector<32x1xf32> to vector<1x1x32x1xf32>
    %22 = vector.broadcast %21 : vector<1x1x32x1xf32> to vector<2x2x32x256xf32>
    %23 = arith.addf %20, %22 : vector<2x2x32x256xf32>
    %24 = math.sin %23 : vector<2x2x32x256xf32>
    %c0_4 = arith.constant 0 : index
    %c0_5 = arith.constant 0 : index
    %c0_6 = arith.constant 0 : index
    %c0_7 = arith.constant 0 : index
    %25 = vector.load %arg3[%c0_4, %c0_5, %c0_6, %c0_7] : memref<2x2x32x256xf32, #tpu.memory_space<vmem>>, vector<2x2x32x256xf32>
    tpu.vector_store %arg3[%c0_4, %c0_5, %c0_6, %c0_7], %24 {strides = array<i32>} : memref<2x2x32x256xf32, #tpu.memory_space<vmem>>, vector<2x2x32x256xf32>,
    return
  }
  func.func @transform_0(%arg0: i32, %arg1: i32) -> (i32, i32, i32) {
    %c0_i32 = arith.constant 0 : i32
    %c0_i32_0 = arith.constant 0 : i32
    %c0_i32_1 = arith.constant 0 : i32
    return %arg0, %c0_i32, %c0_i32_0 : i32, i32, i32
  }
  func.func @transform_1(%arg0: i32, %arg1: i32) -> (i32, i32, i32, i32) {
    %c0_i32 = arith.constant 0 : i32
    %c0_i32_0 = arith.constant 0 : i32
    %c0_i32_1 = arith.constant 0 : i32
    return %arg0, %c0_i32, %arg1, %c0_i32_0 : i32, i32, i32, i32
  }
}

</mosaic_0001>

<llo_original>
// kernel: positional_encoding_2d.1
$region0: #{positional_encoding_2d.1}
  #allocation0 [shape = 'u32[]', space=smem, size = 0x4, offset = 0x4, fixed_abs, tag = 'smem constant byte address 0x4 - core index']
  #allocation1 [shape = 'u32[72,128]{1,0:T(1,128)}', space=vmem, size = 0x9000, scoped, tag = 'internal scratch']
  %s0 = inlined_call_operand.vmem [shape: f32[2,2,256], index: 0, kind: input, shape index: {}]
  %s1 = inlined_call_operand.vmem [shape: f32[2,2,32,256], index: 1, kind: output, shape index: {}]
  %s2 = sld [smem:[#allocation0]]
  $region14: #{positional_encoding_2d.1} parent=0
    _
  %s4 = ssub.s32 1, %s2
  %s5 = scalar_select 0, %s4, %s2
  // Predicated region
  $region2: #{positional_encoding_2d.1} parent=0 // pred_check
    _
  $region3: #{positional_encoding_2d.1} parent=0 // pred_check_branch
    %7 = sbr.rel (0) target = $region5
  $region4: #{positional_encoding_2d.1} parent=0 // pred_region
    _
  $region5: #{positional_encoding_2d.1} parent=0 // pred_fallthru
    _
  %v8 = vlaneseq
  %v9 = vshrl.u32 %v8, 7
  %v10 = vadd.s32 %v9, 8
  %v11 = vadd.s32 %v9, 16
  %v12 = vadd.s32 %v9, 24
  %s13 = smul.u32 0, 32
  %v14 = vstv %s13
  %v15 = vadd.s32 %v9, %v14
  %v16 = vadd.s32 %v10, %v14
  %v17 = vadd.s32 %v11, %v14
  %v18 = vadd.s32 %v12, %v14
  %v19 = vshra.s32 %v15, 1
  %v20 = vshra.s32 %v16, 1
  %v21 = vshra.s32 %v17, 1
  %v22 = vshra.s32 %v18, 1
  %v23 = vcvt.s32.f32 %v19
  %v24 = vcvt.s32.f32 %v20
  %v25 = vcvt.s32.f32 %v21
  %v26 = vcvt.s32.f32 %v22
  %v27 = vmul.f32 %v23, -0.5756463
  %v28 = vmul.f32 %v24, -0.5756463
  %v29 = vmul.f32 %v25, -0.5756463
  %v30 = vmul.f32 %v26, -0.5756463
  %v31 = vmul.f32 %v27, 1.442695
  %v32 = vpow.pop %v31
  %v33 = vmul.f32 %v28, 1.442695
  %v34 = vpow.pop %v33
  %v35 = vmul.f32 %v29, 1.442695
  %v36 = vpow.pop %v35
  %v37 = vmul.f32 %v30, 1.442695
  %v38 = vpow.pop %v37
  %v39 = vand.u32 %v15, 1
  %v40 = vand.u32 %v16, 1
  %v41 = vand.u32 %v17, 1
  %v42 = vand.u32 %v18, 1
  %v43 = vcvt.s32.f32 %v39
  %v44 = vcvt.s32.f32 %v40
  %v45 = vcvt.s32.f32 %v41
  %v46 = vcvt.s32.f32 %v42
  %v47 = vmul.f32 %v43, 1.5707964
  %v48 = vmul.f32 %v44, 1.5707964
  %v49 = vmul.f32 %v45, 1.5707964
  %v50 = vmul.f32 %v46, 1.5707964
  %v51 = vld [vmem:[%s0] sm:$0xf]
  %v52 = vld [vmem:[%s0 + $0x4] sm:$0xf]
  %v55 = vrot.slane %v51, 1
  %v56 = vrot.slane %v51, 2
  %v57 = vrot.slane %v51, 3
  %v58 = vrot.slane %v52, 1
  %v59 = vrot.slane %v52, 2
  %v60 = vrot.slane %v52, 3
  %vm61 = vcmask 1040384
  %v62 = vsel %vm61, %v51, %v55
  %vm63 = vcmask 1042434
  %v64 = vsel %vm63, %v56, %v57
  %vm65 = vcmask 1041408
  %v66 = vsel %vm65, %v62, %v64
  %vm67 = vcmask 1041409
  %v68 = vsel %vm67, %v51, %v55
  %vm69 = vcmask 1043459
  %v70 = vsel %vm69, %v56, %v57
  %vm71 = vcmask 1042433
  %v72 = vsel %vm71, %v68, %v70
  %v73 = vrot.slane %v72, 1
  %v74 = vsel %vm61, %v52, %v58
  %v75 = vsel %vm63, %v59, %v60
  %v76 = vsel %vm65, %v74, %v75
  %v77 = vsel %vm67, %v52, %v58
  %v78 = vsel %vm69, %v59, %v60
  %v79 = vsel %vm71, %v77, %v78
  %v80 = vrot.slane %v79, 1
  %v81 = vperm.slane %v66, 0
  %v82 = vperm.slane %v66, 1
  %v83 = vperm.slane %v73, 0
  %v84 = vperm.slane %v73, 1
  %v85 = vperm.slane %v76, 0
  %v86 = vperm.slane %v76, 1
  %v87 = vperm.slane %v80, 0
  %v88 = vperm.slane %v80, 1
  %v97 = vmul.f32 %v81, %v32
  %v98 = vmul.f32 %v82, %v32
  %v99 = vmul.f32 %v81, %v34
  %v100 = vmul.f32 %v82, %v34
  %v101 = vmul.f32 %v81, %v36
  %v102 = vmul.f32 %v82, %v36
  %v103 = vmul.f32 %v81, %v38
  %v104 = vmul.f32 %v82, %v38
  %v105 = vmul.f32 %v83, %v32
  %v106 = vmul.f32 %v84, %v32
  %v107 = vmul.f32 %v83, %v34
  %v108 = vmul.f32 %v84, %v34
  %v109 = vmul.f32 %v83, %v36
  %v110 = vmul.f32 %v84, %v36
  %v111 = vmul.f32 %v83, %v38
  %v112 = vmul.f32 %v84, %v38
  %v113 = vmul.f32 %v85, %v32
  %v114 = vmul.f32 %v86, %v32
  %v115 = vmul.f32 %v85, %v34
  %v116 = vmul.f32 %v86, %v34
  %v117 = vmul.f32 %v85, %v36
  %v118 = vmul.f32 %v86, %v36
  %v119 = vmul.f32 %v85, %v38
  %v120 = vmul.f32 %v86, %v38
  %v121 = vmul.f32 %v87, %v32
  %v122 = vmul.f32 %v88, %v32
  %v123 = vmul.f32 %v87, %v34
  %v124 = vmul.f32 %v88, %v34
  %v125 = vmul.f32 %v87, %v36
  %v126 = vmul.f32 %v88, %v36
  %v127 = vmul.f32 %v87, %v38
  %v128 = vmul.f32 %v88, %v38
  %v129 = vadd.f32 %v97, %v47
  %v130 = vadd.f32 %v98, %v47
  %v131 = vadd.f32 %v99, %v48
  %v132 = vadd.f32 %v100, %v48
  %v133 = vadd.f32 %v101, %v49
  %v134 = vadd.f32 %v102, %v49
  %v135 = vadd.f32 %v103, %v50
  %v136 = vadd.f32 %v104, %v50
  %v137 = vadd.f32 %v105, %v47
  %v138 = vadd.f32 %v106, %v47
  %v139 = vadd.f32 %v107, %v48
  %v140 = vadd.f32 %v108, %v48
  %v141 = vadd.f32 %v109, %v49
  %v142 = vadd.f32 %v110, %v49
  %v143 = vadd.f32 %v111, %v50
  %v144 = vadd.f32 %v112, %v50
  %v145 = vadd.f32 %v113, %v47
  %v146 = vadd.f32 %v114, %v47
  %v147 = vadd.f32 %v115, %v48
  %v148 = vadd.f32 %v116, %v48
  %v149 = vadd.f32 %v117, %v49
  %v150 = vadd.f32 %v118, %v49
  %v151 = vadd.f32 %v119, %v50
  %v152 = vadd.f32 %v120, %v50
  %v153 = vadd.f32 %v121, %v47
  %v154 = vadd.f32 %v122, %v47
  %v155 = vadd.f32 %v123, %v48
  %v156 = vadd.f32 %v124, %v48
  %v157 = vadd.f32 %v125, %v49
  %v158 = vadd.f32 %v126, %v49
  %v159 = vadd.f32 %v127, %v50
  %v160 = vadd.f32 %v128, %v50
  %v161 = vand.u32 2147483647, %v129
  %vm162 = vcmp.le.f32.partialorder %v161, 0.7853982
  %vm163 = vcmp.lt.s32.totalorder %v129, 0
  %v164 = vand.u32 %v129, 2139095040
  %v165 = vshrl.u32 %v164, 23
  %v166 = vsub.s32 %v165, 127
  %v167 = vand.u32 2147483647, %v129
  %v168 = vand.u32 %v167, 8388607
  %v169 = vor.u32 %v168, 8388608
  %v170 = vsub.s32 0, %v169
  %v171 = vadd.s32 %v166, 1
  %vm172 = vcmp.gt.s32.totalorder %v171, 0
  %v173 = vsel %vm172, %v171, 0
  %v174 = vshrl.u32 %v173, 5
  %v175 = vand.u32 %v173, 31
  %v176 = vsub.s32 32, %v175
  %v177 = vshrl.u32 683565275, %v176
  %v178 = vshll.u32 683565275, %v175
  %v179 = vshrl.u32 2475754826, %v176
  %v180 = vor.u32 %v178, %v179
  %v181 = vshll.u32 2475754826, %v175
  %v182 = vshrl.u32 2131351028, %v176
  %v183 = vor.u32 %v181, %v182
  %v184 = vshll.u32 2131351028, %v175
  %v185 = vshrl.u32 2102212464, %v176
  %v186 = vor.u32 %v184, %v185
  %v187 = vshll.u32 2102212464, %v175
  %v188 = vshrl.u32 920167782, %v176
  %v189 = vor.u32 %v187, %v188
  %v190 = vshll.u32 920167782, %v175
  %v191 = vshrl.u32 1326507024, %v176
  %v192 = vor.u32 %v190, %v191
  %vm193 = vcmp.lt.s32.totalorder %v174, 1
  %vm194 = vcmp.lt.s32.totalorder %v174, 2
  %vm195 = vcmp.lt.s32.totalorder %v174, 3
  %vm196 = vcmp.lt.s32.totalorder %v174, 4
  %v197 = vsel %vm193, %v177, %v180
  %v198 = vsel %vm196, %v186, 2102212464
  %v199 = vsel %vm195, %v183, %v198
  %v200 = vsel %vm194, %v197, %v199
  %v201 = vsel %vm193, %v180, %v183
  %v202 = vsel %vm196, %v189, 920167782
  %v203 = vsel %vm195, %v186, %v202
  %v204 = vsel %vm194, %v201, %v203
  %v205 = vsel %vm193, %v183, %v186
  %v206 = vsel %vm196, %v192, 1326507024
  %v207 = vsel %vm195, %v189, %v206
  %v208 = vsel %vm194, %v205, %v207
  %v209 = vshll.u32 %v169, 8
  %v210 = vand.u32 %v209, 65535
  %v211 = vshrl.u32 %v209, 16
  %v212 = vand.u32 %v208, 65535
  %v213 = vshrl.u32 %v208, 16
  %v214 = vmul.u32 %v210, %v212
  %v215 = vmul.u32 %v210, %v213
  %v216 = vmul.u32 %v211, %v212
  %v217 = vmul.u32 %v211, %v213
  %v218 = vshll.u32 %v215, 16
  %v219 = vshrl.u32 %v215, 16
  %v220 = vshll.u32 %v216, 16
  %v221 = vshrl.u32 %v216, 16
  %vm222 = vc.u32 %v214, %v218
  %v223 = vsel %vm222, 1, 0
  %v224 = vadd.s32 %v214, %v218
  %v225 = vadd.s32 %v217, %v223
  %vm226 = vc.u32 %v224, %v220
  %v227 = vsel %vm226, 1, 0
  %v228 = vadd.s32 %v224, %v220
  %v229 = vadd.s32 %v225, %v227
  %v230 = vadd.s32 %v229, %v219
  %v231 = vadd.s32 %v230, %v221
  %v232 = vand.u32 %v209, 65535
  %v233 = vshrl.u32 %v209, 16
  %v234 = vand.u32 %v204, 65535
  %v235 = vshrl.u32 %v204, 16
  %v236 = vmul.u32 %v232, %v234
  %v237 = vmul.u32 %v232, %v235
  %v238 = vmul.u32 %v233, %v234
  %v239 = vmul.u32 %v233, %v235
  %v240 = vshll.u32 %v237, 16
  %v241 = vshrl.u32 %v237, 16
  %v242 = vshll.u32 %v238, 16
  %v243 = vshrl.u32 %v238, 16
  %vm244 = vc.u32 %v236, %v240
  %v245 = vsel %vm244, 1, 0
  %v246 = vadd.s32 %v236, %v240
  %v247 = vadd.s32 %v239, %v245
  %vm248 = vc.u32 %v246, %v242
  %v249 = vsel %vm248, 1, 0
  %v250 = vadd.s32 %v246, %v242
  %v251 = vadd.s32 %v247, %v249
  %v252 = vadd.s32 %v251, %v241
  %v253 = vadd.s32 %v252, %v243
  %v254 = vmul.u32 %v209, %v200
  %v255 = vadd.s32 %v231, %v250
  %vm256 = vc.u32 %v231, %v250
  %v257 = vadd.s32 %v253, 1
  %v258 = vsel %vm256, %v257, %v253
  %v259 = vadd.s32 %v254, %v258
  %v260 = vadd.s32 %v259, 536870912
  %v261 = vshrl.u32 %v260, 30
  %v262 = vshll.u32 %v261, 30
  %v263 = vsub.s32 %v259, %v262
  %vm264 = vcmp.lt.s32.totalorder %v263, 0
  %v265 = vsub.s32 0, %v263
  %v266 = vsel %vm264, %v265, %v263
  %v267 = vclz %v266
  %v268 = vsub.s32 %v267, 2
  %vm269 = vcmp.gt.s32.totalorder 0, %v268
  %v270 = vsel %vm269, 0, %v268
  %v271 = vsub.s32 32, %v270
  %v272 = vshll.u32 %v263, %v270
  %v273 = vshrl.u32 %v255, %v271
  %v274 = vor.u32 %v272, %v273
  %v275 = vsub.s32 4294967266, %v270
  %v276 = vadd.s32 %v275, 127
  %v277 = vshll.u32 %v276, 23
  %v278 = vor.u32 4788187, %v277
  %v279 = vand.u32 2147483647, %v278
  %v281 = vcvt.s32.f32 %v274
  %v282 = vmul.f32 %v281, %v279
  %v283 = vxor.u32 %v282, 2147483648
  %v284 = vsel %vm163, %v283, %v282
  %v285 = vsub.s32 4, %v261
  %v286 = vsel %vm163, %v285, %v261
  %v287 = vsel %vm162, %v129, %v284
  %v288 = vsel %vm162, 0, %v286
  %v289 = vmul.f32 %v287, %v287
  %v290 = vmul.f32 %v289, -0.001358992
  %v291 = vadd.f32 %v290, 0.041655596
  %v292 = vmul.f32 %v289, %v291
  %v293 = vadd.f32 %v292, -0.4999988
  %v294 = vmul.f32 %v289, %v293
  %v295 = vadd.f32 1.0, %v294
  %v296 = vmul.f32 %v287, %v287
  %v297 = vmul.f32 %v296, -0.00019511016
  %v298 = vadd.f32 %v297, 0.008332121
  %v299 = vmul.f32 %v296, %v298
  %v300 = vadd.f32 %v299, -0.16666654
  %v301 = vmul.f32 %v296, %v300
  %v302 = vadd.f32 %v301, 1.0
  %v303 = vmul.f32 %v302, %v287
  %vm304 = vweird.f32 %v129
  %v305 = vadd.s32 %v288, 3
  %v306 = vand.u32 %v305, 3
  %vm307 = vcmp.lt.s32.totalorder %v306, 2
  %vm308 = vcmp.eq.s32.totalorder %v306, 0
  %v309 = vxor.u32 %v303, 2147483648
  %v310 = vsel %vm308, %v295, %v309
  %vm311 = vcmp.eq.s32.totalorder %v306, 2
  %v312 = vxor.u32 %v295, 2147483648
  %v313 = vsel %vm311, %v312, %v303
  %v314 = vsel %vm307, %v310, %v313
  %v315 = vsel %vm304, nan, %v314
  %v316 = vand.u32 2147483647, %v130
  %vm317 = vcmp.le.f32.partialorder %v316, 0.7853982
  %vm318 = vcmp.lt.s32.totalorder %v130, 0
  %v319 = vand.u32 %v130, 2139095040
  %v320 = vshrl.u32 %v319, 23
  %v321 = vsub.s32 %v320, 127
  %v322 = vand.u32 2147483647, %v130
  %v323 = vand.u32 %v322, 8388607
  %v324 = vor.u32 %v323, 8388608
  %v325 = vsub.s32 0, %v324
  %v326 = vadd.s32 %v321, 1
  %vm327 = vcmp.gt.s32.totalorder %v326, 0
  %v328 = vsel %vm327, %v326, 0
  %v329 = vshrl.u32 %v328, 5
  %v330 = vand.u32 %v328, 31
  %v331 = vsub.s32 32, %v330
  %v332 = vshrl.u32 683565275, %v331
  %v333 = vshll.u32 683565275, %v330
  %v334 = vshrl.u32 2475754826, %v331
  %v335 = vor.u32 %v333, %v334
  %v336 = vshll.u32 2475754826, %v330
  %v337 = vshrl.u32 2131351028, %v331
  %v338 = vor.u32 %v336, %v337
  %v339 = vshll.u32 2131351028, %v330
  %v340 = vshrl.u32 2102212464, %v331
  %v341 = vor.u32 %v339, %v340
  %v342 = vshll.u32 2102212464, %v330
  %v343 = vshrl.u32 920167782, %v331
  %v344 = vor.u32 %v342, %v343
  %v345 = vshll.u32 920167782, %v330
  %v346 = vshrl.u32 1326507024, %v331
  %v347 = vor.u32 %v345, %v346
  %vm348 = vcmp.lt.s32.totalorder %v329, 1
  %vm349 = vcmp.lt.s32.totalorder %v329, 2
  %vm350 = vcmp.lt.s32.totalorder %v329, 3
  %vm351 = vcmp.lt.s32.totalorder %v329, 4
  %v352 = vsel %vm348, %v332, %v335
  %v353 = vsel %vm351, %v341, 2102212464
  %v354 = vsel %vm350, %v338, %v353
  %v355 = vsel %vm349, %v352, %v354
  %v356 = vsel %vm348, %v335, %v338
  %v357 = vsel %vm351, %v344, 920167782
  %v358 = vsel %vm350, %v341, %v357
  %v359 = vsel %vm349, %v356, %v358
  %v360 = vsel %vm348, %v338, %v341
  %v361 = vsel %vm351, %v347, 1326507024
  %v362 = vsel %vm350, %v344, %v361
  %v363 = vsel %vm349, %v360, %v362
  %v364 = vshll.u32 %v324, 8
  %v365 = vand.u32 %v364, 65535
  %v366 = vshrl.u32 %v364, 16
  %v367 = vand.u32 %v363, 65535
  %v368 = vshrl.u32 %v363, 16
  %v369 = vmul.u32 %v365, %v367
  %v370 = vmul.u32 %v365, %v368
  %v371 = vmul.u32 %v366, %v367
  %v372 = vmul.u32 %v366, %v368
  %v373 = vshll.u32 %v370, 16
  %v374 = vshrl.u32 %v370, 16
  %v375 = vshll.u32 %v371, 16
  %v376 = vshrl.u32 %v371, 16
  %vm377 = vc.u32 %v369, %v373
  %v378 = vsel %vm377, 1, 0
  %v379 = vadd.s32 %v369, %v373
  %v380 = vadd.s32 %v372, %v378
  %vm381 = vc.u32 %v379, %v375
  %v382 = vsel %vm381, 1, 0
  %v383 = vadd.s32 %v379, %v375
  %v384 = vadd.s32 %v380, %v382
  %v385 = vadd.s32 %v384, %v374
  %v386 = vadd.s32 %v385, %v376
  %v387 = vand.u32 %v364, 65535
  %v388 = vshrl.u32 %v364, 16
  %v389 = vand.u32 %v359, 65535
  %v390 = vshrl.u32 %v359, 16
  %v391 = vmul.u32 %v387, %v389
  %v392 = vmul.u32 %v387, %v390
  %v393 = vmul.u32 %v388, %v389
  %v394 = vmul.u32 %v388, %v390
  %v395 = vshll.u32 %v392, 16
  %v396 = vshrl.u32 %v392, 16
  %v397 = vshll.u32 %v393, 16
  %v398 = vshrl.u32 %v393, 16
  %vm399 = vc.u32 %v391, %v395
  %v400 = vsel %vm399, 1, 0
  %v401 = vadd.s32 %v391, %v395
  %v402 = vadd.s32 %v394, %v400
  %vm403 = vc.u32 %v401, %v397
  %v404 = vsel %vm403, 1, 0
  %v405 = vadd.s32 %v401, %v397
  %v406 = vadd.s32 %v402, %v404
  %v407 = vadd.s32 %v406, %v396
  %v408 = vadd.s32 %v407, %v398
  %v409 = vmul.u32 %v364, %v355
  %v410 = vadd.s32 %v386, %v405
  %vm411 = vc.u32 %v386, %v405
  %v412 = vadd.s32 %v408, 1
  %v413 = vsel %vm411, %v412, %v408
  %v414 = vadd.s32 %v409, %v413
  %v415 = vadd.s32 %v414, 536870912
  %v416 = vshrl.u32 %v415, 30
  %v417 = vshll.u32 %v416, 30
  %v418 = vsub.s32 %v414, %v417
  %vm419 = vcmp.lt.s32.totalorder %v418, 0
  %v420 = vsub.s32 0, %v418
  %v421 = vsel %vm419, %v420, %v418
  %v422 = vclz %v421
  %v423 = vsub.s32 %v422, 2
  %vm424 = vcmp.gt.s32.totalorder 0, %v423
  %v425 = vsel %vm424, 0, %v423
  %v426 = vsub.s32 32, %v425
  %v427 = vshll.u32 %v418, %v425
  %v428 = vshrl.u32 %v410, %v426
  %v429 = vor.u32 %v427, %v428
  %v430 = vsub.s32 4294967266, %v425
  %v431 = vadd.s32 %v430, 127
  %v432 = vshll.u32 %v431, 23
  %v433 = vor.u32 4788187, %v432
  %v434 = vand.u32 2147483647, %v433
  %v436 = vcvt.s32.f32 %v429
  %v437 = vmul.f32 %v436, %v434
  %v438 = vxor.u32 %v437, 2147483648
  %v439 = vsel %vm318, %v438, %v437
  %v440 = vsub.s32 4, %v416
  %v441 = vsel %vm318, %v440, %v416
  %v442 = vsel %vm317, %v130, %v439
  %v443 = vsel %vm317, 0, %v441
  %v444 = vmul.f32 %v442, %v442
  %v445 = vmul.f32 %v444, -0.001358992
  %v446 = vadd.f32 %v445, 0.041655596
  %v447 = vmul.f32 %v444, %v446
  %v448 = vadd.f32 %v447, -0.4999988
  %v449 = vmul.f32 %v444, %v448
  %v450 = vadd.f32 1.0, %v449
  %v451 = vmul.f32 %v442, %v442
  %v452 = vmul.f32 %v451, -0.00019511016
  %v453 = vadd.f32 %v452, 0.008332121
  %v454 = vmul.f32 %v451, %v453
  %v455 = vadd.f32 %v454, -0.16666654
  %v456 = vmul.f32 %v451, %v455
  %v457 = vadd.f32 %v456, 1.0
  %v458 = vmul.f32 %v457, %v442
  %vm459 = vweird.f32 %v130
  %v460 = vadd.s32 %v443, 3
  %v461 = vand.u32 %v460, 3
  %vm462 = vcmp.lt.s32.totalorder %v461, 2
  %vm463 = vcmp.eq.s32.totalorder %v461, 0
  %v464 = vxor.u32 %v458, 2147483648
  %v465 = vsel %vm463, %v450, %v464
  %vm466 = vcmp.eq.s32.totalorder %v461, 2
  %v467 = vxor.u32 %v450, 2147483648
  %v468 = vsel %vm466, %v467, %v458
  %v469 = vsel %vm462, %v465, %v468
  %v470 = vsel %vm459, nan, %v469
  %v471 = vand.u32 2147483647, %v131
  %vm472 = vcmp.le.f32.partialorder %v471, 0.7853982
  %vm473 = vcmp.lt.s32.totalorder %v131, 0
  %v474 = vand.u32 %v131, 2139095040
  %v475 = vshrl.u32 %v474, 23
  %v476 = vsub.s32 %v475, 127
  %v477 = vand.u32 2147483647, %v131
  %v478 = vand.u32 %v477, 8388607
  %v479 = vor.u32 %v478, 8388608
  %v480 = vsub.s32 0, %v479
  %v481 = vadd.s32 %v476, 1
  %vm482 = vcmp.gt.s32.totalorder %v481, 0
  %v483 = vsel %vm482, %v481, 0
  %v484 = vshrl.u32 %v483, 5
  %v485 = vand.u32 %v483, 31
  %v486 = vsub.s32 32, %v485
  %v487 = vshrl.u32 683565275, %v486
  %v488 = vshll.u32 683565275, %v485
  %v489 = vshrl.u32 2475754826, %v486
  %v490 = vor.u32 %v488, %v489
  %v491 = vshll.u32 2475754826, %v485
  %v492 = vshrl.u32 2131351028, %v486
  %v493 = vor.u32 %v491, %v492
  %v494 = vshll.u32 2131351028, %v485
  %v495 = vshrl.u32 2102212464, %v486
  %v496 = vor.u32 %v494, %v495
  %v497 = vshll.u32 2102212464, %v485
  %v498 = vshrl.u32 920167782, %v486
  %v499 = vor.u32 %v497, %v498
  %v500 = vshll.u32 920167782, %v485
  %v501 = vshrl.u32 1326507024, %v486
  %v502 = vor.u32 %v500, %v501
  %vm503 = vcmp.lt.s32.totalorder %v484, 1
  %vm504 = vcmp.lt.s32.totalorder %v484, 2
  %vm505 = vcmp.lt.s32.totalorder %v484, 3
  %vm506 = vcmp.lt.s32.totalorder %v484, 4
  %v507 = vsel %vm503, %v487, %v490
  %v508 = vsel %vm506, %v496, 2102212464
  %v509 = vsel %vm505, %v493, %v508
  %v510 = vsel %vm504, %v507, %v509
  %v511 = vsel %vm503, %v490, %v493
  %v512 = vsel %vm506, %v499, 920167782
  %v513 = vsel %vm505, %v496, %v512
  %v514 = vsel %vm504, %v511, %v513
  %v515 = vsel %vm503, %v493, %v496
  %v516 = vsel %vm506, %v502, 1326507024
  %v517 = vsel %vm505, %v499, %v516
  %v518 = vsel %vm504, %v515, %v517
  %v519 = vshll.u32 %v479, 8
  %v520 = vand.u32 %v519, 65535
  %v521 = vshrl.u32 %v519, 16
  %v522 = vand.u32 %v518, 65535
  %v523 = vshrl.u32 %v518, 16
  %v524 = vmul.u32 %v520, %v522
  %v525 = vmul.u32 %v520, %v523
  %v526 = vmul.u32 %v521, %v522
  %v527 = vmul.u32 %v521, %v523
  %v528 = vshll.u32 %v525, 16
  %v529 = vshrl.u32 %v525, 16
  %v530 = vshll.u32 %v526, 16
  %v531 = vshrl.u32 %v526, 16
  %vm532 = vc.u32 %v524, %v528
  %v533 = vsel %vm532, 1, 0
  %v534 = vadd.s32 %v524, %v528
  %v535 = vadd.s32 %v527, %v533
  %vm536 = vc.u32 %v534, %v530
  %v537 = vsel %vm536, 1, 0
  %v538 = vadd.s32 %v534, %v530
  %v539 = vadd.s32 %v535, %v537
  %v540 = vadd.s32 %v539, %v529
  %v541 = vadd.s32 %v540, %v531
  %v542 = vand.u32 %v519, 65535
  %v543 = vshrl.u32 %v519, 16
  %v544 = vand.u32 %v514, 65535
  %v545 = vshrl.u32 %v514, 16
  %v546 = vmul.u32 %v542, %v544
  %v547 = vmul.u32 %v542, %v545
  %v548 = vmul.u32 %v543, %v544
  %v549 = vmul.u32 %v543, %v545
  %v550 = vshll.u32 %v547, 16
  %v551 = vshrl.u32 %v547, 16
  %v552 = vshll.u32 %v548, 16
  %v553 = vshrl.u32 %v548, 16
  %vm554 = vc.u32 %v546, %v550
  %v555 = vsel %vm554, 1, 0
  %v556 = vadd.s32 %v546, %v550
  %v557 = vadd.s32 %v549, %v555
  %vm558 = vc.u32 %v556, %v552
  %v559 = vsel %vm558, 1, 0
  %v560 = vadd.s32 %v556, %v552
  %v561 = vadd.s32 %v557, %v559
  %v562 = vadd.s32 %v561, %v551
  %v563 = vadd.s32 %v562, %v553
  %v564 = vmul.u32 %v519, %v510
  %v565 = vadd.s32 %v541, %v560
  %vm566 = vc.u32 %v541, %v560
  %v567 = vadd.s32 %v563, 1
  %v568 = vsel %vm566, %v567, %v563
  %v569 = vadd.s32 %v564, %v568
  %v570 = vadd.s32 %v569, 536870912
  %v571 = vshrl.u32 %v570, 30
  %v572 = vshll.u32 %v571, 30
  %v573 = vsub.s32 %v569, %v572
  %vm574 = vcmp.lt.s32.totalorder %v573, 0
  %v575 = vsub.s32 0, %v573
  %v576 = vsel %vm574, %v575, %v573
  %v577 = vclz %v576
  %v578 = vsub.s32 %v577, 2
  %vm579 = vcmp.gt.s32.totalorder 0, %v578
  %v580 = vsel %vm579, 0, %v578
  %v581 = vsub.s32 32, %v580
  %v582 = vshll.u32 %v573, %v580
  %v583 = vshrl.u32 %v565, %v581
  %v584 = vor.u32 %v582, %v583
  %v585 = vsub.s32 4294967266, %v580
  %v586 = vadd.s32 %v585, 127
  %v587 = vshll.u32 %v586, 23
  %v588 = vor.u32 4788187, %v587
  %v589 = vand.u32 2147483647, %v588
  %v591 = vcvt.s32.f32 %v584
  %v592 = vmul.f32 %v591, %v589
  %v593 = vxor.u32 %v592, 2147483648
  %v594 = vsel %vm473, %v593, %v592
  %v595 = vsub.s32 4, %v571
  %v596 = vsel %vm473, %v595, %v571
  %v597 = vsel %vm472, %v131, %v594
  %v598 = vsel %vm472, 0, %v596
  %v599 = vmul.f32 %v597, %v597
  %v600 = vmul.f32 %v599, -0.001358992
  %v601 = vadd.f32 %v600, 0.041655596
  %v602 = vmul.f32 %v599, %v601
  %v603 = vadd.f32 %v602, -0.4999988
  %v604 = vmul.f32 %v599, %v603
  %v605 = vadd.f32 1.0, %v604
  %v606 = vmul.f32 %v597, %v597
  %v607 = vmul.f32 %v606, -0.00019511016
  %v608 = vadd.f32 %v607, 0.008332121
  %v609 = vmul.f32 %v606, %v608
  %v610 = vadd.f32 %v609, -0.16666654
  %v611 = vmul.f32 %v606, %v610
  %v612 = vadd.f32 %v611, 1.0
  %v613 = vmul.f32 %v612, %v597
  %vm614 = vweird.f32 %v131
  %v615 = vadd.s32 %v598, 3
  %v616 = vand.u32 %v615, 3
  %vm617 = vcmp.lt.s32.totalorder %v616, 2
  %vm618 = vcmp.eq.s32.totalorder %v616, 0
  %v619 = vxor.u32 %v613, 2147483648
  %v620 = vsel %vm618, %v605, %v619
  %vm621 = vcmp.eq.s32.totalorder %v616, 2
  %v622 = vxor.u32 %v605, 2147483648
  %v623 = vsel %vm621, %v622, %v613
  %v624 = vsel %vm617, %v620, %v623
  %v625 = vsel %vm614, nan, %v624
  %v626 = vand.u32 2147483647, %v132
  %vm627 = vcmp.le.f32.partialorder %v626, 0.7853982
  %vm628 = vcmp.lt.s32.totalorder %v132, 0
  %v629 = vand.u32 %v132, 2139095040
  %v630 = vshrl.u32 %v629, 23
  %v631 = vsub.s32 %v630, 127
  %v632 = vand.u32 2147483647, %v132
  %v633 = vand.u32 %v632, 8388607
  %v634 = vor.u32 %v633, 8388608
  %v635 = vsub.s32 0, %v634
  %v636 = vadd.s32 %v631, 1
  %vm637 = vcmp.gt.s32.totalorder %v636, 0
  %v638 = vsel %vm637, %v636, 0
  %v639 = vshrl.u32 %v638, 5
  %v640 = vand.u32 %v638, 31
  %v641 = vsub.s32 32, %v640
  %v642 = vshrl.u32 683565275, %v641
  %v643 = vshll.u32 683565275, %v640
  %v644 = vshrl.u32 2475754826, %v641
  %v645 = vor.u32 %v643, %v644
  %v646 = vshll.u32 2475754826, %v640
  %v647 = vshrl.u32 2131351028, %v641
  %v648 = vor.u32 %v646, %v647
  %v649 = vshll.u32 2131351028, %v640
  %v650 = vshrl.u32 2102212464, %v641
  %v651 = vor.u32 %v649, %v650
  %v652 = vshll.u32 2102212464, %v640
  %v653 = vshrl.u32 920167782, %v641
  %v654 = vor.u32 %v652, %v653
  %v655 = vshll.u32 920167782, %v640
  %v656 = vshrl.u32 1326507024, %v641
  %v657 = vor.u32 %v655, %v656
  %vm658 = vcmp.lt.s32.totalorder %v639, 1
  %vm659 = vcmp.lt.s32.totalorder %v639, 2
  %vm660 = vcmp.lt.s32.totalorder %v639, 3
  %vm661 = vcmp.lt.s32.totalorder %v639, 4
  %v662 = vsel %vm658, %v642, %v645
  %v663 = vsel %vm661, %v651, 2102212464
  %v664 = vsel %vm660, %v648, %v663
  %v665 = vsel %vm659, %v662, %v664
  %v666 = vsel %vm658, %v645, %v648
  %v667 = vsel %vm661, %v654, 920167782
  %v668 = vsel %vm660, %v651, %v667
  %v669 = vsel %vm659, %v666, %v668
  %v670 = vsel %vm658, %v648, %v651
  %v671 = vsel %vm661, %v657, 1326507024
  %v672 = vsel %vm660, %v654, %v671
  %v673 = vsel %vm659, %v670, %v672
  %v674 = vshll.u32 %v634, 8
  %v675 = vand.u32 %v674, 65535
  %v676 = vshrl.u32 %v674, 16
  %v677 = vand.u32 %v673, 65535
  %v678 = vshrl.u32 %v673, 16
  %v679 = vmul.u32 %v675, %v677
  %v680 = vmul.u32 %v675, %v678
  %v681 = vmul.u32 %v676, %v677
  %v682 = vmul.u32 %v676, %v678
  %v683 = vshll.u32 %v680, 16
  %v684 = vshrl.u32 %v680, 16
  %v685 = vshll.u32 %v681, 16
  %v686 = vshrl.u32 %v681, 16
  %vm687 = vc.u32 %v679, %v683
  %v688 = vsel %vm687, 1, 0
  %v689 = vadd.s32 %v679, %v683
  %v690 = vadd.s32 %v682, %v688
  %vm691 = vc.u32 %v689, %v685
  %v692 = vsel %vm691, 1, 0
  %v693 = vadd.s32 %v689, %v685
  %v694 = vadd.s32 %v690, %v692
  %v695 = vadd.s32 %v694, %v684
  %v696 = vadd.s32 %v695, %v686
  %v697 = vand.u32 %v674, 65535
  %v698 = vshrl.u32 %v674, 16
  %v699 = vand.u32 %v669, 65535
  %v700 = vshrl.u32 %v669, 16
  %v701 = vmul.u32 %v697, %v699
  %v702 = vmul.u32 %v697, %v700
  %v703 = vmul.u32 %v698, %v699
  %v704 = vmul.u32 %v698, %v700
  %v705 = vshll.u32 %v702, 16
  %v706 = vshrl.u32 %v702, 16
  %v707 = vshll.u32 %v703, 16
  %v708 = vshrl.u32 %v703, 16
  %vm709 = vc.u32 %v701, %v705
  %v710 = vsel %vm709, 1, 0
  %v711 = vadd.s32 %v701, %v705
  %v712 = vadd.s32 %v704, %v710
  %vm713 = vc.u32 %v711, %v707
  %v714 = vsel %vm713, 1, 0
  %v715 = vadd.s32 %v711, %v707
  %v716 = vadd.s32 %v712, %v714
  %v717 = vadd.s32 %v716, %v706
  %v718 = vadd.s32 %v717, %v708
  %v719 = vmul.u32 %v674, %v665
  %v720 = vadd.s32 %v696, %v715
  %vm721 = vc.u32 %v696, %v715
  %v722 = vadd.s32 %v718, 1
  %v723 = vsel %vm721, %v722, %v718
  %v724 = vadd.s32 %v719, %v723
  %v725 = vadd.s32 %v724, 536870912
  %v726 = vshrl.u32 %v725, 30
  %v727 = vshll.u32 %v726, 30
  %v728 = vsub.s32 %v724, %v727
  %vm729 = vcmp.lt.s32.totalorder %v728, 0
  %v730 = vsub.s32 0, %v728
  %v731 = vsel %vm729, %v730, %v728
  %v732 = vclz %v731
  %v733 = vsub.s32 %v732, 2
  %vm734 = vcmp.gt.s32.totalorder 0, %v733
  %v735 = vsel %vm734, 0, %v733
  %v736 = vsub.s32 32, %v735
  %v737 = vshll.u32 %v728, %v735
  %v738 = vshrl.u32 %v720, %v736
  %v739 = vor.u32 %v737, %v738
  %v740 = vsub.s32 4294967266, %v735
  %v741 = vadd.s32 %v740, 127
  %v742 = vshll.u32 %v741, 23
  %v743 = vor.u32 4788187, %v742
  %v744 = vand.u32 2147483647, %v743
  %v746 = vcvt.s32.f32 %v739
  %v747 = vmul.f32 %v746, %v744
  %v748 = vxor.u32 %v747, 2147483648
  %v749 = vsel %vm628, %v748, %v747
  %v750 = vsub.s32 4, %v726
  %v751 = vsel %vm628, %v750, %v726
  %v752 = vsel %vm627, %v132, %v749
  %v753 = vsel %vm627, 0, %v751
  %v754 = vmul.f32 %v752, %v752
  %v755 = vmul.f32 %v754, -0.001358992
  %v756 = vadd.f32 %v755, 0.041655596
  %v757 = vmul.f32 %v754, %v756
  %v758 = vadd.f32 %v757, -0.4999988
  %v759 = vmul.f32 %v754, %v758
  %v760 = vadd.f32 1.0, %v759
  %v761 = vmul.f32 %v752, %v752
  %v762 = vmul.f32 %v761, -0.00019511016
  %v763 = vadd.f32 %v762, 0.008332121
  %v764 = vmul.f32 %v761, %v763
  %v765 = vadd.f32 %v764, -0.16666654
  %v766 = vmul.f32 %v761, %v765
  %v767 = vadd.f32 %v766, 1.0
  %v768 = vmul.f32 %v767, %v752
  %vm769 = vweird.f32 %v132
  %v770 = vadd.s32 %v753, 3
  %v771 = vand.u32 %v770, 3
  %vm772 = vcmp.lt.s32.totalorder %v771, 2
  %vm773 = vcmp.eq.s32.totalorder %v771, 0
  %v774 = vxor.u32 %v768, 2147483648
  %v775 = vsel %vm773, %v760, %v774
  %vm776 = vcmp.eq.s32.totalorder %v771, 2
  %v777 = vxor.u32 %v760, 2147483648
  %v778 = vsel %vm776, %v777, %v768
  %v779 = vsel %vm772, %v775, %v778
  %v780 = vsel %vm769, nan, %v779
  %v781 = vand.u32 2147483647, %v133
  %vm782 = vcmp.le.f32.partialorder %v781, 0.7853982
  %vm783 = vcmp.lt.s32.totalorder %v133, 0
  %v784 = vand.u32 %v133, 2139095040
  %v785 = vshrl.u32 %v784, 23
  %v786 = vsub.s32 %v785, 127
  %v787 = vand.u32 2147483647, %v133
  %v788 = vand.u32 %v787, 8388607
  %v789 = vor.u32 %v788, 8388608
  %v790 = vsub.s32 0, %v789
  %v791 = vadd.s32 %v786, 1
  %vm792 = vcmp.gt.s32.totalorder %v791, 0
  %v793 = vsel %vm792, %v791, 0
  %v794 = vshrl.u32 %v793, 5
  %v795 = vand.u32 %v793, 31
  %v796 = vsub.s32 32, %v795
  %v797 = vshrl.u32 683565275, %v796
  %v798 = vshll.u32 683565275, %v795
  %v799 = vshrl.u32 2475754826, %v796
  %v800 = vor.u32 %v798, %v799
  %v801 = vshll.u32 2475754826, %v795
  %v802 = vshrl.u32 2131351028, %v796
  %v803 = vor.u32 %v801, %v802
  %v804 = vshll.u32 2131351028, %v795
  %v805 = vshrl.u32 2102212464, %v796
  %v806 = vor.u32 %v804, %v805
  %v807 = vshll.u32 2102212464, %v795
  %v808 = vshrl.u32 920167782, %v796
  %v809 = vor.u32 %v807, %v808
  %v810 = vshll.u32 920167782, %v795
  %v811 = vshrl.u32 1326507024, %v796
  %v812 = vor.u32 %v810, %v811
  %vm813 = vcmp.lt.s32.totalorder %v794, 1
  %vm814 = vcmp.lt.s32.totalorder %v794, 2
  %vm815 = vcmp.lt.s32.totalorder %v794, 3
  %vm816 = vcmp.lt.s32.totalorder %v794, 4
  %v817 = vsel %vm813, %v797, %v800
  %v818 = vsel %vm816, %v806, 2102212464
  %v819 = vsel %vm815, %v803, %v818
  %v820 = vsel %vm814, %v817, %v819
  %v821 = vsel %vm813, %v800, %v803
  %v822 = vsel %vm816, %v809, 920167782
  %v823 = vsel %vm815, %v806, %v822
  %v824 = vsel %vm814, %v821, %v823
  %v825 = vsel %vm813, %v803, %v806
  %v826 = vsel %vm816, %v812, 1326507024
  %v827 = vsel %vm815, %v809, %v826
  %v828 = vsel %vm814, %v825, %v827
  %v829 = vshll.u32 %v789, 8
  %v830 = vand.u32 %v829, 65535
  %v831 = vshrl.u32 %v829, 16
  %v832 = vand.u32 %v828, 65535
  %v833 = vshrl.u32 %v828, 16
  %v834 = vmul.u32 %v830, %v832
  %v835 = vmul.u32 %v830, %v833
  %v836 = vmul.u32 %v831, %v832
  %v837 = vmul.u32 %v831, %v833
  %v838 = vshll.u32 %v835, 16
  %v839 = vshrl.u32 %v835, 16
  %v840 = vshll.u32 %v836, 16
  %v841 = vshrl.u32 %v836, 16
  %vm842 = vc.u32 %v834, %v838
  %v843 = vsel %vm842, 1, 0
  %v844 = vadd.s32 %v834, %v838
  %v845 = vadd.s32 %v837, %v843
  %vm846 = vc.u32 %v844, %v840
  %v847 = vsel %vm846, 1, 0
  %v848 = vadd.s32 %v844, %v840
  %v849 = vadd.s32 %v845, %v847
  %v850 = vadd.s32 %v849, %v839
  %v851 = vadd.s32 %v850, %v841
  %v852 = vand.u32 %v829, 65535
  %v853 = vshrl.u32 %v829, 16
  %v854 = vand.u32 %v824, 65535
  %v855 = vshrl.u32 %v824, 16
  %v856 = vmul.u32 %v852, %v854
  %v857 = vmul.u32 %v852, %v855
  %v858 = vmul.u32 %v853, %v854
  %v859 = vmul.u32 %v853, %v855
  %v860 = vshll.u32 %v857, 16
  %v861 = vshrl.u32 %v857, 16
  %v862 = vshll.u32 %v858, 16
  %v863 = vshrl.u32 %v858, 16
  %vm864 = vc.u32 %v856, %v860
  %v865 = vsel %vm864, 1, 0
  %v866 = vadd.s32 %v856, %v860
  %v867 = vadd.s32 %v859, %v865
  %vm868 = vc.u32 %v866, %v862
  %v869 = vsel %vm868, 1, 0
  %v870 = vadd.s32 %v866, %v862
  %v871 = vadd.s32 %v867, %v869
  %v872 = vadd.s32 %v871, %v861
  %v873 = vadd.s32 %v872, %v863
  %v874 = vmul.u32 %v829, %v820
  %v875 = vadd.s32 %v851, %v870
  %vm876 = vc.u32 %v851, %v870
  %v877 = vadd.s32 %v873, 1
  %v878 = vsel %vm876, %v877, %v873
  %v879 = vadd.s32 %v874, %v878
  %v880 = vadd.s32 %v879, 536870912
  %v881 = vshrl.u32 %v880, 30
  %v882 = vshll.u32 %v881, 30
  %v883 = vsub.s32 %v879, %v882
  %vm884 = vcmp.lt.s32.totalorder %v883, 0
  %v885 = vsub.s32 0, %v883
  %v886 = vsel %vm884, %v885, %v883
  %v887 = vclz %v886
  %v888 = vsub.s32 %v887, 2
  %vm889 = vcmp.gt.s32.totalorder 0, %v888
  %v890 = vsel %vm889, 0, %v888
  %v891 = vsub.s32 32, %v890
  %v892 = vshll.u32 %v883, %v890
  %v893 = vshrl.u32 %v875, %v891
  %v894 = vor.u32 %v892, %v893
  %v895 = vsub.s32 4294967266, %v890
  %v896 = vadd.s32 %v895, 127
  %v897 = vshll.u32 %v896, 23
  %v898 = vor.u32 4788187, %v897
  %v899 = vand.u32 2147483647, %v898
  %v901 = vcvt.s32.f32 %v894
  %v902 = vmul.f32 %v901, %v899
  %v903 = vxor.u32 %v902, 2147483648
  %v904 = vsel %vm783, %v903, %v902
  %v905 = vsub.s32 4, %v881
  %v906 = vsel %vm783, %v905, %v881
  %v907 = vsel %vm782, %v133, %v904
  %v908 = vsel %vm782, 0, %v906
  %v909 = vmul.f32 %v907, %v907
  %v910 = vmul.f32 %v909, -0.001358992
  %v911 = vadd.f32 %v910, 0.041655596
  %v912 = vmul.f32 %v909, %v911
  %v913 = vadd.f32 %v912, -0.4999988
  %v914 = vmul.f32 %v909, %v913
  %v915 = vadd.f32 1.0, %v914
  %v916 = vmul.f32 %v907, %v907
  %v917 = vmul.f32 %v916, -0.00019511016
  %v918 = vadd.f32 %v917, 0.008332121
  %v919 = vmul.f32 %v916, %v918
  %v920 = vadd.f32 %v919, -0.16666654
  %v921 = vmul.f32 %v916, %v920
  %v922 = vadd.f32 %v921, 1.0
  %v923 = vmul.f32 %v922, %v907
  %vm924 = vweird.f32 %v133
  %v925 = vadd.s32 %v908, 3
  %v926 = vand.u32 %v925, 3
  %vm927 = vcmp.lt.s32.totalorder %v926, 2
  %vm928 = vcmp.eq.s32.totalorder %v926, 0
  %v929 = vxor.u32 %v923, 2147483648
  %v930 = vsel %vm928, %v915, %v929
  %vm931 = vcmp.eq.s32.totalorder %v926, 2
  %v932 = vxor.u32 %v915, 2147483648
  %v933 = vsel %vm931, %v932, %v923
  %v934 = vsel %vm927, %v930, %v933
  %v935 = vsel %vm924, nan, %v934
  %v936 = vand.u32 2147483647, %v134
  %vm937 = vcmp.le.f32.partialorder %v936, 0.7853982
  %vm938 = vcmp.lt.s32.totalorder %v134, 0
  %v939 = vand.u32 %v134, 2139095040
  %v940 = vshrl.u32 %v939, 23
  %v941 = vsub.s32 %v940, 127
  %v942 = vand.u32 2147483647, %v134
  %v943 = vand.u32 %v942, 8388607
  %v944 = vor.u32 %v943, 8388608
  %v945 = vsub.s32 0, %v944
  %v946 = vadd.s32 %v941, 1
  %vm947 = vcmp.gt.s32.totalorder %v946, 0
  %v948 = vsel %vm947, %v946, 0
  %v949 = vshrl.u32 %v948, 5
  %v950 = vand.u32 %v948, 31
  %v951 = vsub.s32 32, %v950
  %v952 = vshrl.u32 683565275, %v951
  %v953 = vshll.u32 683565275, %v950
  %v954 = vshrl.u32 2475754826, %v951
  %v955 = vor.u32 %v953, %v954
  %v956 = vshll.u32 2475754826, %v950
  %v957 = vshrl.u32 2131351028, %v951
  %v958 = vor.u32 %v956, %v957
  %v959 = vshll.u32 2131351028, %v950
  %v960 = vshrl.u32 2102212464, %v951
  %v961 = vor.u32 %v959, %v960
  %v962 = vshll.u32 2102212464, %v950
  %v963 = vshrl.u32 920167782, %v951
  %v964 = vor.u32 %v962, %v963
  %v965 = vshll.u32 920167782, %v950
  %v966 = vshrl.u32 1326507024, %v951
  %v967 = vor.u32 %v965, %v966
  %vm968 = vcmp.lt.s32.totalorder %v949, 1
  %vm969 = vcmp.lt.s32.totalorder %v949, 2
  %vm970 = vcmp.lt.s32.totalorder %v949, 3
  %vm971 = vcmp.lt.s32.totalorder %v949, 4
  %v972 = vsel %vm968, %v952, %v955
  %v973 = vsel %vm971, %v961, 2102212464
  %v974 = vsel %vm970, %v958, %v973
  %v975 = vsel %vm969, %v972, %v974
  %v976 = vsel %vm968, %v955, %v958
  %v977 = vsel %vm971, %v964, 920167782
  %v978 = vsel %vm970, %v961, %v977
  %v979 = vsel %vm969, %v976, %v978
  %v980 = vsel %vm968, %v958, %v961
  %v981 = vsel %vm971, %v967, 1326507024
  %v982 = vsel %vm970, %v964, %v981
  %v983 = vsel %vm969, %v980, %v982
  %v984 = vshll.u32 %v944, 8
  %v985 = vand.u32 %v984, 65535
  %v986 = vshrl.u32 %v984, 16
  %v987 = vand.u32 %v983, 65535
  %v988 = vshrl.u32 %v983, 16
  %v989 = vmul.u32 %v985, %v987
  %v990 = vmul.u32 %v985, %v988
  %v991 = vmul.u32 %v986, %v987
  %v992 = vmul.u32 %v986, %v988
  %v993 = vshll.u32 %v990, 16
  %v994 = vshrl.u32 %v990, 16
  %v995 = vshll.u32 %v991, 16
  %v996 = vshrl.u32 %v991, 16
  %vm997 = vc.u32 %v989, %v993
  %v998 = vsel %vm997, 1, 0
  %v999 = vadd.s32 %v989, %v993
  %v1000 = vadd.s32 %v992, %v998
  %vm1001 = vc.u32 %v999, %v995
  %v1002 = vsel %vm1001, 1, 0
  %v1003 = vadd.s32 %v999, %v995
  %v1004 = vadd.s32 %v1000, %v1002
  %v1005 = vadd.s32 %v1004, %v994
  %v1006 = vadd.s32 %v1005, %v996
  %v1007 = vand.u32 %v984, 65535
  %v1008 = vshrl.u32 %v984, 16
  %v1009 = vand.u32 %v979, 65535
  %v1010 = vshrl.u32 %v979, 16
  %v1011 = vmul.u32 %v1007, %v1009
  %v1012 = vmul.u32 %v1007, %v1010
  %v1013 = vmul.u32 %v1008, %v1009
  %v1014 = vmul.u32 %v1008, %v1010
  %v1015 = vshll.u32 %v1012, 16
  %v1016 = vshrl.u32 %v1012, 16
  %v1017 = vshll.u32 %v1013, 16
  %v1018 = vshrl.u32 %v1013, 16
  %vm1019 = vc.u32 %v1011, %v1015
  %v1020 = vsel %vm1019, 1, 0
  %v1021 = vadd.s32 %v1011, %v1015
  %v1022 = vadd.s32 %v1014, %v1020
  %vm1023 = vc.u32 %v1021, %v1017
  %v1024 = vsel %vm1023, 1, 0
  %v1025 = vadd.s32 %v1021, %v1017
  %v1026 = vadd.s32 %v1022, %v1024
  %v1027 = vadd.s32 %v1026, %v1016
  %v1028 = vadd.s32 %v1027, %v1018
  %v1029 = vmul.u32 %v984, %v975
  %v1030 = vadd.s32 %v1006, %v1025
  %vm1031 = vc.u32 %v1006, %v1025
  %v1032 = vadd.s32 %v1028, 1
  %v1033 = vsel %vm1031, %v1032, %v1028
  %v1034 = vadd.s32 %v1029, %v1033
  %v1035 = vadd.s32 %v1034, 536870912
  %v1036 = vshrl.u32 %v1035, 30
  %v1037 = vshll.u32 %v1036, 30
  %v1038 = vsub.s32 %v1034, %v1037
  %vm1039 = vcmp.lt.s32.totalorder %v1038, 0
  %v1040 = vsub.s32 0, %v1038
  %v1041 = vsel %vm1039, %v1040, %v1038
  %v1042 = vclz %v1041
  %v1043 = vsub.s32 %v1042, 2
  %vm1044 = vcmp.gt.s32.totalorder 0, %v1043
  %v1045 = vsel %vm1044, 0, %v1043
  %v1046 = vsub.s32 32, %v1045
  %v1047 = vshll.u32 %v1038, %v1045
  %v1048 = vshrl.u32 %v1030, %v1046
  %v1049 = vor.u32 %v1047, %v1048
  %v1050 = vsub.s32 4294967266, %v1045
  %v1051 = vadd.s32 %v1050, 127
  %v1052 = vshll.u32 %v1051, 23
  %v1053 = vor.u32 4788187, %v1052
  %v1054 = vand.u32 2147483647, %v1053
  %v1056 = vcvt.s32.f32 %v1049
  %v1057 = vmul.f32 %v1056, %v1054
  %v1058 = vxor.u32 %v1057, 2147483648
  %v1059 = vsel %vm938, %v1058, %v1057
  %v1060 = vsub.s32 4, %v1036
  %v1061 = vsel %vm938, %v1060, %v1036
  %v1062 = vsel %vm937, %v134, %v1059
  %v1063 = vsel %vm937, 0, %v1061
  %v1064 = vmul.f32 %v1062, %v1062
  %v1065 = vmul.f32 %v1064, -0.001358992
  %v1066 = vadd.f32 %v1065, 0.041655596
  %v1067 = vmul.f32 %v1064, %v1066
  %v1068 = vadd.f32 %v1067, -0.4999988
  %v1069 = vmul.f32 %v1064, %v1068
  %v1070 = vadd.f32 1.0, %v1069
  %v1071 = vmul.f32 %v1062, %v1062
  %v1072 = vmul.f32 %v1071, -0.00019511016
  %v1073 = vadd.f32 %v1072, 0.008332121
  %v1074 = vmul.f32 %v1071, %v1073
  %v1075 = vadd.f32 %v1074, -0.16666654
  %v1076 = vmul.f32 %v1071, %v1075
  %v1077 = vadd.f32 %v1076, 1.0
  %v1078 = vmul.f32 %v1077, %v1062
  %vm1079 = vweird.f32 %v134
  %v1080 = vadd.s32 %v1063, 3
  %v1081 = vand.u32 %v1080, 3
  %vm1082 = vcmp.lt.s32.totalorder %v1081, 2
  %vm1083 = vcmp.eq.s32.totalorder %v1081, 0
  %v1084 = vxor.u32 %v1078, 2147483648
  %v1085 = vsel %vm1083, %v1070, %v1084
  %vm1086 = vcmp.eq.s32.totalorder %v1081, 2
  %v1087 = vxor.u32 %v1070, 2147483648
  %v1088 = vsel %vm1086, %v1087, %v1078
  %v1089 = vsel %vm1082, %v1085, %v1088
  %v1090 = vsel %vm1079, nan, %v1089
  %v1091 = vand.u32 2147483647, %v135
  %vm1092 = vcmp.le.f32.partialorder %v1091, 0.7853982
  %vm1093 = vcmp.lt.s32.totalorder %v135, 0
  %v1094 = vand.u32 %v135, 2139095040
  %v1095 = vshrl.u32 %v1094, 23
  %v1096 = vsub.s32 %v1095, 127
  %v1097 = vand.u32 2147483647, %v135
  %v1098 = vand.u32 %v1097, 8388607
  %v1099 = vor.u32 %v1098, 8388608
  %v1100 = vsub.s32 0, %v1099
  %v1101 = vadd.s32 %v1096, 1
  %vm1102 = vcmp.gt.s32.totalorder %v1101, 0
  %v1103 = vsel %vm1102, %v1101, 0
  %v1104 = vshrl.u32 %v1103, 5
  %v1105 = vand.u32 %v1103, 31
  %v1106 = vsub.s32 32, %v1105
  %v1107 = vshrl.u32 683565275, %v1106
  %v1108 = vshll.u32 683565275, %v1105
  %v1109 = vshrl.u32 2475754826, %v1106
  %v1110 = vor.u32 %v1108, %v1109
  %v1111 = vshll.u32 2475754826, %v1105
  %v1112 = vshrl.u32 2131351028, %v1106
  %v1113 = vor.u32 %v1111, %v1112
  %v1114 = vshll.u32 2131351028, %v1105
  %v1115 = vshrl.u32 2102212464, %v1106
  %v1116 = vor.u32 %v1114, %v1115
  %v1117 = vshll.u32 2102212464, %v1105
  %v1118 = vshrl.u32 920167782, %v1106
  %v1119 = vor.u32 %v1117, %v1118
  %v1120 = vshll.u32 920167782, %v1105
  %v1121 = vshrl.u32 1326507024, %v1106
  %v1122 = vor.u32 %v1120, %v1121
  %vm1123 = vcmp.lt.s32.totalorder %v1104, 1
  %vm1124 = vcmp.lt.s32.totalorder %v1104, 2
  %vm1125 = vcmp.lt.s32.totalorder %v1104, 3
  %vm1126 = vcmp.lt.s32.totalorder %v1104, 4
  %v1127 = vsel %vm1123, %v1107, %v1110
  %v1128 = vsel %vm1126, %v1116, 2102212464
  %v1129 = vsel %vm1125, %v1113, %v1128
  %v1130 = vsel %vm1124, %v1127, %v1129
  %v1131 = vsel %vm1123, %v1110, %v1113
  %v1132 = vsel %vm1126, %v1119, 920167782
  %v1133 = vsel %vm1125, %v1116, %v1132
  %v1134 = vsel %vm1124, %v1131, %v1133
  %v1135 = vsel %vm1123, %v1113, %v1116
  %v1136 = vsel %vm1126, %v1122, 1326507024
  %v1137 = vsel %vm1125, %v1119, %v1136
  %v1138 = vsel %vm1124, %v1135, %v1137
  %v1139 = vshll.u32 %v1099, 8
  %v1140 = vand.u32 %v1139, 65535
  %v1141 = vshrl.u32 %v1139, 16
  %v1142 = vand.u32 %v1138, 65535
  %v1143 = vshrl.u32 %v1138, 16
  %v1144 = vmul.u32 %v1140, %v1142
  %v1145 = vmul.u32 %v1140, %v1143
  %v1146 = vmul.u32 %v1141, %v1142
  %v1147 = vmul.u32 %v1141, %v1143
  %v1148 = vshll.u32 %v1145, 16
  %v1149 = vshrl.u32 %v1145, 16
  %v1150 = vshll.u32 %v1146, 16
  %v1151 = vshrl.u32 %v1146, 16
  %vm1152 = vc.u32 %v1144, %v1148
  %v1153 = vsel %vm1152, 1, 0
  %v1154 = vadd.s32 %v1144, %v1148
  %v1155 = vadd.s32 %v1147, %v1153
  %vm1156 = vc.u32 %v1154, %v1150
  %v1157 = vsel %vm1156, 1, 0
  %v1158 = vadd.s32 %v1154, %v1150
  %v1159 = vadd.s32 %v1155, %v1157
  %v1160 = vadd.s32 %v1159, %v1149
  %v1161 = vadd.s32 %v1160, %v1151
  %v1162 = vand.u32 %v1139, 65535
  %v1163 = vshrl.u32 %v1139, 16
  %v1164 = vand.u32 %v1134, 65535
  %v1165 = vshrl.u32 %v1134, 16
  %v1166 = vmul.u32 %v1162, %v1164
  %v1167 = vmul.u32 %v1162, %v1165
  %v1168 = vmul.u32 %v1163, %v1164
  %v1169 = vmul.u32 %v1163, %v1165
  %v1170 = vshll.u32 %v1167, 16
  %v1171 = vshrl.u32 %v1167, 16
  %v1172 = vshll.u32 %v1168, 16
  %v1173 = vshrl.u32 %v1168, 16
  %vm1174 = vc.u32 %v1166, %v1170
  %v1175 = vsel %vm1174, 1, 0
  %v1176 = vadd.s32 %v1166, %v1170
  %v1177 = vadd.s32 %v1169, %v1175
  %vm1178 = vc.u32 %v1176, %v1172
  %v1179 = vsel %vm1178, 1, 0
  %v1180 = vadd.s32 %v1176, %v1172
  %v1181 = vadd.s32 %v1177, %v1179
  %v1182 = vadd.s32 %v1181, %v1171
  %v1183 = vadd.s32 %v1182, %v1173
  %v1184 = vmul.u32 %v1139, %v1130
  %v1185 = vadd.s32 %v1161, %v1180
  %vm1186 = vc.u32 %v1161, %v1180
  %v1187 = vadd.s32 %v1183, 1
  %v1188 = vsel %vm1186, %v1187, %v1183
  %v1189 = vadd.s32 %v1184, %v1188
  %v1190 = vadd.s32 %v1189, 536870912
  %v1191 = vshrl.u32 %v1190, 30
  %v1192 = vshll.u32 %v1191, 30
  %v1193 = vsub.s32 %v1189, %v1192
  %vm1194 = vcmp.lt.s32.totalorder %v1193, 0
  %v1195 = vsub.s32 0, %v1193
  %v1196 = vsel %vm1194, %v1195, %v1193
  %v1197 = vclz %v1196
  %v1198 = vsub.s32 %v1197, 2
  %vm1199 = vcmp.gt.s32.totalorder 0, %v1198
  %v1200 = vsel %vm1199, 0, %v1198
  %v1201 = vsub.s32 32, %v1200
  %v1202 = vshll.u32 %v1193, %v1200
  %v1203 = vshrl.u32 %v1185, %v1201
  %v1204 = vor.u32 %v1202, %v1203
  %v1205 = vsub.s32 4294967266, %v1200
  %v1206 = vadd.s32 %v1205, 127
  %v1207 = vshll.u32 %v1206, 23
  %v1208 = vor.u32 4788187, %v1207
  %v1209 = vand.u32 2147483647, %v1208
  %v1211 = vcvt.s32.f32 %v1204
  %v1212 = vmul.f32 %v1211, %v1209
  %v1213 = vxor.u32 %v1212, 2147483648
  %v1214 = vsel %vm1093, %v1213, %v1212
  %v1215 = vsub.s32 4, %v1191
  %v1216 = vsel %vm1093, %v1215, %v1191
  %v1217 = vsel %vm1092, %v135, %v1214
  %v1218 = vsel %vm1092, 0, %v1216
  %v1219 = vmul.f32 %v1217, %v1217
  %v1220 = vmul.f32 %v1219, -0.001358992
  %v1221 = vadd.f32 %v1220, 0.041655596
  %v1222 = vmul.f32 %v1219, %v1221
  %v1223 = vadd.f32 %v1222, -0.4999988
  %v1224 = vmul.f32 %v1219, %v1223
  %v1225 = vadd.f32 1.0, %v1224
  %v1226 = vmul.f32 %v1217, %v1217
  %v1227 = vmul.f32 %v1226, -0.00019511016
  %v1228 = vadd.f32 %v1227, 0.008332121
  %v1229 = vmul.f32 %v1226, %v1228
  %v1230 = vadd.f32 %v1229, -0.16666654
  %v1231 = vmul.f32 %v1226, %v1230
  %v1232 = vadd.f32 %v1231, 1.0
  %v1233 = vmul.f32 %v1232, %v1217
  %vm1234 = vweird.f32 %v135
  %v1235 = vadd.s32 %v1218, 3
  %v1236 = vand.u32 %v1235, 3
  %vm1237 = vcmp.lt.s32.totalorder %v1236, 2
  %vm1238 = vcmp.eq.s32.totalorder %v1236, 0
  %v1239 = vxor.u32 %v1233, 2147483648
  %v1240 = vsel %vm1238, %v1225, %v1239
  %vm1241 = vcmp.eq.s32.totalorder %v1236, 2
  %v1242 = vxor.u32 %v1225, 2147483648
  %v1243 = vsel %vm1241, %v1242, %v1233
  %v1244 = vsel %vm1237, %v1240, %v1243
  %v1245 = vsel %vm1234, nan, %v1244
  %v1246 = vand.u32 2147483647, %v136
  %vm1247 = vcmp.le.f32.partialorder %v1246, 0.7853982
  %vm1248 = vcmp.lt.s32.totalorder %v136, 0
  %v1249 = vand.u32 %v136, 2139095040
  %v1250 = vshrl.u32 %v1249, 23
  %v1251 = vsub.s32 %v1250, 127
  %v1252 = vand.u32 2147483647, %v136
  %v1253 = vand.u32 %v1252, 8388607
  %v1254 = vor.u32 %v1253, 8388608
  %v1255 = vsub.s32 0, %v1254
  %v1256 = vadd.s32 %v1251, 1
  %vm1257 = vcmp.gt.s32.totalorder %v1256, 0
  %v1258 = vsel %vm1257, %v1256, 0
  %v1259 = vshrl.u32 %v1258, 5
  %v1260 = vand.u32 %v1258, 31
  %v1261 = vsub.s32 32, %v1260
  %v1262 = vshrl.u32 683565275, %v1261
  %v1263 = vshll.u32 683565275, %v1260
  %v1264 = vshrl.u32 2475754826, %v1261
  %v1265 = vor.u32 %v1263, %v1264
  %v1266 = vshll.u32 2475754826, %v1260
  %v1267 = vshrl.u32 2131351028, %v1261
  %v1268 = vor.u32 %v1266, %v1267
  %v1269 = vshll.u32 2131351028, %v1260
  %v1270 = vshrl.u32 2102212464, %v1261
  %v1271 = vor.u32 %v1269, %v1270
  %v1272 = vshll.u32 2102212464, %v1260
  %v1273 = vshrl.u32 920167782, %v1261
  %v1274 = vor.u32 %v1272, %v1273
  %v1275 = vshll.u32 920167782, %v1260
  %v1276 = vshrl.u32 1326507024, %v1261
  %v1277 = vor.u32 %v1275, %v1276
  %vm1278 = vcmp.lt.s32.totalorder %v1259, 1
  %vm1279 = vcmp.lt.s32.totalorder %v1259, 2
  %vm1280 = vcmp.lt.s32.totalorder %v1259, 3
  %vm1281 = vcmp.lt.s32.totalorder %v1259, 4
  %v1282 = vsel %vm1278, %v1262, %v1265
  %v1283 = vsel %vm1281, %v1271, 2102212464
  %v1284 = vsel %vm1280, %v1268, %v1283
  %v1285 = vsel %vm1279, %v1282, %v1284
  %v1286 = vsel %vm1278, %v1265, %v1268
  %v1287 = vsel %vm1281, %v1274, 920167782
  %v1288 = vsel %vm1280, %v1271, %v1287
  %v1289 = vsel %vm1279, %v1286, %v1288
  %v1290 = vsel %vm1278, %v1268, %v1271
  %v1291 = vsel %vm1281, %v1277, 1326507024
  %v1292 = vsel %vm1280, %v1274, %v1291
  %v1293 = vsel %vm1279, %v1290, %v1292
  %v1294 = vshll.u32 %v1254, 8
  %v1295 = vand.u32 %v1294, 65535
  %v1296 = vshrl.u32 %v1294, 16
  %v1297 = vand.u32 %v1293, 65535
  %v1298 = vshrl.u32 %v1293, 16
  %v1299 = vmul.u32 %v1295, %v1297
  %v1300 = vmul.u32 %v1295, %v1298
  %v1301 = vmul.u32 %v1296, %v1297
  %v1302 = vmul.u32 %v1296, %v1298
  %v1303 = vshll.u32 %v1300, 16
  %v1304 = vshrl.u32 %v1300, 16
  %v1305 = vshll.u32 %v1301, 16
  %v1306 = vshrl.u32 %v1301, 16
  %vm1307 = vc.u32 %v1299, %v1303
  %v1308 = vsel %vm1307, 1, 0
  %v1309 = vadd.s32 %v1299, %v1303
  %v1310 = vadd.s32 %v1302, %v1308
  %vm1311 = vc.u32 %v1309, %v1305
  %v1312 = vsel %vm1311, 1, 0
  %v1313 = vadd.s32 %v1309, %v1305
  %v1314 = vadd.s32 %v1310, %v1312
  %v1315 = vadd.s32 %v1314, %v1304
  %v1316 = vadd.s32 %v1315, %v1306
  %v1317 = vand.u32 %v1294, 65535
  %v1318 = vshrl.u32 %v1294, 16
  %v1319 = vand.u32 %v1289, 65535
  %v1320 = vshrl.u32 %v1289, 16
  %v1321 = vmul.u32 %v1317, %v1319
  %v1322 = vmul.u32 %v1317, %v1320
  %v1323 = vmul.u32 %v1318, %v1319
  %v1324 = vmul.u32 %v1318, %v1320
  %v1325 = vshll.u32 %v1322, 16
  %v1326 = vshrl.u32 %v1322, 16
  %v1327 = vshll.u32 %v1323, 16
  %v1328 = vshrl.u32 %v1323, 16
  %vm1329 = vc.u32 %v1321, %v1325
  %v1330 = vsel %vm1329, 1, 0
  %v1331 = vadd.s32 %v1321, %v1325
  %v1332 = vadd.s32 %v1324, %v1330
  %vm1333 = vc.u32 %v1331, %v1327
  %v1334 = vsel %vm1333, 1, 0
  %v1335 = vadd.s32 %v1331, %v1327
  %v1336 = vadd.s32 %v1332, %v1334
  %v1337 = vadd.s32 %v1336, %v1326
  %v1338 = vadd.s32 %v1337, %v1328
  %v1339 = vmul.u32 %v1294, %v1285
  %v1340 = vadd.s32 %v1316, %v1335
  %vm1341 = vc.u32 %v1316, %v1335
  %v1342 = vadd.s32 %v1338, 1
  %v1343 = vsel %vm1341, %v1342, %v1338
  %v1344 = vadd.s32 %v1339, %v1343
  %v1345 = vadd.s32 %v1344, 536870912
  %v1346 = vshrl.u32 %v1345, 30
  %v1347 = vshll.u32 %v1346, 30
  %v1348 = vsub.s32 %v1344, %v1347
  %vm1349 = vcmp.lt.s32.totalorder %v1348, 0
  %v1350 = vsub.s32 0, %v1348
  %v1351 = vsel %vm1349, %v1350, %v1348
  %v1352 = vclz %v1351
  %v1353 = vsub.s32 %v1352, 2
  %vm1354 = vcmp.gt.s32.totalorder 0, %v1353
  %v1355 = vsel %vm1354, 0, %v1353
  %v1356 = vsub.s32 32, %v1355
  %v1357 = vshll.u32 %v1348, %v1355
  %v1358 = vshrl.u32 %v1340, %v1356
  %v1359 = vor.u32 %v1357, %v1358
  %v1360 = vsub.s32 4294967266, %v1355
  %v1361 = vadd.s32 %v1360, 127
  %v1362 = vshll.u32 %v1361, 23
  %v1363 = vor.u32 4788187, %v1362
  %v1364 = vand.u32 2147483647, %v1363
  %v1366 = vcvt.s32.f32 %v1359
  %v1367 = vmul.f32 %v1366, %v1364
  %v1368 = vxor.u32 %v1367, 2147483648
  %v1369 = vsel %vm1248, %v1368, %v1367
  %v1370 = vsub.s32 4, %v1346
  %v1371 = vsel %vm1248, %v1370, %v1346
  %v1372 = vsel %vm1247, %v136, %v1369
  %v1373 = vsel %vm1247, 0, %v1371
  %v1374 = vmul.f32 %v1372, %v1372
  %v1375 = vmul.f32 %v1374, -0.001358992
  %v1376 = vadd.f32 %v1375, 0.041655596
  %v1377 = vmul.f32 %v1374, %v1376
  %v1378 = vadd.f32 %v1377, -0.4999988
  %v1379 = vmul.f32 %v1374, %v1378
  %v1380 = vadd.f32 1.0, %v1379
  %v1381 = vmul.f32 %v1372, %v1372
  %v1382 = vmul.f32 %v1381, -0.00019511016
  %v1383 = vadd.f32 %v1382, 0.008332121
  %v1384 = vmul.f32 %v1381, %v1383
  %v1385 = vadd.f32 %v1384, -0.16666654
  %v1386 = vmul.f32 %v1381, %v1385
  %v1387 = vadd.f32 %v1386, 1.0
  %v1388 = vmul.f32 %v1387, %v1372
  %vm1389 = vweird.f32 %v136
  %v1390 = vadd.s32 %v1373, 3
  %v1391 = vand.u32 %v1390, 3
  %vm1392 = vcmp.lt.s32.totalorder %v1391, 2
  %vm1393 = vcmp.eq.s32.totalorder %v1391, 0
  %v1394 = vxor.u32 %v1388, 2147483648
  %v1395 = vsel %vm1393, %v1380, %v1394
  %vm1396 = vcmp.eq.s32.totalorder %v1391, 2
  %v1397 = vxor.u32 %v1380, 2147483648
  %v1398 = vsel %vm1396, %v1397, %v1388
  %v1399 = vsel %vm1392, %v1395, %v1398
  %v1400 = vsel %vm1389, nan, %v1399
  %v1401 = vand.u32 2147483647, %v137
  %vm1402 = vcmp.le.f32.partialorder %v1401, 0.7853982
  %vm1403 = vcmp.lt.s32.totalorder %v137, 0
  %v1404 = vand.u32 %v137, 2139095040
  %v1405 = vshrl.u32 %v1404, 23
  %v1406 = vsub.s32 %v1405, 127
  %v1407 = vand.u32 2147483647, %v137
  %v1408 = vand.u32 %v1407, 8388607
  %v1409 = vor.u32 %v1408, 8388608
  %v1410 = vsub.s32 0, %v1409
  %v1411 = vadd.s32 %v1406, 1
  %vm1412 = vcmp.gt.s32.totalorder %v1411, 0
  %v1413 = vsel %vm1412, %v1411, 0
  %v1414 = vshrl.u32 %v1413, 5
  %v1415 = vand.u32 %v1413, 31
  %v1416 = vsub.s32 32, %v1415
  %v1417 = vshrl.u32 683565275, %v1416
  %v1418 = vshll.u32 683565275, %v1415
  %v1419 = vshrl.u32 2475754826, %v1416
  %v1420 = vor.u32 %v1418, %v1419
  %v1421 = vshll.u32 2475754826, %v1415
  %v1422 = vshrl.u32 2131351028, %v1416
  %v1423 = vor.u32 %v1421, %v1422
  %v1424 = vshll.u32 2131351028, %v1415
  %v1425 = vshrl.u32 2102212464, %v1416
  %v1426 = vor.u32 %v1424, %v1425
  %v1427 = vshll.u32 2102212464, %v1415
  %v1428 = vshrl.u32 920167782, %v1416
  %v1429 = vor.u32 %v1427, %v1428
  %v1430 = vshll.u32 920167782, %v1415
  %v1431 = vshrl.u32 1326507024, %v1416
  %v1432 = vor.u32 %v1430, %v1431
  %vm1433 = vcmp.lt.s32.totalorder %v1414, 1
  %vm1434 = vcmp.lt.s32.totalorder %v1414, 2
  %vm1435 = vcmp.lt.s32.totalorder %v1414, 3
  %vm1436 = vcmp.lt.s32.totalorder %v1414, 4
  %v1437 = vsel %vm1433, %v1417, %v1420
  %v1438 = vsel %vm1436, %v1426, 2102212464
  %v1439 = vsel %vm1435, %v1423, %v1438
  %v1440 = vsel %vm1434, %v1437, %v1439
  %v1441 = vsel %vm1433, %v1420, %v1423
  %v1442 = vsel %vm1436, %v1429, 920167782
  %v1443 = vsel %vm1435, %v1426, %v1442
  %v1444 = vsel %vm1434, %v1441, %v1443
  %v1445 = vsel %vm1433, %v1423, %v1426
  %v1446 = vsel %vm1436, %v1432, 1326507024
  %v1447 = vsel %vm1435, %v1429, %v1446
  %v1448 = vsel %vm1434, %v1445, %v1447
  %v1449 = vshll.u32 %v1409, 8
  %v1450 = vand.u32 %v1449, 65535
  %v1451 = vshrl.u32 %v1449, 16
  %v1452 = vand.u32 %v1448, 65535
  %v1453 = vshrl.u32 %v1448, 16
  %v1454 = vmul.u32 %v1450, %v1452
  %v1455 = vmul.u32 %v1450, %v1453
  %v1456 = vmul.u32 %v1451, %v1452
  %v1457 = vmul.u32 %v1451, %v1453
  %v1458 = vshll.u32 %v1455, 16
  %v1459 = vshrl.u32 %v1455, 16
  %v1460 = vshll.u32 %v1456, 16
  %v1461 = vshrl.u32 %v1456, 16
  %vm1462 = vc.u32 %v1454, %v1458
  %v1463 = vsel %vm1462, 1, 0
  %v1464 = vadd.s32 %v1454, %v1458
  %v1465 = vadd.s32 %v1457, %v1463
  %vm1466 = vc.u32 %v1464, %v1460
  %v1467 = vsel %vm1466, 1, 0
  %v1468 = vadd.s32 %v1464, %v1460
  %v1469 = vadd.s32 %v1465, %v1467
  %v1470 = vadd.s32 %v1469, %v1459
  %v1471 = vadd.s32 %v1470, %v1461
  %v1472 = vand.u32 %v1449, 65535
  %v1473 = vshrl.u32 %v1449, 16
  %v1474 = vand.u32 %v1444, 65535
  %v1475 = vshrl.u32 %v1444, 16
  %v1476 = vmul.u32 %v1472, %v1474
  %v1477 = vmul.u32 %v1472, %v1475
  %v1478 = vmul.u32 %v1473, %v1474
  %v1479 = vmul.u32 %v1473, %v1475
  %v1480 = vshll.u32 %v1477, 16
  %v1481 = vshrl.u32 %v1477, 16
  %v1482 = vshll.u32 %v1478, 16
  %v1483 = vshrl.u32 %v1478, 16
  %vm1484 = vc.u32 %v1476, %v1480
  %v1485 = vsel %vm1484, 1, 0
  %v1486 = vadd.s32 %v1476, %v1480
  %v1487 = vadd.s32 %v1479, %v1485
  %vm1488 = vc.u32 %v1486, %v1482
  %v1489 = vsel %vm1488, 1, 0
  %v1490 = vadd.s32 %v1486, %v1482
  %v1491 = vadd.s32 %v1487, %v1489
  %v1492 = vadd.s32 %v1491, %v1481
  %v1493 = vadd.s32 %v1492, %v1483
  %v1494 = vmul.u32 %v1449, %v1440
  %v1495 = vadd.s32 %v1471, %v1490
  %vm1496 = vc.u32 %v1471, %v1490
  %v1497 = vadd.s32 %v1493, 1
  %v1498 = vsel %vm1496, %v1497, %v1493
  %v1499 = vadd.s32 %v1494, %v1498
  %v1500 = vadd.s32 %v1499, 536870912
  %v1501 = vshrl.u32 %v1500, 30
  %v1502 = vshll.u32 %v1501, 30
  %v1503 = vsub.s32 %v1499, %v1502
  %vm1504 = vcmp.lt.s32.totalorder %v1503, 0
  %v1505 = vsub.s32 0, %v1503
  %v1506 = vsel %vm1504, %v1505, %v1503
  %v1507 = vclz %v1506
  %v1508 = vsub.s32 %v1507, 2
  %vm1509 = vcmp.gt.s32.totalorder 0, %v1508
  %v1510 = vsel %vm1509, 0, %v1508
  %v1511 = vsub.s32 32, %v1510
  %v1512 = vshll.u32 %v1503, %v1510
  %v1513 = vshrl.u32 %v1495, %v1511
  %v1514 = vor.u32 %v1512, %v1513
  %v1515 = vsub.s32 4294967266, %v1510
  %v1516 = vadd.s32 %v1515, 127
  %v1517 = vshll.u32 %v1516, 23
  %v1518 = vor.u32 4788187, %v1517
  %v1519 = vand.u32 2147483647, %v1518
  %v1521 = vcvt.s32.f32 %v1514
  %v1522 = vmul.f32 %v1521, %v1519
  %v1523 = vxor.u32 %v1522, 2147483648
  %v1524 = vsel %vm1403, %v1523, %v1522
  %v1525 = vsub.s32 4, %v1501
  %v1526 = vsel %vm1403, %v1525, %v1501
  %v1527 = vsel %vm1402, %v137, %v1524
  %v1528 = vsel %vm1402, 0, %v1526
  %v1529 = vmul.f32 %v1527, %v1527
  %v1530 = vmul.f32 %v1529, -0.001358992
  %v1531 = vadd.f32 %v1530, 0.041655596
  %v1532 = vmul.f32 %v1529, %v1531
  %v1533 = vadd.f32 %v1532, -0.4999988
  %v1534 = vmul.f32 %v1529, %v1533
  %v1535 = vadd.f32 1.0, %v1534
  %v1536 = vmul.f32 %v1527, %v1527
  %v1537 = vmul.f32 %v1536, -0.00019511016
  %v1538 = vadd.f32 %v1537, 0.008332121
  %v1539 = vmul.f32 %v1536, %v1538
  %v1540 = vadd.f32 %v1539, -0.16666654
  %v1541 = vmul.f32 %v1536, %v1540
  %v1542 = vadd.f32 %v1541, 1.0
  %v1543 = vmul.f32 %v1542, %v1527
  %vm1544 = vweird.f32 %v137
  %v1545 = vadd.s32 %v1528, 3
  %v1546 = vand.u32 %v1545, 3
  %vm1547 = vcmp.lt.s32.totalorder %v1546, 2
  %vm1548 = vcmp.eq.s32.totalorder %v1546, 0
  %v1549 = vxor.u32 %v1543, 2147483648
  %v1550 = vsel %vm1548, %v1535, %v1549
  %vm1551 = vcmp.eq.s32.totalorder %v1546, 2
  %v1552 = vxor.u32 %v1535, 2147483648
  %v1553 = vsel %vm1551, %v1552, %v1543
  %v1554 = vsel %vm1547, %v1550, %v1553
  %v1555 = vsel %vm1544, nan, %v1554
  %v1556 = vand.u32 2147483647, %v138
  %vm1557 = vcmp.le.f32.partialorder %v1556, 0.7853982
  %vm1558 = vcmp.lt.s32.totalorder %v138, 0
  %v1559 = vand.u32 %v138, 2139095040
  %v1560 = vshrl.u32 %v1559, 23
  %v1561 = vsub.s32 %v1560, 127
  %v1562 = vand.u32 2147483647, %v138
  %v1563 = vand.u32 %v1562, 8388607
  %v1564 = vor.u32 %v1563, 8388608
  %v1565 = vsub.s32 0, %v1564
  %v1566 = vadd.s32 %v1561, 1
  %vm1567 = vcmp.gt.s32.totalorder %v1566, 0
  %v1568 = vsel %vm1567, %v1566, 0
  %v1569 = vshrl.u32 %v1568, 5
  %v1570 = vand.u32 %v1568, 31
  %v1571 = vsub.s32 32, %v1570
  %v1572 = vshrl.u32 683565275, %v1571
  %v1573 = vshll.u32 683565275, %v1570
  %v1574 = vshrl.u32 2475754826, %v1571
  %v1575 = vor.u32 %v1573, %v1574
  %v1576 = vshll.u32 2475754826, %v1570
  %v1577 = vshrl.u32 2131351028, %v1571
  %v1578 = vor.u32 %v1576, %v1577
  %v1579 = vshll.u32 2131351028, %v1570
  %v1580 = vshrl.u32 2102212464, %v1571
  %v1581 = vor.u32 %v1579, %v1580
  %v1582 = vshll.u32 2102212464, %v1570
  %v1583 = vshrl.u32 920167782, %v1571
  %v1584 = vor.u32 %v1582, %v1583
  %v1585 = vshll.u32 920167782, %v1570
  %v1586 = vshrl.u32 1326507024, %v1571
  %v1587 = vor.u32 %v1585, %v1586
  %vm1588 = vcmp.lt.s32.totalorder %v1569, 1
  %vm1589 = vcmp.lt.s32.totalorder %v1569, 2
  %vm1590 = vcmp.lt.s32.totalorder %v1569, 3
  %vm1591 = vcmp.lt.s32.totalorder %v1569, 4
  %v1592 = vsel %vm1588, %v1572, %v1575
  %v1593 = vsel %vm1591, %v1581, 2102212464
  %v1594 = vsel %vm1590, %v1578, %v1593
  %v1595 = vsel %vm1589, %v1592, %v1594
  %v1596 = vsel %vm1588, %v1575, %v1578
  %v1597 = vsel %vm1591, %v1584, 920167782
  %v1598 = vsel %vm1590, %v1581, %v1597
  %v1599 = vsel %vm1589, %v1596, %v1598
  %v1600 = vsel %vm1588, %v1578, %v1581
  %v1601 = vsel %vm1591, %v1587, 1326507024
  %v1602 = vsel %vm1590, %v1584, %v1601
  %v1603 = vsel %vm1589, %v1600, %v1602
  %v1604 = vshll.u32 %v1564, 8
  %v1605 = vand.u32 %v1604, 65535
  %v1606 = vshrl.u32 %v1604, 16
  %v1607 = vand.u32 %v1603, 65535
  %v1608 = vshrl.u32 %v1603, 16
  %v1609 = vmul.u32 %v1605, %v1607
  %v1610 = vmul.u32 %v1605, %v1608
  %v1611 = vmul.u32 %v1606, %v1607
  %v1612 = vmul.u32 %v1606, %v1608
  %v1613 = vshll.u32 %v1610, 16
  %v1614 = vshrl.u32 %v1610, 16
  %v1615 = vshll.u32 %v1611, 16
  %v1616 = vshrl.u32 %v1611, 16
  %vm1617 = vc.u32 %v1609, %v1613
  %v1618 = vsel %vm1617, 1, 0
  %v1619 = vadd.s32 %v1609, %v1613
  %v1620 = vadd.s32 %v1612, %v1618
  %vm1621 = vc.u32 %v1619, %v1615
  %v1622 = vsel %vm1621, 1, 0
  %v1623 = vadd.s32 %v1619, %v1615
  %v1624 = vadd.s32 %v1620, %v1622
  %v1625 = vadd.s32 %v1624, %v1614
  %v1626 = vadd.s32 %v1625, %v1616
  %v1627 = vand.u32 %v1604, 65535
  %v1628 = vshrl.u32 %v1604, 16
  %v1629 = vand.u32 %v1599, 65535
  %v1630 = vshrl.u32 %v1599, 16
  %v1631 = vmul.u32 %v1627, %v1629
  %v1632 = vmul.u32 %v1627, %v1630
  %v1633 = vmul.u32 %v1628, %v1629
  %v1634 = vmul.u32 %v1628, %v1630
  %v1635 = vshll.u32 %v1632, 16
  %v1636 = vshrl.u32 %v1632, 16
  %v1637 = vshll.u32 %v1633, 16
  %v1638 = vshrl.u32 %v1633, 16
  %vm1639 = vc.u32 %v1631, %v1635
  %v1640 = vsel %vm1639, 1, 0
  %v1641 = vadd.s32 %v1631, %v1635
  %v1642 = vadd.s32 %v1634, %v1640
  %vm1643 = vc.u32 %v1641, %v1637
  %v1644 = vsel %vm1643, 1, 0
  %v1645 = vadd.s32 %v1641, %v1637
  %v1646 = vadd.s32 %v1642, %v1644
  %v1647 = vadd.s32 %v1646, %v1636
  %v1648 = vadd.s32 %v1647, %v1638
  %v1649 = vmul.u32 %v1604, %v1595
  %v1650 = vadd.s32 %v1626, %v1645
  %vm1651 = vc.u32 %v1626, %v1645
  %v1652 = vadd.s32 %v1648, 1
  %v1653 = vsel %vm1651, %v1652, %v1648
  %v1654 = vadd.s32 %v1649, %v1653
  %v1655 = vadd.s32 %v1654, 536870912
  %v1656 = vshrl.u32 %v1655, 30
  %v1657 = vshll.u32 %v1656, 30
  %v1658 = vsub.s32 %v1654, %v1657
  %vm1659 = vcmp.lt.s32.totalorder %v1658, 0
  %v1660 = vsub.s32 0, %v1658
  %v1661 = vsel %vm1659, %v1660, %v1658
  %v1662 = vclz %v1661
  %v1663 = vsub.s32 %v1662, 2
  %vm1664 = vcmp.gt.s32.totalorder 0, %v1663
  %v1665 = vsel %vm1664, 0, %v1663
  %v1666 = vsub.s32 32, %v1665
  %v1667 = vshll.u32 %v1658, %v1665
  %v1668 = vshrl.u32 %v1650, %v1666
  %v1669 = vor.u32 %v1667, %v1668
  %v1670 = vsub.s32 4294967266, %v1665
  %v1671 = vadd.s32 %v1670, 127
  %v1672 = vshll.u32 %v1671, 23
  %v1673 = vor.u32 4788187, %v1672
  %v1674 = vand.u32 2147483647, %v1673
  %v1676 = vcvt.s32.f32 %v1669
  %v1677 = vmul.f32 %v1676, %v1674
  %v1678 = vxor.u32 %v1677, 2147483648
  %v1679 = vsel %vm1558, %v1678, %v1677
  %v1680 = vsub.s32 4, %v1656
  %v1681 = vsel %vm1558, %v1680, %v1656
  %v1682 = vsel %vm1557, %v138, %v1679
  %v1683 = vsel %vm1557, 0, %v1681
  %v1684 = vmul.f32 %v1682, %v1682
  %v1685 = vmul.f32 %v1684, -0.001358992
  %v1686 = vadd.f32 %v1685, 0.041655596
  %v1687 = vmul.f32 %v1684, %v1686
  %v1688 = vadd.f32 %v1687, -0.4999988
  %v1689 = vmul.f32 %v1684, %v1688
  %v1690 = vadd.f32 1.0, %v1689
  %v1691 = vmul.f32 %v1682, %v1682
  %v1692 = vmul.f32 %v1691, -0.00019511016
  %v1693 = vadd.f32 %v1692, 0.008332121
  %v1694 = vmul.f32 %v1691, %v1693
  %v1695 = vadd.f32 %v1694, -0.16666654
  %v1696 = vmul.f32 %v1691, %v1695
  %v1697 = vadd.f32 %v1696, 1.0
  %v1698 = vmul.f32 %v1697, %v1682
  %vm1699 = vweird.f32 %v138
  %v1700 = vadd.s32 %v1683, 3
  %v1701 = vand.u32 %v1700, 3
  %vm1702 = vcmp.lt.s32.totalorder %v1701, 2
  %vm1703 = vcmp.eq.s32.totalorder %v1701, 0
  %v1704 = vxor.u32 %v1698, 2147483648
  %v1705 = vsel %vm1703, %v1690, %v1704
  %vm1706 = vcmp.eq.s32.totalorder %v1701, 2
  %v1707 = vxor.u32 %v1690, 2147483648
  %v1708 = vsel %vm1706, %v1707, %v1698
  %v1709 = vsel %vm1702, %v1705, %v1708
  %v1710 = vsel %vm1699, nan, %v1709
  %v1711 = vand.u32 2147483647, %v139
  %vm1712 = vcmp.le.f32.partialorder %v1711, 0.7853982
  %vm1713 = vcmp.lt.s32.totalorder %v139, 0
  %v1714 = vand.u32 %v139, 2139095040
  %v1715 = vshrl.u32 %v1714, 23
  %v1716 = vsub.s32 %v1715, 127
  %v1717 = vand.u32 2147483647, %v139
  %v1718 = vand.u32 %v1717, 8388607
  %v1719 = vor.u32 %v1718, 8388608
  %v1720 = vsub.s32 0, %v1719
  %v1721 = vadd.s32 %v1716, 1
  %vm1722 = vcmp.gt.s32.totalorder %v1721, 0
  %v1723 = vsel %vm1722, %v1721, 0
  %v1724 = vshrl.u32 %v1723, 5
  %v1725 = vand.u32 %v1723, 31
  %v1726 = vsub.s32 32, %v1725
  %v1727 = vshrl.u32 683565275, %v1726
  %v1728 = vshll.u32 683565275, %v1725
  %v1729 = vshrl.u32 2475754826, %v1726
  %v1730 = vor.u32 %v1728, %v1729
  %v1731 = vshll.u32 2475754826, %v1725
  %v1732 = vshrl.u32 2131351028, %v1726
  %v1733 = vor.u32 %v1731, %v1732
  %v1734 = vshll.u32 2131351028, %v1725
  %v1735 = vshrl.u32 2102212464, %v1726
  %v1736 = vor.u32 %v1734, %v1735
  %v1737 = vshll.u32 2102212464, %v1725
  %v1738 = vshrl.u32 920167782, %v1726
  %v1739 = vor.u32 %v1737, %v1738
  %v1740 = vshll.u32 920167782, %v1725
  %v1741 = vshrl.u32 1326507024, %v1726
  %v1742 = vor.u32 %v1740, %v1741
  %vm1743 = vcmp.lt.s32.totalorder %v1724, 1
  %vm1744 = vcmp.lt.s32.totalorder %v1724, 2
  %vm1745 = vcmp.lt.s32.totalorder %v1724, 3
  %vm1746 = vcmp.lt.s32.totalorder %v1724, 4
  %v1747 = vsel %vm1743, %v1727, %v1730
  %v1748 = vsel %vm1746, %v1736, 2102212464
  %v1749 = vsel %vm1745, %v1733, %v1748
  %v1750 = vsel %vm1744, %v1747, %v1749
  %v1751 = vsel %vm1743, %v1730, %v1733
  %v1752 = vsel %vm1746, %v1739, 920167782
  %v1753 = vsel %vm1745, %v1736, %v1752
  %v1754 = vsel %vm1744, %v1751, %v1753
  %v1755 = vsel %vm1743, %v1733, %v1736
  %v1756 = vsel %vm1746, %v1742, 1326507024
  %v1757 = vsel %vm1745, %v1739, %v1756
  %v1758 = vsel %vm1744, %v1755, %v1757
  %v1759 = vshll.u32 %v1719, 8
  %v1760 = vand.u32 %v1759, 65535
  %v1761 = vshrl.u32 %v1759, 16
  %v1762 = vand.u32 %v1758, 65535
  %v1763 = vshrl.u32 %v1758, 16
  %v1764 = vmul.u32 %v1760, %v1762
  %v1765 = vmul.u32 %v1760, %v1763
  %v1766 = vmul.u32 %v1761, %v1762
  %v1767 = vmul.u32 %v1761, %v1763
  %v1768 = vshll.u32 %v1765, 16
  %v1769 = vshrl.u32 %v1765, 16
  %v1770 = vshll.u32 %v1766, 16
  %v1771 = vshrl.u32 %v1766, 16
  %vm1772 = vc.u32 %v1764, %v1768
  %v1773 = vsel %vm1772, 1, 0
  %v1774 = vadd.s32 %v1764, %v1768
  %v1775 = vadd.s32 %v1767, %v1773
  %vm1776 = vc.u32 %v1774, %v1770
  %v1777 = vsel %vm1776, 1, 0
  %v1778 = vadd.s32 %v1774, %v1770
  %v1779 = vadd.s32 %v1775, %v1777
  %v1780 = vadd.s32 %v1779, %v1769
  %v1781 = vadd.s32 %v1780, %v1771
  %v1782 = vand.u32 %v1759, 65535
  %v1783 = vshrl.u32 %v1759, 16
  %v1784 = vand.u32 %v1754, 65535
  %v1785 = vshrl.u32 %v1754, 16
  %v1786 = vmul.u32 %v1782, %v1784
  %v1787 = vmul.u32 %v1782, %v1785
  %v1788 = vmul.u32 %v1783, %v1784
  %v1789 = vmul.u32 %v1783, %v1785
  %v1790 = vshll.u32 %v1787, 16
  %v1791 = vshrl.u32 %v1787, 16
  %v1792 = vshll.u32 %v1788, 16
  %v1793 = vshrl.u32 %v1788, 16
  %vm1794 = vc.u32 %v1786, %v1790
  %v1795 = vsel %vm1794, 1, 0
  %v1796 = vadd.s32 %v1786, %v1790
  %v1797 = vadd.s32 %v1789, %v1795
  %vm1798 = vc.u32 %v1796, %v1792
  %v1799 = vsel %vm1798, 1, 0
  %v1800 = vadd.s32 %v1796, %v1792
  %v1801 = vadd.s32 %v1797, %v1799
  %v1802 = vadd.s32 %v1801, %v1791
  %v1803 = vadd.s32 %v1802, %v1793
  %v1804 = vmul.u32 %v1759, %v1750
  %v1805 = vadd.s32 %v1781, %v1800
  %vm1806 = vc.u32 %v1781, %v1800
  %v1807 = vadd.s32 %v1803, 1
  %v1808 = vsel %vm1806, %v1807, %v1803
  %v1809 = vadd.s32 %v1804, %v1808
  %v1810 = vadd.s32 %v1809, 536870912
  %v1811 = vshrl.u32 %v1810, 30
  %v1812 = vshll.u32 %v1811, 30
  %v1813 = vsub.s32 %v1809, %v1812
  %vm1814 = vcmp.lt.s32.totalorder %v1813, 0
  %v1815 = vsub.s32 0, %v1813
  %v1816 = vsel %vm1814, %v1815, %v1813
  %v1817 = vclz %v1816
  %v1818 = vsub.s32 %v1817, 2
  %vm1819 = vcmp.gt.s32.totalorder 0, %v1818
  %v1820 = vsel %vm1819, 0, %v1818
  %v1821 = vsub.s32 32, %v1820
  %v1822 = vshll.u32 %v1813, %v1820
  %v1823 = vshrl.u32 %v1805, %v1821
  %v1824 = vor.u32 %v1822, %v1823
  %v1825 = vsub.s32 4294967266, %v1820
  %v1826 = vadd.s32 %v1825, 127
  %v1827 = vshll.u32 %v1826, 23
  %v1828 = vor.u32 4788187, %v1827
  %v1829 = vand.u32 2147483647, %v1828
  %v1831 = vcvt.s32.f32 %v1824
  %v1832 = vmul.f32 %v1831, %v1829
  %v1833 = vxor.u32 %v1832, 2147483648
  %v1834 = vsel %vm1713, %v1833, %v1832
  %v1835 = vsub.s32 4, %v1811
  %v1836 = vsel %vm1713, %v1835, %v1811
  %v1837 = vsel %vm1712, %v139, %v1834
  %v1838 = vsel %vm1712, 0, %v1836
  %v1839 = vmul.f32 %v1837, %v1837
  %v1840 = vmul.f32 %v1839, -0.001358992
  %v1841 = vadd.f32 %v1840, 0.041655596
  %v1842 = vmul.f32 %v1839, %v1841
  %v1843 = vadd.f32 %v1842, -0.4999988
  %v1844 = vmul.f32 %v1839, %v1843
  %v1845 = vadd.f32 1.0, %v1844
  %v1846 = vmul.f32 %v1837, %v1837
  %v1847 = vmul.f32 %v1846, -0.00019511016
  %v1848 = vadd.f32 %v1847, 0.008332121
  %v1849 = vmul.f32 %v1846, %v1848
  %v1850 = vadd.f32 %v1849, -0.16666654
  %v1851 = vmul.f32 %v1846, %v1850
  %v1852 = vadd.f32 %v1851, 1.0
  %v1853 = vmul.f32 %v1852, %v1837
  %vm1854 = vweird.f32 %v139
  %v1855 = vadd.s32 %v1838, 3
  %v1856 = vand.u32 %v1855, 3
  %vm1857 = vcmp.lt.s32.totalorder %v1856, 2
  %vm1858 = vcmp.eq.s32.totalorder %v1856, 0
  %v1859 = vxor.u32 %v1853, 2147483648
  %v1860 = vsel %vm1858, %v1845, %v1859
  %vm1861 = vcmp.eq.s32.totalorder %v1856, 2
  %v1862 = vxor.u32 %v1845, 2147483648
  %v1863 = vsel %vm1861, %v1862, %v1853
  %v1864 = vsel %vm1857, %v1860, %v1863
  %v1865 = vsel %vm1854, nan, %v1864
  %v1866 = vand.u32 2147483647, %v140
  %vm1867 = vcmp.le.f32.partialorder %v1866, 0.7853982
  %vm1868 = vcmp.lt.s32.totalorder %v140, 0
  %v1869 = vand.u32 %v140, 2139095040
  %v1870 = vshrl.u32 %v1869, 23
  %v1871 = vsub.s32 %v1870, 127
  %v1872 = vand.u32 2147483647, %v140
  %v1873 = vand.u32 %v1872, 8388607
  %v1874 = vor.u32 %v1873, 8388608
  %v1875 = vsub.s32 0, %v1874
  %v1876 = vadd.s32 %v1871, 1
  %vm1877 = vcmp.gt.s32.totalorder %v1876, 0
  %v1878 = vsel %vm1877, %v1876, 0
  %v1879 = vshrl.u32 %v1878, 5
  %v1880 = vand.u32 %v1878, 31
  %v1881 = vsub.s32 32, %v1880
  %v1882 = vshrl.u32 683565275, %v1881
  %v1883 = vshll.u32 683565275, %v1880
  %v1884 = vshrl.u32 2475754826, %v1881
  %v1885 = vor.u32 %v1883, %v1884
  %v1886 = vshll.u32 2475754826, %v1880
  %v1887 = vshrl.u32 2131351028, %v1881
  %v1888 = vor.u32 %v1886, %v1887
  %v1889 = vshll.u32 2131351028, %v1880
  %v1890 = vshrl.u32 2102212464, %v1881
  %v1891 = vor.u32 %v1889, %v1890
  %v1892 = vshll.u32 2102212464, %v1880
  %v1893 = vshrl.u32 920167782, %v1881
  %v1894 = vor.u32 %v1892, %v1893
  %v1895 = vshll.u32 920167782, %v1880
  %v1896 = vshrl.u32 1326507024, %v1881
  %v1897 = vor.u32 %v1895, %v1896
  %vm1898 = vcmp.lt.s32.totalorder %v1879, 1
  %vm1899 = vcmp.lt.s32.totalorder %v1879, 2
  %vm1900 = vcmp.lt.s32.totalorder %v1879, 3
  %vm1901 = vcmp.lt.s32.totalorder %v1879, 4
  %v1902 = vsel %vm1898, %v1882, %v1885
  %v1903 = vsel %vm1901, %v1891, 2102212464
  %v1904 = vsel %vm1900, %v1888, %v1903
  %v1905 = vsel %vm1899, %v1902, %v1904
  %v1906 = vsel %vm1898, %v1885, %v1888
  %v1907 = vsel %vm1901, %v1894, 920167782
  %v1908 = vsel %vm1900, %v1891, %v1907
  %v1909 = vsel %vm1899, %v1906, %v1908
  %v1910 = vsel %vm1898, %v1888, %v1891
  %v1911 = vsel %vm1901, %v1897, 1326507024
  %v1912 = vsel %vm1900, %v1894, %v1911
  %v1913 = vsel %vm1899, %v1910, %v1912
  %v1914 = vshll.u32 %v1874, 8
  %v1915 = vand.u32 %v1914, 65535
  %v1916 = vshrl.u32 %v1914, 16
  %v1917 = vand.u32 %v1913, 65535
  %v1918 = vshrl.u32 %v1913, 16
  %v1919 = vmul.u32 %v1915, %v1917
  %v1920 = vmul.u32 %v1915, %v1918
  %v1921 = vmul.u32 %v1916, %v1917
  %v1922 = vmul.u32 %v1916, %v1918
  %v1923 = vshll.u32 %v1920, 16
  %v1924 = vshrl.u32 %v1920, 16
  %v1925 = vshll.u32 %v1921, 16
  %v1926 = vshrl.u32 %v1921, 16
  %vm1927 = vc.u32 %v1919, %v1923
  %v1928 = vsel %vm1927, 1, 0
  %v1929 = vadd.s32 %v1919, %v1923
  %v1930 = vadd.s32 %v1922, %v1928
  %vm1931 = vc.u32 %v1929, %v1925
  %v1932 = vsel %vm1931, 1, 0
  %v1933 = vadd.s32 %v1929, %v1925
  %v1934 = vadd.s32 %v1930, %v1932
  %v1935 = vadd.s32 %v1934, %v1924
  %v1936 = vadd.s32 %v1935, %v1926
  %v1937 = vand.u32 %v1914, 65535
  %v1938 = vshrl.u32 %v1914, 16
  %v1939 = vand.u32 %v1909, 65535
  %v1940 = vshrl.u32 %v1909, 16
  %v1941 = vmul.u32 %v1937, %v1939
  %v1942 = vmul.u32 %v1937, %v1940
  %v1943 = vmul.u32 %v1938, %v1939
  %v1944 = vmul.u32 %v1938, %v1940
  %v1945 = vshll.u32 %v1942, 16
  %v1946 = vshrl.u32 %v1942, 16
  %v1947 = vshll.u32 %v1943, 16
  %v1948 = vshrl.u32 %v1943, 16
  %vm1949 = vc.u32 %v1941, %v1945
  %v1950 = vsel %vm1949, 1, 0
  %v1951 = vadd.s32 %v1941, %v1945
  %v1952 = vadd.s32 %v1944, %v1950
  %vm1953 = vc.u32 %v1951, %v1947
  %v1954 = vsel %vm1953, 1, 0
  %v1955 = vadd.s32 %v1951, %v1947
  %v1956 = vadd.s32 %v1952, %v1954
  %v1957 = vadd.s32 %v1956, %v1946
  %v1958 = vadd.s32 %v1957, %v1948
  %v1959 = vmul.u32 %v1914, %v1905
  %v1960 = vadd.s32 %v1936, %v1955
  %vm1961 = vc.u32 %v1936, %v1955
  %v1962 = vadd.s32 %v1958, 1
  %v1963 = vsel %vm1961, %v1962, %v1958
  %v1964 = vadd.s32 %v1959, %v1963
  %v1965 = vadd.s32 %v1964, 536870912
  %v1966 = vshrl.u32 %v1965, 30
  %v1967 = vshll.u32 %v1966, 30
  %v1968 = vsub.s32 %v1964, %v1967
  %vm1969 = vcmp.lt.s32.totalorder %v1968, 0
  %v1970 = vsub.s32 0, %v1968
  %v1971 = vsel %vm1969, %v1970, %v1968
  %v1972 = vclz %v1971
  %v1973 = vsub.s32 %v1972, 2
  %vm1974 = vcmp.gt.s32.totalorder 0, %v1973
  %v1975 = vsel %vm1974, 0, %v1973
  %v1976 = vsub.s32 32, %v1975
  %v1977 = vshll.u32 %v1968, %v1975
  %v1978 = vshrl.u32 %v1960, %v1976
  %v1979 = vor.u32 %v1977, %v1978
  %v1980 = vsub.s32 4294967266, %v1975
  %v1981 = vadd.s32 %v1980, 127
  %v1982 = vshll.u32 %v1981, 23
  %v1983 = vor.u32 4788187, %v1982
  %v1984 = vand.u32 2147483647, %v1983
  %v1986 = vcvt.s32.f32 %v1979
  %v1987 = vmul.f32 %v1986, %v1984
  %v1988 = vxor.u32 %v1987, 2147483648
  %v1989 = vsel %vm1868, %v1988, %v1987
  %v1990 = vsub.s32 4, %v1966
  %v1991 = vsel %vm1868, %v1990, %v1966
  %v1992 = vsel %vm1867, %v140, %v1989
  %v1993 = vsel %vm1867, 0, %v1991
  %v1994 = vmul.f32 %v1992, %v1992
  %v1995 = vmul.f32 %v1994, -0.001358992
  %v1996 = vadd.f32 %v1995, 0.041655596
  %v1997 = vmul.f32 %v1994, %v1996
  %v1998 = vadd.f32 %v1997, -0.4999988
  %v1999 = vmul.f32 %v1994, %v1998
  %v2000 = vadd.f32 1.0, %v1999
  %v2001 = vmul.f32 %v1992, %v1992
  %v2002 = vmul.f32 %v2001, -0.00019511016
  %v2003 = vadd.f32 %v2002, 0.008332121
  %v2004 = vmul.f32 %v2001, %v2003
  %v2005 = vadd.f32 %v2004, -0.16666654
  %v2006 = vmul.f32 %v2001, %v2005
  %v2007 = vadd.f32 %v2006, 1.0
  %v2008 = vmul.f32 %v2007, %v1992
  %vm2009 = vweird.f32 %v140
  %v2010 = vadd.s32 %v1993, 3
  %v2011 = vand.u32 %v2010, 3
  %vm2012 = vcmp.lt.s32.totalorder %v2011, 2
  %vm2013 = vcmp.eq.s32.totalorder %v2011, 0
  %v2014 = vxor.u32 %v2008, 2147483648
  %v2015 = vsel %vm2013, %v2000, %v2014
  %vm2016 = vcmp.eq.s32.totalorder %v2011, 2
  %v2017 = vxor.u32 %v2000, 2147483648
  %v2018 = vsel %vm2016, %v2017, %v2008
  %v2019 = vsel %vm2012, %v2015, %v2018
  %v2020 = vsel %vm2009, nan, %v2019
  %v2021 = vand.u32 2147483647, %v141
  %vm2022 = vcmp.le.f32.partialorder %v2021, 0.7853982
  %vm2023 = vcmp.lt.s32.totalorder %v141, 0
  %v2024 = vand.u32 %v141, 2139095040
  %v2025 = vshrl.u32 %v2024, 23
  %v2026 = vsub.s32 %v2025, 127
  %v2027 = vand.u32 2147483647, %v141
  %v2028 = vand.u32 %v2027, 8388607
  %v2029 = vor.u32 %v2028, 8388608
  %v2030 = vsub.s32 0, %v2029
  %v2031 = vadd.s32 %v2026, 1
  %vm2032 = vcmp.gt.s32.totalorder %v2031, 0
  %v2033 = vsel %vm2032, %v2031, 0
  %v2034 = vshrl.u32 %v2033, 5
  %v2035 = vand.u32 %v2033, 31
  %v2036 = vsub.s32 32, %v2035
  %v2037 = vshrl.u32 683565275, %v2036
  %v2038 = vshll.u32 683565275, %v2035
  %v2039 = vshrl.u32 2475754826, %v2036
  %v2040 = vor.u32 %v2038, %v2039
  %v2041 = vshll.u32 2475754826, %v2035
  %v2042 = vshrl.u32 2131351028, %v2036
  %v2043 = vor.u32 %v2041, %v2042
  %v2044 = vshll.u32 2131351028, %v2035
  %v2045 = vshrl.u32 2102212464, %v2036
  %v2046 = vor.u32 %v2044, %v2045
  %v2047 = vshll.u32 2102212464, %v2035
  %v2048 = vshrl.u32 920167782, %v2036
  %v2049 = vor.u32 %v2047, %v2048
  %v2050 = vshll.u32 920167782, %v2035
  %v2051 = vshrl.u32 1326507024, %v2036
  %v2052 = vor.u32 %v2050, %v2051
  %vm2053 = vcmp.lt.s32.totalorder %v2034, 1
  %vm2054 = vcmp.lt.s32.totalorder %v2034, 2
  %vm2055 = vcmp.lt.s32.totalorder %v2034, 3
  %vm2056 = vcmp.lt.s32.totalorder %v2034, 4
  %v2057 = vsel %vm2053, %v2037, %v2040
  %v2058 = vsel %vm2056, %v2046, 2102212464
  %v2059 = vsel %vm2055, %v2043, %v2058
  %v2060 = vsel %vm2054, %v2057, %v2059
  %v2061 = vsel %vm2053, %v2040, %v2043
  %v2062 = vsel %vm2056, %v2049, 920167782
  %v2063 = vsel %vm2055, %v2046, %v2062
  %v2064 = vsel %vm2054, %v2061, %v2063
  %v2065 = vsel %vm2053, %v2043, %v2046
  %v2066 = vsel %vm2056, %v2052, 1326507024
  %v2067 = vsel %vm2055, %v2049, %v2066
  %v2068 = vsel %vm2054, %v2065, %v2067
  %v2069 = vshll.u32 %v2029, 8
  %v2070 = vand.u32 %v2069, 65535
  %v2071 = vshrl.u32 %v2069, 16
  %v2072 = vand.u32 %v2068, 65535
  %v2073 = vshrl.u32 %v2068, 16
  %v2074 = vmul.u32 %v2070, %v2072
  %v2075 = vmul.u32 %v2070, %v2073
  %v2076 = vmul.u32 %v2071, %v2072
  %v2077 = vmul.u32 %v2071, %v2073
  %v2078 = vshll.u32 %v2075, 16
  %v2079 = vshrl.u32 %v2075, 16
  %v2080 = vshll.u32 %v2076, 16
  %v2081 = vshrl.u32 %v2076, 16
  %vm2082 = vc.u32 %v2074, %v2078
  %v2083 = vsel %vm2082, 1, 0
  %v2084 = vadd.s32 %v2074, %v2078
  %v2085 = vadd.s32 %v2077, %v2083
  %vm2086 = vc.u32 %v2084, %v2080
  %v2087 = vsel %vm2086, 1, 0
  %v2088 = vadd.s32 %v2084, %v2080
  %v2089 = vadd.s32 %v2085, %v2087
  %v2090 = vadd.s32 %v2089, %v2079
  %v2091 = vadd.s32 %v2090, %v2081
  %v2092 = vand.u32 %v2069, 65535
  %v2093 = vshrl.u32 %v2069, 16
  %v2094 = vand.u32 %v2064, 65535
  %v2095 = vshrl.u32 %v2064, 16
  %v2096 = vmul.u32 %v2092, %v2094
  %v2097 = vmul.u32 %v2092, %v2095
  %v2098 = vmul.u32 %v2093, %v2094
  %v2099 = vmul.u32 %v2093, %v2095
  %v2100 = vshll.u32 %v2097, 16
  %v2101 = vshrl.u32 %v2097, 16
  %v2102 = vshll.u32 %v2098, 16
  %v2103 = vshrl.u32 %v2098, 16
  %vm2104 = vc.u32 %v2096, %v2100
  %v2105 = vsel %vm2104, 1, 0
  %v2106 = vadd.s32 %v2096, %v2100
  %v2107 = vadd.s32 %v2099, %v2105
  %vm2108 = vc.u32 %v2106, %v2102
  %v2109 = vsel %vm2108, 1, 0
  %v2110 = vadd.s32 %v2106, %v2102
  %v2111 = vadd.s32 %v2107, %v2109
  %v2112 = vadd.s32 %v2111, %v2101
  %v2113 = vadd.s32 %v2112, %v2103
  %v2114 = vmul.u32 %v2069, %v2060
  %v2115 = vadd.s32 %v2091, %v2110
  %vm2116 = vc.u32 %v2091, %v2110
  %v2117 = vadd.s32 %v2113, 1
  %v2118 = vsel %vm2116, %v2117, %v2113
  %v2119 = vadd.s32 %v2114, %v2118
  %v2120 = vadd.s32 %v2119, 536870912
  %v2121 = vshrl.u32 %v2120, 30
  %v2122 = vshll.u32 %v2121, 30
  %v2123 = vsub.s32 %v2119, %v2122
  %vm2124 = vcmp.lt.s32.totalorder %v2123, 0
  %v2125 = vsub.s32 0, %v2123
  %v2126 = vsel %vm2124, %v2125, %v2123
  %v2127 = vclz %v2126
  %v2128 = vsub.s32 %v2127, 2
  %vm2129 = vcmp.gt.s32.totalorder 0, %v2128
  %v2130 = vsel %vm2129, 0, %v2128
  %v2131 = vsub.s32 32, %v2130
  %v2132 = vshll.u32 %v2123, %v2130
  %v2133 = vshrl.u32 %v2115, %v2131
  %v2134 = vor.u32 %v2132, %v2133
  %v2135 = vsub.s32 4294967266, %v2130
  %v2136 = vadd.s32 %v2135, 127
  %v2137 = vshll.u32 %v2136, 23
  %v2138 = vor.u32 4788187, %v2137
  %v2139 = vand.u32 2147483647, %v2138
  %v2141 = vcvt.s32.f32 %v2134
  %v2142 = vmul.f32 %v2141, %v2139
  %v2143 = vxor.u32 %v2142, 2147483648
  %v2144 = vsel %vm2023, %v2143, %v2142
  %v2145 = vsub.s32 4, %v2121
  %v2146 = vsel %vm2023, %v2145, %v2121
  %v2147 = vsel %vm2022, %v141, %v2144
  %v2148 = vsel %vm2022, 0, %v2146
  %v2149 = vmul.f32 %v2147, %v2147
  %v2150 = vmul.f32 %v2149, -0.001358992
  %v2151 = vadd.f32 %v2150, 0.041655596
  %v2152 = vmul.f32 %v2149, %v2151
  %v2153 = vadd.f32 %v2152, -0.4999988
  %v2154 = vmul.f32 %v2149, %v2153
  %v2155 = vadd.f32 1.0, %v2154
  %v2156 = vmul.f32 %v2147, %v2147
  %v2157 = vmul.f32 %v2156, -0.00019511016
  %v2158 = vadd.f32 %v2157, 0.008332121
  %v2159 = vmul.f32 %v2156, %v2158
  %v2160 = vadd.f32 %v2159, -0.16666654
  %v2161 = vmul.f32 %v2156, %v2160
  %v2162 = vadd.f32 %v2161, 1.0
  %v2163 = vmul.f32 %v2162, %v2147
  %vm2164 = vweird.f32 %v141
  %v2165 = vadd.s32 %v2148, 3
  %v2166 = vand.u32 %v2165, 3
  %vm2167 = vcmp.lt.s32.totalorder %v2166, 2
  %vm2168 = vcmp.eq.s32.totalorder %v2166, 0
  %v2169 = vxor.u32 %v2163, 2147483648
  %v2170 = vsel %vm2168, %v2155, %v2169
  %vm2171 = vcmp.eq.s32.totalorder %v2166, 2
  %v2172 = vxor.u32 %v2155, 2147483648
  %v2173 = vsel %vm2171, %v2172, %v2163
  %v2174 = vsel %vm2167, %v2170, %v2173
  %v2175 = vsel %vm2164, nan, %v2174
  %v2176 = vand.u32 2147483647, %v142
  %vm2177 = vcmp.le.f32.partialorder %v2176, 0.7853982
  %vm2178 = vcmp.lt.s32.totalorder %v142, 0
  %v2179 = vand.u32 %v142, 2139095040
  %v2180 = vshrl.u32 %v2179, 23
  %v2181 = vsub.s32 %v2180, 127
  %v2182 = vand.u32 2147483647, %v142
  %v2183 = vand.u32 %v2182, 8388607
  %v2184 = vor.u32 %v2183, 8388608
  %v2185 = vsub.s32 0, %v2184
  %v2186 = vadd.s32 %v2181, 1
  %vm2187 = vcmp.gt.s32.totalorder %v2186, 0
  %v2188 = vsel %vm2187, %v2186, 0
  %v2189 = vshrl.u32 %v2188, 5
  %v2190 = vand.u32 %v2188, 31
  %v2191 = vsub.s32 32, %v2190
  %v2192 = vshrl.u32 683565275, %v2191
  %v2193 = vshll.u32 683565275, %v2190
  %v2194 = vshrl.u32 2475754826, %v2191
  %v2195 = vor.u32 %v2193, %v2194
  %v2196 = vshll.u32 2475754826, %v2190
  %v2197 = vshrl.u32 2131351028, %v2191
  %v2198 = vor.u32 %v2196, %v2197
  %v2199 = vshll.u32 2131351028, %v2190
  %v2200 = vshrl.u32 2102212464, %v2191
  %v2201 = vor.u32 %v2199, %v2200
  %v2202 = vshll.u32 2102212464, %v2190
  %v2203 = vshrl.u32 920167782, %v2191
  %v2204 = vor.u32 %v2202, %v2203
  %v2205 = vshll.u32 920167782, %v2190
  %v2206 = vshrl.u32 1326507024, %v2191
  %v2207 = vor.u32 %v2205, %v2206
  %vm2208 = vcmp.lt.s32.totalorder %v2189, 1
  %vm2209 = vcmp.lt.s32.totalorder %v2189, 2
  %vm2210 = vcmp.lt.s32.totalorder %v2189, 3
  %vm2211 = vcmp.lt.s32.totalorder %v2189, 4
  %v2212 = vsel %vm2208, %v2192, %v2195
  %v2213 = vsel %vm2211, %v2201, 2102212464
  %v2214 = vsel %vm2210, %v2198, %v2213
  %v2215 = vsel %vm2209, %v2212, %v2214
  %v2216 = vsel %vm2208, %v2195, %v2198
  %v2217 = vsel %vm2211, %v2204, 920167782
  %v2218 = vsel %vm2210, %v2201, %v2217
  %v2219 = vsel %vm2209, %v2216, %v2218
  %v2220 = vsel %vm2208, %v2198, %v2201
  %v2221 = vsel %vm2211, %v2207, 1326507024
  %v2222 = vsel %vm2210, %v2204, %v2221
  %v2223 = vsel %vm2209, %v2220, %v2222
  %v2224 = vshll.u32 %v2184, 8
  %v2225 = vand.u32 %v2224, 65535
  %v2226 = vshrl.u32 %v2224, 16
  %v2227 = vand.u32 %v2223, 65535
  %v2228 = vshrl.u32 %v2223, 16
  %v2229 = vmul.u32 %v2225, %v2227
  %v2230 = vmul.u32 %v2225, %v2228
  %v2231 = vmul.u32 %v2226, %v2227
  %v2232 = vmul.u32 %v2226, %v2228
  %v2233 = vshll.u32 %v2230, 16
  %v2234 = vshrl.u32 %v2230, 16
  %v2235 = vshll.u32 %v2231, 16
  %v2236 = vshrl.u32 %v2231, 16
  %vm2237 = vc.u32 %v2229, %v2233
  %v2238 = vsel %vm2237, 1, 0
  %v2239 = vadd.s32 %v2229, %v2233
  %v2240 = vadd.s32 %v2232, %v2238
  %vm2241 = vc.u32 %v2239, %v2235
  %v2242 = vsel %vm2241, 1, 0
  %v2243 = vadd.s32 %v2239, %v2235
  %v2244 = vadd.s32 %v2240, %v2242
  %v2245 = vadd.s32 %v2244, %v2234
  %v2246 = vadd.s32 %v2245, %v2236
  %v2247 = vand.u32 %v2224, 65535
  %v2248 = vshrl.u32 %v2224, 16
  %v2249 = vand.u32 %v2219, 65535
  %v2250 = vshrl.u32 %v2219, 16
  %v2251 = vmul.u32 %v2247, %v2249
  %v2252 = vmul.u32 %v2247, %v2250
  %v2253 = vmul.u32 %v2248, %v2249
  %v2254 = vmul.u32 %v2248, %v2250
  %v2255 = vshll.u32 %v2252, 16
  %v2256 = vshrl.u32 %v2252, 16
  %v2257 = vshll.u32 %v2253, 16
  %v2258 = vshrl.u32 %v2253, 16
  %vm2259 = vc.u32 %v2251, %v2255
  %v2260 = vsel %vm2259, 1, 0
  %v2261 = vadd.s32 %v2251, %v2255
  %v2262 = vadd.s32 %v2254, %v2260
  %vm2263 = vc.u32 %v2261, %v2257
  %v2264 = vsel %vm2263, 1, 0
  %v2265 = vadd.s32 %v2261, %v2257
  %v2266 = vadd.s32 %v2262, %v2264
  %v2267 = vadd.s32 %v2266, %v2256
  %v2268 = vadd.s32 %v2267, %v2258
  %v2269 = vmul.u32 %v2224, %v2215
  %v2270 = vadd.s32 %v2246, %v2265
  %vm2271 = vc.u32 %v2246, %v2265
  %v2272 = vadd.s32 %v2268, 1
  %v2273 = vsel %vm2271, %v2272, %v2268
  %v2274 = vadd.s32 %v2269, %v2273
  %v2275 = vadd.s32 %v2274, 536870912
  %v2276 = vshrl.u32 %v2275, 30
  %v2277 = vshll.u32 %v2276, 30
  %v2278 = vsub.s32 %v2274, %v2277
  %vm2279 = vcmp.lt.s32.totalorder %v2278, 0
  %v2280 = vsub.s32 0, %v2278
  %v2281 = vsel %vm2279, %v2280, %v2278
  %v2282 = vclz %v2281
  %v2283 = vsub.s32 %v2282, 2
  %vm2284 = vcmp.gt.s32.totalorder 0, %v2283
  %v2285 = vsel %vm2284, 0, %v2283
  %v2286 = vsub.s32 32, %v2285
  %v2287 = vshll.u32 %v2278, %v2285
  %v2288 = vshrl.u32 %v2270, %v2286
  %v2289 = vor.u32 %v2287, %v2288
  %v2290 = vsub.s32 4294967266, %v2285
  %v2291 = vadd.s32 %v2290, 127
  %v2292 = vshll.u32 %v2291, 23
  %v2293 = vor.u32 4788187, %v2292
  %v2294 = vand.u32 2147483647, %v2293
  %v2296 = vcvt.s32.f32 %v2289
  %v2297 = vmul.f32 %v2296, %v2294
  %v2298 = vxor.u32 %v2297, 2147483648
  %v2299 = vsel %vm2178, %v2298, %v2297
  %v2300 = vsub.s32 4, %v2276
  %v2301 = vsel %vm2178, %v2300, %v2276
  %v2302 = vsel %vm2177, %v142, %v2299
  %v2303 = vsel %vm2177, 0, %v2301
  %v2304 = vmul.f32 %v2302, %v2302
  %v2305 = vmul.f32 %v2304, -0.001358992
  %v2306 = vadd.f32 %v2305, 0.041655596
  %v2307 = vmul.f32 %v2304, %v2306
  %v2308 = vadd.f32 %v2307, -0.4999988
  %v2309 = vmul.f32 %v2304, %v2308
  %v2310 = vadd.f32 1.0, %v2309
  %v2311 = vmul.f32 %v2302, %v2302
  %v2312 = vmul.f32 %v2311, -0.00019511016
  %v2313 = vadd.f32 %v2312, 0.008332121
  %v2314 = vmul.f32 %v2311, %v2313
  %v2315 = vadd.f32 %v2314, -0.16666654
  %v2316 = vmul.f32 %v2311, %v2315
  %v2317 = vadd.f32 %v2316, 1.0
  %v2318 = vmul.f32 %v2317, %v2302
  %vm2319 = vweird.f32 %v142
  %v2320 = vadd.s32 %v2303, 3
  %v2321 = vand.u32 %v2320, 3
  %vm2322 = vcmp.lt.s32.totalorder %v2321, 2
  %vm2323 = vcmp.eq.s32.totalorder %v2321, 0
  %v2324 = vxor.u32 %v2318, 2147483648
  %v2325 = vsel %vm2323, %v2310, %v2324
  %vm2326 = vcmp.eq.s32.totalorder %v2321, 2
  %v2327 = vxor.u32 %v2310, 2147483648
  %v2328 = vsel %vm2326, %v2327, %v2318
  %v2329 = vsel %vm2322, %v2325, %v2328
  %v2330 = vsel %vm2319, nan, %v2329
  %v2331 = vand.u32 2147483647, %v143
  %vm2332 = vcmp.le.f32.partialorder %v2331, 0.7853982
  %vm2333 = vcmp.lt.s32.totalorder %v143, 0
  %v2334 = vand.u32 %v143, 2139095040
  %v2335 = vshrl.u32 %v2334, 23
  %v2336 = vsub.s32 %v2335, 127
  %v2337 = vand.u32 2147483647, %v143
  %v2338 = vand.u32 %v2337, 8388607
  %v2339 = vor.u32 %v2338, 8388608
  %v2340 = vsub.s32 0, %v2339
  %v2341 = vadd.s32 %v2336, 1
  %vm2342 = vcmp.gt.s32.totalorder %v2341, 0
  %v2343 = vsel %vm2342, %v2341, 0
  %v2344 = vshrl.u32 %v2343, 5
  %v2345 = vand.u32 %v2343, 31
  %v2346 = vsub.s32 32, %v2345
  %v2347 = vshrl.u32 683565275, %v2346
  %v2348 = vshll.u32 683565275, %v2345
  %v2349 = vshrl.u32 2475754826, %v2346
  %v2350 = vor.u32 %v2348, %v2349
  %v2351 = vshll.u32 2475754826, %v2345
  %v2352 = vshrl.u32 2131351028, %v2346
  %v2353 = vor.u32 %v2351, %v2352
  %v2354 = vshll.u32 2131351028, %v2345
  %v2355 = vshrl.u32 2102212464, %v2346
  %v2356 = vor.u32 %v2354, %v2355
  %v2357 = vshll.u32 2102212464, %v2345
  %v2358 = vshrl.u32 920167782, %v2346
  %v2359 = vor.u32 %v2357, %v2358
  %v2360 = vshll.u32 920167782, %v2345
  %v2361 = vshrl.u32 1326507024, %v2346
  %v2362 = vor.u32 %v2360, %v2361
  %vm2363 = vcmp.lt.s32.totalorder %v2344, 1
  %vm2364 = vcmp.lt.s32.totalorder %v2344, 2
  %vm2365 = vcmp.lt.s32.totalorder %v2344, 3
  %vm2366 = vcmp.lt.s32.totalorder %v2344, 4
  %v2367 = vsel %vm2363, %v2347, %v2350
  %v2368 = vsel %vm2366, %v2356, 2102212464
  %v2369 = vsel %vm2365, %v2353, %v2368
  %v2370 = vsel %vm2364, %v2367, %v2369
  %v2371 = vsel %vm2363, %v2350, %v2353
  %v2372 = vsel %vm2366, %v2359, 920167782
  %v2373 = vsel %vm2365, %v2356, %v2372
  %v2374 = vsel %vm2364, %v2371, %v2373
  %v2375 = vsel %vm2363, %v2353, %v2356
  %v2376 = vsel %vm2366, %v2362, 1326507024
  %v2377 = vsel %vm2365, %v2359, %v2376
  %v2378 = vsel %vm2364, %v2375, %v2377
  %v2379 = vshll.u32 %v2339, 8
  %v2380 = vand.u32 %v2379, 65535
  %v2381 = vshrl.u32 %v2379, 16
  %v2382 = vand.u32 %v2378, 65535
  %v2383 = vshrl.u32 %v2378, 16
  %v2384 = vmul.u32 %v2380, %v2382
  %v2385 = vmul.u32 %v2380, %v2383
  %v2386 = vmul.u32 %v2381, %v2382
  %v2387 = vmul.u32 %v2381, %v2383
  %v2388 = vshll.u32 %v2385, 16
  %v2389 = vshrl.u32 %v2385, 16
  %v2390 = vshll.u32 %v2386, 16
  %v2391 = vshrl.u32 %v2386, 16
  %vm2392 = vc.u32 %v2384, %v2388
  %v2393 = vsel %vm2392, 1, 0
  %v2394 = vadd.s32 %v2384, %v2388
  %v2395 = vadd.s32 %v2387, %v2393
  %vm2396 = vc.u32 %v2394, %v2390
  %v2397 = vsel %vm2396, 1, 0
  %v2398 = vadd.s32 %v2394, %v2390
  %v2399 = vadd.s32 %v2395, %v2397
  %v2400 = vadd.s32 %v2399, %v2389
  %v2401 = vadd.s32 %v2400, %v2391
  %v2402 = vand.u32 %v2379, 65535
  %v2403 = vshrl.u32 %v2379, 16
  %v2404 = vand.u32 %v2374, 65535
  %v2405 = vshrl.u32 %v2374, 16
  %v2406 = vmul.u32 %v2402, %v2404
  %v2407 = vmul.u32 %v2402, %v2405
  %v2408 = vmul.u32 %v2403, %v2404
  %v2409 = vmul.u32 %v2403, %v2405
  %v2410 = vshll.u32 %v2407, 16
  %v2411 = vshrl.u32 %v2407, 16
  %v2412 = vshll.u32 %v2408, 16
  %v2413 = vshrl.u32 %v2408, 16
  %vm2414 = vc.u32 %v2406, %v2410
  %v2415 = vsel %vm2414, 1, 0
  %v2416 = vadd.s32 %v2406, %v2410
  %v2417 = vadd.s32 %v2409, %v2415
  %vm2418 = vc.u32 %v2416, %v2412
  %v2419 = vsel %vm2418, 1, 0
  %v2420 = vadd.s32 %v2416, %v2412
  %v2421 = vadd.s32 %v2417, %v2419
  %v2422 = vadd.s32 %v2421, %v2411
  %v2423 = vadd.s32 %v2422, %v2413
  %v2424 = vmul.u32 %v2379, %v2370
  %v2425 = vadd.s32 %v2401, %v2420
  %vm2426 = vc.u32 %v2401, %v2420
  %v2427 = vadd.s32 %v2423, 1
  %v2428 = vsel %vm2426, %v2427, %v2423
  %v2429 = vadd.s32 %v2424, %v2428
  %v2430 = vadd.s32 %v2429, 536870912
  %v2431 = vshrl.u32 %v2430, 30
  %v2432 = vshll.u32 %v2431, 30
  %v2433 = vsub.s32 %v2429, %v2432
  %vm2434 = vcmp.lt.s32.totalorder %v2433, 0
  %v2435 = vsub.s32 0, %v2433
  %v2436 = vsel %vm2434, %v2435, %v2433
  %v2437 = vclz %v2436
  %v2438 = vsub.s32 %v2437, 2
  %vm2439 = vcmp.gt.s32.totalorder 0, %v2438
  %v2440 = vsel %vm2439, 0, %v2438
  %v2441 = vsub.s32 32, %v2440
  %v2442 = vshll.u32 %v2433, %v2440
  %v2443 = vshrl.u32 %v2425, %v2441
  %v2444 = vor.u32 %v2442, %v2443
  %v2445 = vsub.s32 4294967266, %v2440
  %v2446 = vadd.s32 %v2445, 127
  %v2447 = vshll.u32 %v2446, 23
  %v2448 = vor.u32 4788187, %v2447
  %v2449 = vand.u32 2147483647, %v2448
  %v2451 = vcvt.s32.f32 %v2444
  %v2452 = vmul.f32 %v2451, %v2449
  %v2453 = vxor.u32 %v2452, 2147483648
  %v2454 = vsel %vm2333, %v2453, %v2452
  %v2455 = vsub.s32 4, %v2431
  %v2456 = vsel %vm2333, %v2455, %v2431
  %v2457 = vsel %vm2332, %v143, %v2454
  %v2458 = vsel %vm2332, 0, %v2456
  %v2459 = vmul.f32 %v2457, %v2457
  %v2460 = vmul.f32 %v2459, -0.001358992
  %v2461 = vadd.f32 %v2460, 0.041655596
  %v2462 = vmul.f32 %v2459, %v2461
  %v2463 = vadd.f32 %v2462, -0.4999988
  %v2464 = vmul.f32 %v2459, %v2463
  %v2465 = vadd.f32 1.0, %v2464
  %v2466 = vmul.f32 %v2457, %v2457
  %v2467 = vmul.f32 %v2466, -0.00019511016
  %v2468 = vadd.f32 %v2467, 0.008332121
  %v2469 = vmul.f32 %v2466, %v2468
  %v2470 = vadd.f32 %v2469, -0.16666654
  %v2471 = vmul.f32 %v2466, %v2470
  %v2472 = vadd.f32 %v2471, 1.0
  %v2473 = vmul.f32 %v2472, %v2457
  %vm2474 = vweird.f32 %v143
  %v2475 = vadd.s32 %v2458, 3
  %v2476 = vand.u32 %v2475, 3
  %vm2477 = vcmp.lt.s32.totalorder %v2476, 2
  %vm2478 = vcmp.eq.s32.totalorder %v2476, 0
  %v2479 = vxor.u32 %v2473, 2147483648
  %v2480 = vsel %vm2478, %v2465, %v2479
  %vm2481 = vcmp.eq.s32.totalorder %v2476, 2
  %v2482 = vxor.u32 %v2465, 2147483648
  %v2483 = vsel %vm2481, %v2482, %v2473
  %v2484 = vsel %vm2477, %v2480, %v2483
  %v2485 = vsel %vm2474, nan, %v2484
  %v2486 = vand.u32 2147483647, %v144
  %vm2487 = vcmp.le.f32.partialorder %v2486, 0.7853982
  %vm2488 = vcmp.lt.s32.totalorder %v144, 0
  %v2489 = vand.u32 %v144, 2139095040
  %v2490 = vshrl.u32 %v2489, 23
  %v2491 = vsub.s32 %v2490, 127
  %v2492 = vand.u32 2147483647, %v144
  %v2493 = vand.u32 %v2492, 8388607
  %v2494 = vor.u32 %v2493, 8388608
  %v2495 = vsub.s32 0, %v2494
  %v2496 = vadd.s32 %v2491, 1
  %vm2497 = vcmp.gt.s32.totalorder %v2496, 0
  %v2498 = vsel %vm2497, %v2496, 0
  %v2499 = vshrl.u32 %v2498, 5
  %v2500 = vand.u32 %v2498, 31
  %v2501 = vsub.s32 32, %v2500
  %v2502 = vshrl.u32 683565275, %v2501
  %v2503 = vshll.u32 683565275, %v2500
  %v2504 = vshrl.u32 2475754826, %v2501
  %v2505 = vor.u32 %v2503, %v2504
  %v2506 = vshll.u32 2475754826, %v2500
  %v2507 = vshrl.u32 2131351028, %v2501
  %v2508 = vor.u32 %v2506, %v2507
  %v2509 = vshll.u32 2131351028, %v2500
  %v2510 = vshrl.u32 2102212464, %v2501
  %v2511 = vor.u32 %v2509, %v2510
  %v2512 = vshll.u32 2102212464, %v2500
  %v2513 = vshrl.u32 920167782, %v2501
  %v2514 = vor.u32 %v2512, %v2513
  %v2515 = vshll.u32 920167782, %v2500
  %v2516 = vshrl.u32 1326507024, %v2501
  %v2517 = vor.u32 %v2515, %v2516
  %vm2518 = vcmp.lt.s32.totalorder %v2499, 1
  %vm2519 = vcmp.lt.s32.totalorder %v2499, 2
  %vm2520 = vcmp.lt.s32.totalorder %v2499, 3
  %vm2521 = vcmp.lt.s32.totalorder %v2499, 4
  %v2522 = vsel %vm2518, %v2502, %v2505
  %v2523 = vsel %vm2521, %v2511, 2102212464
  %v2524 = vsel %vm2520, %v2508, %v2523
  %v2525 = vsel %vm2519, %v2522, %v2524
  %v2526 = vsel %vm2518, %v2505, %v2508
  %v2527 = vsel %vm2521, %v2514, 920167782
  %v2528 = vsel %vm2520, %v2511, %v2527
  %v2529 = vsel %vm2519, %v2526, %v2528
  %v2530 = vsel %vm2518, %v2508, %v2511
  %v2531 = vsel %vm2521, %v2517, 1326507024
  %v2532 = vsel %vm2520, %v2514, %v2531
  %v2533 = vsel %vm2519, %v2530, %v2532
  %v2534 = vshll.u32 %v2494, 8
  %v2535 = vand.u32 %v2534, 65535
  %v2536 = vshrl.u32 %v2534, 16
  %v2537 = vand.u32 %v2533, 65535
  %v2538 = vshrl.u32 %v2533, 16
  %v2539 = vmul.u32 %v2535, %v2537
  %v2540 = vmul.u32 %v2535, %v2538
  %v2541 = vmul.u32 %v2536, %v2537
  %v2542 = vmul.u32 %v2536, %v2538
  %v2543 = vshll.u32 %v2540, 16
  %v2544 = vshrl.u32 %v2540, 16
  %v2545 = vshll.u32 %v2541, 16
  %v2546 = vshrl.u32 %v2541, 16
  %vm2547 = vc.u32 %v2539, %v2543
  %v2548 = vsel %vm2547, 1, 0
  %v2549 = vadd.s32 %v2539, %v2543
  %v2550 = vadd.s32 %v2542, %v2548
  %vm2551 = vc.u32 %v2549, %v2545
  %v2552 = vsel %vm2551, 1, 0
  %v2553 = vadd.s32 %v2549, %v2545
  %v2554 = vadd.s32 %v2550, %v2552
  %v2555 = vadd.s32 %v2554, %v2544
  %v2556 = vadd.s32 %v2555, %v2546
  %v2557 = vand.u32 %v2534, 65535
  %v2558 = vshrl.u32 %v2534, 16
  %v2559 = vand.u32 %v2529, 65535
  %v2560 = vshrl.u32 %v2529, 16
  %v2561 = vmul.u32 %v2557, %v2559
  %v2562 = vmul.u32 %v2557, %v2560
  %v2563 = vmul.u32 %v2558, %v2559
  %v2564 = vmul.u32 %v2558, %v2560
  %v2565 = vshll.u32 %v2562, 16
  %v2566 = vshrl.u32 %v2562, 16
  %v2567 = vshll.u32 %v2563, 16
  %v2568 = vshrl.u32 %v2563, 16
  %vm2569 = vc.u32 %v2561, %v2565
  %v2570 = vsel %vm2569, 1, 0
  %v2571 = vadd.s32 %v2561, %v2565
  %v2572 = vadd.s32 %v2564, %v2570
  %vm2573 = vc.u32 %v2571, %v2567
  %v2574 = vsel %vm2573, 1, 0
  %v2575 = vadd.s32 %v2571, %v2567
  %v2576 = vadd.s32 %v2572, %v2574
  %v2577 = vadd.s32 %v2576, %v2566
  %v2578 = vadd.s32 %v2577, %v2568
  %v2579 = vmul.u32 %v2534, %v2525
  %v2580 = vadd.s32 %v2556, %v2575
  %vm2581 = vc.u32 %v2556, %v2575
  %v2582 = vadd.s32 %v2578, 1
  %v2583 = vsel %vm2581, %v2582, %v2578
  %v2584 = vadd.s32 %v2579, %v2583
  %v2585 = vadd.s32 %v2584, 536870912
  %v2586 = vshrl.u32 %v2585, 30
  %v2587 = vshll.u32 %v2586, 30
  %v2588 = vsub.s32 %v2584, %v2587
  %vm2589 = vcmp.lt.s32.totalorder %v2588, 0
  %v2590 = vsub.s32 0, %v2588
  %v2591 = vsel %vm2589, %v2590, %v2588
  %v2592 = vclz %v2591
  %v2593 = vsub.s32 %v2592, 2
  %vm2594 = vcmp.gt.s32.totalorder 0, %v2593
  %v2595 = vsel %vm2594, 0, %v2593
  %v2596 = vsub.s32 32, %v2595
  %v2597 = vshll.u32 %v2588, %v2595
  %v2598 = vshrl.u32 %v2580, %v2596
  %v2599 = vor.u32 %v2597, %v2598
  %v2600 = vsub.s32 4294967266, %v2595
  %v2601 = vadd.s32 %v2600, 127
  %v2602 = vshll.u32 %v2601, 23
  %v2603 = vor.u32 4788187, %v2602
  %v2604 = vand.u32 2147483647, %v2603
  %v2606 = vcvt.s32.f32 %v2599
  %v2607 = vmul.f32 %v2606, %v2604
  %v2608 = vxor.u32 %v2607, 2147483648
  %v2609 = vsel %vm2488, %v2608, %v2607
  %v2610 = vsub.s32 4, %v2586
  %v2611 = vsel %vm2488, %v2610, %v2586
  %v2612 = vsel %vm2487, %v144, %v2609
  %v2613 = vsel %vm2487, 0, %v2611
  %v2614 = vmul.f32 %v2612, %v2612
  %v2615 = vmul.f32 %v2614, -0.001358992
  %v2616 = vadd.f32 %v2615, 0.041655596
  %v2617 = vmul.f32 %v2614, %v2616
  %v2618 = vadd.f32 %v2617, -0.4999988
  %v2619 = vmul.f32 %v2614, %v2618
  %v2620 = vadd.f32 1.0, %v2619
  %v2621 = vmul.f32 %v2612, %v2612
  %v2622 = vmul.f32 %v2621, -0.00019511016
  %v2623 = vadd.f32 %v2622, 0.008332121
  %v2624 = vmul.f32 %v2621, %v2623
  %v2625 = vadd.f32 %v2624, -0.16666654
  %v2626 = vmul.f32 %v2621, %v2625
  %v2627 = vadd.f32 %v2626, 1.0
  %v2628 = vmul.f32 %v2627, %v2612
  %vm2629 = vweird.f32 %v144
  %v2630 = vadd.s32 %v2613, 3
  %v2631 = vand.u32 %v2630, 3
  %vm2632 = vcmp.lt.s32.totalorder %v2631, 2
  %vm2633 = vcmp.eq.s32.totalorder %v2631, 0
  %v2634 = vxor.u32 %v2628, 2147483648
  %v2635 = vsel %vm2633, %v2620, %v2634
  %vm2636 = vcmp.eq.s32.totalorder %v2631, 2
  %v2637 = vxor.u32 %v2620, 2147483648
  %v2638 = vsel %vm2636, %v2637, %v2628
  %v2639 = vsel %vm2632, %v2635, %v2638
  %v2640 = vsel %vm2629, nan, %v2639
  %v2641 = vand.u32 2147483647, %v145
  %vm2642 = vcmp.le.f32.partialorder %v2641, 0.7853982
  %vm2643 = vcmp.lt.s32.totalorder %v145, 0
  %v2644 = vand.u32 %v145, 2139095040
  %v2645 = vshrl.u32 %v2644, 23
  %v2646 = vsub.s32 %v2645, 127
  %v2647 = vand.u32 2147483647, %v145
  %v2648 = vand.u32 %v2647, 8388607
  %v2649 = vor.u32 %v2648, 8388608
  %v2650 = vsub.s32 0, %v2649
  %v2651 = vadd.s32 %v2646, 1
  %vm2652 = vcmp.gt.s32.totalorder %v2651, 0
  %v2653 = vsel %vm2652, %v2651, 0
  %v2654 = vshrl.u32 %v2653, 5
  %v2655 = vand.u32 %v2653, 31
  %v2656 = vsub.s32 32, %v2655
  %v2657 = vshrl.u32 683565275, %v2656
  %v2658 = vshll.u32 683565275, %v2655
  %v2659 = vshrl.u32 2475754826, %v2656
  %v2660 = vor.u32 %v2658, %v2659
  %v2661 = vshll.u32 2475754826, %v2655
  %v2662 = vshrl.u32 2131351028, %v2656
  %v2663 = vor.u32 %v2661, %v2662
  %v2664 = vshll.u32 2131351028, %v2655
  %v2665 = vshrl.u32 2102212464, %v2656
  %v2666 = vor.u32 %v2664, %v2665
  %v2667 = vshll.u32 2102212464, %v2655
  %v2668 = vshrl.u32 920167782, %v2656
  %v2669 = vor.u32 %v2667, %v2668
  %v2670 = vshll.u32 920167782, %v2655
  %v2671 = vshrl.u32 1326507024, %v2656
  %v2672 = vor.u32 %v2670, %v2671
  %vm2673 = vcmp.lt.s32.totalorder %v2654, 1
  %vm2674 = vcmp.lt.s32.totalorder %v2654, 2
  %vm2675 = vcmp.lt.s32.totalorder %v2654, 3
  %vm2676 = vcmp.lt.s32.totalorder %v2654, 4
  %v2677 = vsel %vm2673, %v2657, %v2660
  %v2678 = vsel %vm2676, %v2666, 2102212464
  %v2679 = vsel %vm2675, %v2663, %v2678
  %v2680 = vsel %vm2674, %v2677, %v2679
  %v2681 = vsel %vm2673, %v2660, %v2663
  %v2682 = vsel %vm2676, %v2669, 920167782
  %v2683 = vsel %vm2675, %v2666, %v2682
  %v2684 = vsel %vm2674, %v2681, %v2683
  %v2685 = vsel %vm2673, %v2663, %v2666
  %v2686 = vsel %vm2676, %v2672, 1326507024
  %v2687 = vsel %vm2675, %v2669, %v2686
  %v2688 = vsel %vm2674, %v2685, %v2687
  %v2689 = vshll.u32 %v2649, 8
  %v2690 = vand.u32 %v2689, 65535
  %v2691 = vshrl.u32 %v2689, 16
  %v2692 = vand.u32 %v2688, 65535
  %v2693 = vshrl.u32 %v2688, 16
  %v2694 = vmul.u32 %v2690, %v2692
  %v2695 = vmul.u32 %v2690, %v2693
  %v2696 = vmul.u32 %v2691, %v2692
  %v2697 = vmul.u32 %v2691, %v2693
  %v2698 = vshll.u32 %v2695, 16
  %v2699 = vshrl.u32 %v2695, 16
  %v2700 = vshll.u32 %v2696, 16
  %v2701 = vshrl.u32 %v2696, 16
  %vm2702 = vc.u32 %v2694, %v2698
  %v2703 = vsel %vm2702, 1, 0
  %v2704 = vadd.s32 %v2694, %v2698
  %v2705 = vadd.s32 %v2697, %v2703
  %vm2706 = vc.u32 %v2704, %v2700
  %v2707 = vsel %vm2706, 1, 0
  %v2708 = vadd.s32 %v2704, %v2700
  %v2709 = vadd.s32 %v2705, %v2707
  %v2710 = vadd.s32 %v2709, %v2699
  %v2711 = vadd.s32 %v2710, %v2701
  %v2712 = vand.u32 %v2689, 65535
  %v2713 = vshrl.u32 %v2689, 16
  %v2714 = vand.u32 %v2684, 65535
  %v2715 = vshrl.u32 %v2684, 16
  %v2716 = vmul.u32 %v2712, %v2714
  %v2717 = vmul.u32 %v2712, %v2715
  %v2718 = vmul.u32 %v2713, %v2714
  %v2719 = vmul.u32 %v2713, %v2715
  %v2720 = vshll.u32 %v2717, 16
  %v2721 = vshrl.u32 %v2717, 16
  %v2722 = vshll.u32 %v2718, 16
  %v2723 = vshrl.u32 %v2718, 16
  %vm2724 = vc.u32 %v2716, %v2720
  %v2725 = vsel %vm2724, 1, 0
  %v2726 = vadd.s32 %v2716, %v2720
  %v2727 = vadd.s32 %v2719, %v2725
  %vm2728 = vc.u32 %v2726, %v2722
  %v2729 = vsel %vm2728, 1, 0
  %v2730 = vadd.s32 %v2726, %v2722
  %v2731 = vadd.s32 %v2727, %v2729
  %v2732 = vadd.s32 %v2731, %v2721
  %v2733 = vadd.s32 %v2732, %v2723
  %v2734 = vmul.u32 %v2689, %v2680
  %v2735 = vadd.s32 %v2711, %v2730
  %vm2736 = vc.u32 %v2711, %v2730
  %v2737 = vadd.s32 %v2733, 1
  %v2738 = vsel %vm2736, %v2737, %v2733
  %v2739 = vadd.s32 %v2734, %v2738
  %v2740 = vadd.s32 %v2739, 536870912
  %v2741 = vshrl.u32 %v2740, 30
  %v2742 = vshll.u32 %v2741, 30
  %v2743 = vsub.s32 %v2739, %v2742
  %vm2744 = vcmp.lt.s32.totalorder %v2743, 0
  %v2745 = vsub.s32 0, %v2743
  %v2746 = vsel %vm2744, %v2745, %v2743
  %v2747 = vclz %v2746
  %v2748 = vsub.s32 %v2747, 2
  %vm2749 = vcmp.gt.s32.totalorder 0, %v2748
  %v2750 = vsel %vm2749, 0, %v2748
  %v2751 = vsub.s32 32, %v2750
  %v2752 = vshll.u32 %v2743, %v2750
  %v2753 = vshrl.u32 %v2735, %v2751
  %v2754 = vor.u32 %v2752, %v2753
  %v2755 = vsub.s32 4294967266, %v2750
  %v2756 = vadd.s32 %v2755, 127
  %v2757 = vshll.u32 %v2756, 23
  %v2758 = vor.u32 4788187, %v2757
  %v2759 = vand.u32 2147483647, %v2758
  %v2761 = vcvt.s32.f32 %v2754
  %v2762 = vmul.f32 %v2761, %v2759
  %v2763 = vxor.u32 %v2762, 2147483648
  %v2764 = vsel %vm2643, %v2763, %v2762
  %v2765 = vsub.s32 4, %v2741
  %v2766 = vsel %vm2643, %v2765, %v2741
  %v2767 = vsel %vm2642, %v145, %v2764
  %v2768 = vsel %vm2642, 0, %v2766
  %v2769 = vmul.f32 %v2767, %v2767
  %v2770 = vmul.f32 %v2769, -0.001358992
  %v2771 = vadd.f32 %v2770, 0.041655596
  %v2772 = vmul.f32 %v2769, %v2771
  %v2773 = vadd.f32 %v2772, -0.4999988
  %v2774 = vmul.f32 %v2769, %v2773
  %v2775 = vadd.f32 1.0, %v2774
  %v2776 = vmul.f32 %v2767, %v2767
  %v2777 = vmul.f32 %v2776, -0.00019511016
  %v2778 = vadd.f32 %v2777, 0.008332121
  %v2779 = vmul.f32 %v2776, %v2778
  %v2780 = vadd.f32 %v2779, -0.16666654
  %v2781 = vmul.f32 %v2776, %v2780
  %v2782 = vadd.f32 %v2781, 1.0
  %v2783 = vmul.f32 %v2782, %v2767
  %vm2784 = vweird.f32 %v145
  %v2785 = vadd.s32 %v2768, 3
  %v2786 = vand.u32 %v2785, 3
  %vm2787 = vcmp.lt.s32.totalorder %v2786, 2
  %vm2788 = vcmp.eq.s32.totalorder %v2786, 0
  %v2789 = vxor.u32 %v2783, 2147483648
  %v2790 = vsel %vm2788, %v2775, %v2789
  %vm2791 = vcmp.eq.s32.totalorder %v2786, 2
  %v2792 = vxor.u32 %v2775, 2147483648
  %v2793 = vsel %vm2791, %v2792, %v2783
  %v2794 = vsel %vm2787, %v2790, %v2793
  %v2795 = vsel %vm2784, nan, %v2794
  %v2796 = vand.u32 2147483647, %v146
  %vm2797 = vcmp.le.f32.partialorder %v2796, 0.7853982
  %vm2798 = vcmp.lt.s32.totalorder %v146, 0
  %v2799 = vand.u32 %v146, 2139095040
  %v2800 = vshrl.u32 %v2799, 23
  %v2801 = vsub.s32 %v2800, 127
  %v2802 = vand.u32 2147483647, %v146
  %v2803 = vand.u32 %v2802, 8388607
  %v2804 = vor.u32 %v2803, 8388608
  %v2805 = vsub.s32 0, %v2804
  %v2806 = vadd.s32 %v2801, 1
  %vm2807 = vcmp.gt.s32.totalorder %v2806, 0
  %v2808 = vsel %vm2807, %v2806, 0
  %v2809 = vshrl.u32 %v2808, 5
  %v2810 = vand.u32 %v2808, 31
  %v2811 = vsub.s32 32, %v2810
  %v2812 = vshrl.u32 683565275, %v2811
  %v2813 = vshll.u32 683565275, %v2810
  %v2814 = vshrl.u32 2475754826, %v2811
  %v2815 = vor.u32 %v2813, %v2814
  %v2816 = vshll.u32 2475754826, %v2810
  %v2817 = vshrl.u32 2131351028, %v2811
  %v2818 = vor.u32 %v2816, %v2817
  %v2819 = vshll.u32 2131351028, %v2810
  %v2820 = vshrl.u32 2102212464, %v2811
  %v2821 = vor.u32 %v2819, %v2820
  %v2822 = vshll.u32 2102212464, %v2810
  %v2823 = vshrl.u32 920167782, %v2811
  %v2824 = vor.u32 %v2822, %v2823
  %v2825 = vshll.u32 920167782, %v2810
  %v2826 = vshrl.u32 1326507024, %v2811
  %v2827 = vor.u32 %v2825, %v2826
  %vm2828 = vcmp.lt.s32.totalorder %v2809, 1
  %vm2829 = vcmp.lt.s32.totalorder %v2809, 2
  %vm2830 = vcmp.lt.s32.totalorder %v2809, 3
  %vm2831 = vcmp.lt.s32.totalorder %v2809, 4
  %v2832 = vsel %vm2828, %v2812, %v2815
  %v2833 = vsel %vm2831, %v2821, 2102212464
  %v2834 = vsel %vm2830, %v2818, %v2833
  %v2835 = vsel %vm2829, %v2832, %v2834
  %v2836 = vsel %vm2828, %v2815, %v2818
  %v2837 = vsel %vm2831, %v2824, 920167782
  %v2838 = vsel %vm2830, %v2821, %v2837
  %v2839 = vsel %vm2829, %v2836, %v2838
  %v2840 = vsel %vm2828, %v2818, %v2821
  %v2841 = vsel %vm2831, %v2827, 1326507024
  %v2842 = vsel %vm2830, %v2824, %v2841
  %v2843 = vsel %vm2829, %v2840, %v2842
  %v2844 = vshll.u32 %v2804, 8
  %v2845 = vand.u32 %v2844, 65535
  %v2846 = vshrl.u32 %v2844, 16
  %v2847 = vand.u32 %v2843, 65535
  %v2848 = vshrl.u32 %v2843, 16
  %v2849 = vmul.u32 %v2845, %v2847
  %v2850 = vmul.u32 %v2845, %v2848
  %v2851 = vmul.u32 %v2846, %v2847
  %v2852 = vmul.u32 %v2846, %v2848
  %v2853 = vshll.u32 %v2850, 16
  %v2854 = vshrl.u32 %v2850, 16
  %v2855 = vshll.u32 %v2851, 16
  %v2856 = vshrl.u32 %v2851, 16
  %vm2857 = vc.u32 %v2849, %v2853
  %v2858 = vsel %vm2857, 1, 0
  %v2859 = vadd.s32 %v2849, %v2853
  %v2860 = vadd.s32 %v2852, %v2858
  %vm2861 = vc.u32 %v2859, %v2855
  %v2862 = vsel %vm2861, 1, 0
  %v2863 = vadd.s32 %v2859, %v2855
  %v2864 = vadd.s32 %v2860, %v2862
  %v2865 = vadd.s32 %v2864, %v2854
  %v2866 = vadd.s32 %v2865, %v2856
  %v2867 = vand.u32 %v2844, 65535
  %v2868 = vshrl.u32 %v2844, 16
  %v2869 = vand.u32 %v2839, 65535
  %v2870 = vshrl.u32 %v2839, 16
  %v2871 = vmul.u32 %v2867, %v2869
  %v2872 = vmul.u32 %v2867, %v2870
  %v2873 = vmul.u32 %v2868, %v2869
  %v2874 = vmul.u32 %v2868, %v2870
  %v2875 = vshll.u32 %v2872, 16
  %v2876 = vshrl.u32 %v2872, 16
  %v2877 = vshll.u32 %v2873, 16
  %v2878 = vshrl.u32 %v2873, 16
  %vm2879 = vc.u32 %v2871, %v2875
  %v2880 = vsel %vm2879, 1, 0
  %v2881 = vadd.s32 %v2871, %v2875
  %v2882 = vadd.s32 %v2874, %v2880
  %vm2883 = vc.u32 %v2881, %v2877
  %v2884 = vsel %vm2883, 1, 0
  %v2885 = vadd.s32 %v2881, %v2877
  %v2886 = vadd.s32 %v2882, %v2884
  %v2887 = vadd.s32 %v2886, %v2876
  %v2888 = vadd.s32 %v2887, %v2878
  %v2889 = vmul.u32 %v2844, %v2835
  %v2890 = vadd.s32 %v2866, %v2885
  %vm2891 = vc.u32 %v2866, %v2885
  %v2892 = vadd.s32 %v2888, 1
  %v2893 = vsel %vm2891, %v2892, %v2888
  %v2894 = vadd.s32 %v2889, %v2893
  %v2895 = vadd.s32 %v2894, 536870912
  %v2896 = vshrl.u32 %v2895, 30
  %v2897 = vshll.u32 %v2896, 30
  %v2898 = vsub.s32 %v2894, %v2897
  %vm2899 = vcmp.lt.s32.totalorder %v2898, 0
  %v2900 = vsub.s32 0, %v2898
  %v2901 = vsel %vm2899, %v2900, %v2898
  %v2902 = vclz %v2901
  %v2903 = vsub.s32 %v2902, 2
  %vm2904 = vcmp.gt.s32.totalorder 0, %v2903
  %v2905 = vsel %vm2904, 0, %v2903
  %v2906 = vsub.s32 32, %v2905
  %v2907 = vshll.u32 %v2898, %v2905
  %v2908 = vshrl.u32 %v2890, %v2906
  %v2909 = vor.u32 %v2907, %v2908
  %v2910 = vsub.s32 4294967266, %v2905
  %v2911 = vadd.s32 %v2910, 127
  %v2912 = vshll.u32 %v2911, 23
  %v2913 = vor.u32 4788187, %v2912
  %v2914 = vand.u32 2147483647, %v2913
  %v2916 = vcvt.s32.f32 %v2909
  %v2917 = vmul.f32 %v2916, %v2914
  %v2918 = vxor.u32 %v2917, 2147483648
  %v2919 = vsel %vm2798, %v2918, %v2917
  %v2920 = vsub.s32 4, %v2896
  %v2921 = vsel %vm2798, %v2920, %v2896
  %v2922 = vsel %vm2797, %v146, %v2919
  %v2923 = vsel %vm2797, 0, %v2921
  %v2924 = vmul.f32 %v2922, %v2922
  %v2925 = vmul.f32 %v2924, -0.001358992
  %v2926 = vadd.f32 %v2925, 0.041655596
  %v2927 = vmul.f32 %v2924, %v2926
  %v2928 = vadd.f32 %v2927, -0.4999988
  %v2929 = vmul.f32 %v2924, %v2928
  %v2930 = vadd.f32 1.0, %v2929
  %v2931 = vmul.f32 %v2922, %v2922
  %v2932 = vmul.f32 %v2931, -0.00019511016
  %v2933 = vadd.f32 %v2932, 0.008332121
  %v2934 = vmul.f32 %v2931, %v2933
  %v2935 = vadd.f32 %v2934, -0.16666654
  %v2936 = vmul.f32 %v2931, %v2935
  %v2937 = vadd.f32 %v2936, 1.0
  %v2938 = vmul.f32 %v2937, %v2922
  %vm2939 = vweird.f32 %v146
  %v2940 = vadd.s32 %v2923, 3
  %v2941 = vand.u32 %v2940, 3
  %vm2942 = vcmp.lt.s32.totalorder %v2941, 2
  %vm2943 = vcmp.eq.s32.totalorder %v2941, 0
  %v2944 = vxor.u32 %v2938, 2147483648
  %v2945 = vsel %vm2943, %v2930, %v2944
  %vm2946 = vcmp.eq.s32.totalorder %v2941, 2
  %v2947 = vxor.u32 %v2930, 2147483648
  %v2948 = vsel %vm2946, %v2947, %v2938
  %v2949 = vsel %vm2942, %v2945, %v2948
  %v2950 = vsel %vm2939, nan, %v2949
  %v2951 = vand.u32 2147483647, %v147
  %vm2952 = vcmp.le.f32.partialorder %v2951, 0.7853982
  %vm2953 = vcmp.lt.s32.totalorder %v147, 0
  %v2954 = vand.u32 %v147, 2139095040
  %v2955 = vshrl.u32 %v2954, 23
  %v2956 = vsub.s32 %v2955, 127
  %v2957 = vand.u32 2147483647, %v147
  %v2958 = vand.u32 %v2957, 8388607
  %v2959 = vor.u32 %v2958, 8388608
  %v2960 = vsub.s32 0, %v2959
  %v2961 = vadd.s32 %v2956, 1
  %vm2962 = vcmp.gt.s32.totalorder %v2961, 0
  %v2963 = vsel %vm2962, %v2961, 0
  %v2964 = vshrl.u32 %v2963, 5
  %v2965 = vand.u32 %v2963, 31
  %v2966 = vsub.s32 32, %v2965
  %v2967 = vshrl.u32 683565275, %v2966
  %v2968 = vshll.u32 683565275, %v2965
  %v2969 = vshrl.u32 2475754826, %v2966
  %v2970 = vor.u32 %v2968, %v2969
  %v2971 = vshll.u32 2475754826, %v2965
  %v2972 = vshrl.u32 2131351028, %v2966
  %v2973 = vor.u32 %v2971, %v2972
  %v2974 = vshll.u32 2131351028, %v2965
  %v2975 = vshrl.u32 2102212464, %v2966
  %v2976 = vor.u32 %v2974, %v2975
  %v2977 = vshll.u32 2102212464, %v2965
  %v2978 = vshrl.u32 920167782, %v2966
  %v2979 = vor.u32 %v2977, %v2978
  %v2980 = vshll.u32 920167782, %v2965
  %v2981 = vshrl.u32 1326507024, %v2966
  %v2982 = vor.u32 %v2980, %v2981
  %vm2983 = vcmp.lt.s32.totalorder %v2964, 1
  %vm2984 = vcmp.lt.s32.totalorder %v2964, 2
  %vm2985 = vcmp.lt.s32.totalorder %v2964, 3
  %vm2986 = vcmp.lt.s32.totalorder %v2964, 4
  %v2987 = vsel %vm2983, %v2967, %v2970
  %v2988 = vsel %vm2986, %v2976, 2102212464
  %v2989 = vsel %vm2985, %v2973, %v2988
  %v2990 = vsel %vm2984, %v2987, %v2989
  %v2991 = vsel %vm2983, %v2970, %v2973
  %v2992 = vsel %vm2986, %v2979, 920167782
  %v2993 = vsel %vm2985, %v2976, %v2992
  %v2994 = vsel %vm2984, %v2991, %v2993
  %v2995 = vsel %vm2983, %v2973, %v2976
  %v2996 = vsel %vm2986, %v2982, 1326507024
  %v2997 = vsel %vm2985, %v2979, %v2996
  %v2998 = vsel %vm2984, %v2995, %v2997
  %v2999 = vshll.u32 %v2959, 8
  %v3000 = vand.u32 %v2999, 65535
  %v3001 = vshrl.u32 %v2999, 16
  %v3002 = vand.u32 %v2998, 65535
  %v3003 = vshrl.u32 %v2998, 16
  %v3004 = vmul.u32 %v3000, %v3002
  %v3005 = vmul.u32 %v3000, %v3003
  %v3006 = vmul.u32 %v3001, %v3002
  %v3007 = vmul.u32 %v3001, %v3003
  %v3008 = vshll.u32 %v3005, 16
  %v3009 = vshrl.u32 %v3005, 16
  %v3010 = vshll.u32 %v3006, 16
  %v3011 = vshrl.u32 %v3006, 16
  %vm3012 = vc.u32 %v3004, %v3008
  %v3013 = vsel %vm3012, 1, 0
  %v3014 = vadd.s32 %v3004, %v3008
  %v3015 = vadd.s32 %v3007, %v3013
  %vm3016 = vc.u32 %v3014, %v3010
  %v3017 = vsel %vm3016, 1, 0
  %v3018 = vadd.s32 %v3014, %v3010
  %v3019 = vadd.s32 %v3015, %v3017
  %v3020 = vadd.s32 %v3019, %v3009
  %v3021 = vadd.s32 %v3020, %v3011
  %v3022 = vand.u32 %v2999, 65535
  %v3023 = vshrl.u32 %v2999, 16
  %v3024 = vand.u32 %v2994, 65535
  %v3025 = vshrl.u32 %v2994, 16
  %v3026 = vmul.u32 %v3022, %v3024
  %v3027 = vmul.u32 %v3022, %v3025
  %v3028 = vmul.u32 %v3023, %v3024
  %v3029 = vmul.u32 %v3023, %v3025
  %v3030 = vshll.u32 %v3027, 16
  %v3031 = vshrl.u32 %v3027, 16
  %v3032 = vshll.u32 %v3028, 16
  %v3033 = vshrl.u32 %v3028, 16
  %vm3034 = vc.u32 %v3026, %v3030
  %v3035 = vsel %vm3034, 1, 0
  %v3036 = vadd.s32 %v3026, %v3030
  %v3037 = vadd.s32 %v3029, %v3035
  %vm3038 = vc.u32 %v3036, %v3032
  %v3039 = vsel %vm3038, 1, 0
  %v3040 = vadd.s32 %v3036, %v3032
  %v3041 = vadd.s32 %v3037, %v3039
  %v3042 = vadd.s32 %v3041, %v3031
  %v3043 = vadd.s32 %v3042, %v3033
  %v3044 = vmul.u32 %v2999, %v2990
  %v3045 = vadd.s32 %v3021, %v3040
  %vm3046 = vc.u32 %v3021, %v3040
  %v3047 = vadd.s32 %v3043, 1
  %v3048 = vsel %vm3046, %v3047, %v3043
  %v3049 = vadd.s32 %v3044, %v3048
  %v3050 = vadd.s32 %v3049, 536870912
  %v3051 = vshrl.u32 %v3050, 30
  %v3052 = vshll.u32 %v3051, 30
  %v3053 = vsub.s32 %v3049, %v3052
  %vm3054 = vcmp.lt.s32.totalorder %v3053, 0
  %v3055 = vsub.s32 0, %v3053
  %v3056 = vsel %vm3054, %v3055, %v3053
  %v3057 = vclz %v3056
  %v3058 = vsub.s32 %v3057, 2
  %vm3059 = vcmp.gt.s32.totalorder 0, %v3058
  %v3060 = vsel %vm3059, 0, %v3058
  %v3061 = vsub.s32 32, %v3060
  %v3062 = vshll.u32 %v3053, %v3060
  %v3063 = vshrl.u32 %v3045, %v3061
  %v3064 = vor.u32 %v3062, %v3063
  %v3065 = vsub.s32 4294967266, %v3060
  %v3066 = vadd.s32 %v3065, 127
  %v3067 = vshll.u32 %v3066, 23
  %v3068 = vor.u32 4788187, %v3067
  %v3069 = vand.u32 2147483647, %v3068
  %v3071 = vcvt.s32.f32 %v3064
  %v3072 = vmul.f32 %v3071, %v3069
  %v3073 = vxor.u32 %v3072, 2147483648
  %v3074 = vsel %vm2953, %v3073, %v3072
  %v3075 = vsub.s32 4, %v3051
  %v3076 = vsel %vm2953, %v3075, %v3051
  %v3077 = vsel %vm2952, %v147, %v3074
  %v3078 = vsel %vm2952, 0, %v3076
  %v3079 = vmul.f32 %v3077, %v3077
  %v3080 = vmul.f32 %v3079, -0.001358992
  %v3081 = vadd.f32 %v3080, 0.041655596
  %v3082 = vmul.f32 %v3079, %v3081
  %v3083 = vadd.f32 %v3082, -0.4999988
  %v3084 = vmul.f32 %v3079, %v3083
  %v3085 = vadd.f32 1.0, %v3084
  %v3086 = vmul.f32 %v3077, %v3077
  %v3087 = vmul.f32 %v3086, -0.00019511016
  %v3088 = vadd.f32 %v3087, 0.008332121
  %v3089 = vmul.f32 %v3086, %v3088
  %v3090 = vadd.f32 %v3089, -0.16666654
  %v3091 = vmul.f32 %v3086, %v3090
  %v3092 = vadd.f32 %v3091, 1.0
  %v3093 = vmul.f32 %v3092, %v3077
  %vm3094 = vweird.f32 %v147
  %v3095 = vadd.s32 %v3078, 3
  %v3096 = vand.u32 %v3095, 3
  %vm3097 = vcmp.lt.s32.totalorder %v3096, 2
  %vm3098 = vcmp.eq.s32.totalorder %v3096, 0
  %v3099 = vxor.u32 %v3093, 2147483648
  %v3100 = vsel %vm3098, %v3085, %v3099
  %vm3101 = vcmp.eq.s32.totalorder %v3096, 2
  %v3102 = vxor.u32 %v3085, 2147483648
  %v3103 = vsel %vm3101, %v3102, %v3093
  %v3104 = vsel %vm3097, %v3100, %v3103
  %v3105 = vsel %vm3094, nan, %v3104
  %v3106 = vand.u32 2147483647, %v148
  %vm3107 = vcmp.le.f32.partialorder %v3106, 0.7853982
  %vm3108 = vcmp.lt.s32.totalorder %v148, 0
  %v3109 = vand.u32 %v148, 2139095040
  %v3110 = vshrl.u32 %v3109, 23
  %v3111 = vsub.s32 %v3110, 127
  %v3112 = vand.u32 2147483647, %v148
  %v3113 = vand.u32 %v3112, 8388607
  %v3114 = vor.u32 %v3113, 8388608
  %v3115 = vsub.s32 0, %v3114
  %v3116 = vadd.s32 %v3111, 1
  %vm3117 = vcmp.gt.s32.totalorder %v3116, 0
  %v3118 = vsel %vm3117, %v3116, 0
  %v3119 = vshrl.u32 %v3118, 5
  %v3120 = vand.u32 %v3118, 31
  %v3121 = vsub.s32 32, %v3120
  %v3122 = vshrl.u32 683565275, %v3121
  %v3123 = vshll.u32 683565275, %v3120
  %v3124 = vshrl.u32 2475754826, %v3121
  %v3125 = vor.u32 %v3123, %v3124
  %v3126 = vshll.u32 2475754826, %v3120
  %v3127 = vshrl.u32 2131351028, %v3121
  %v3128 = vor.u32 %v3126, %v3127
  %v3129 = vshll.u32 2131351028, %v3120
  %v3130 = vshrl.u32 2102212464, %v3121
  %v3131 = vor.u32 %v3129, %v3130
  %v3132 = vshll.u32 2102212464, %v3120
  %v3133 = vshrl.u32 920167782, %v3121
  %v3134 = vor.u32 %v3132, %v3133
  %v3135 = vshll.u32 920167782, %v3120
  %v3136 = vshrl.u32 1326507024, %v3121
  %v3137 = vor.u32 %v3135, %v3136
  %vm3138 = vcmp.lt.s32.totalorder %v3119, 1
  %vm3139 = vcmp.lt.s32.totalorder %v3119, 2
  %vm3140 = vcmp.lt.s32.totalorder %v3119, 3
  %vm3141 = vcmp.lt.s32.totalorder %v3119, 4
  %v3142 = vsel %vm3138, %v3122, %v3125
  %v3143 = vsel %vm3141, %v3131, 2102212464
  %v3144 = vsel %vm3140, %v3128, %v3143
  %v3145 = vsel %vm3139, %v3142, %v3144
  %v3146 = vsel %vm3138, %v3125, %v3128
  %v3147 = vsel %vm3141, %v3134, 920167782
  %v3148 = vsel %vm3140, %v3131, %v3147
  %v3149 = vsel %vm3139, %v3146, %v3148
  %v3150 = vsel %vm3138, %v3128, %v3131
  %v3151 = vsel %vm3141, %v3137, 1326507024
  %v3152 = vsel %vm3140, %v3134, %v3151
  %v3153 = vsel %vm3139, %v3150, %v3152
  %v3154 = vshll.u32 %v3114, 8
  %v3155 = vand.u32 %v3154, 65535
  %v3156 = vshrl.u32 %v3154, 16
  %v3157 = vand.u32 %v3153, 65535
  %v3158 = vshrl.u32 %v3153, 16
  %v3159 = vmul.u32 %v3155, %v3157
  %v3160 = vmul.u32 %v3155, %v3158
  %v3161 = vmul.u32 %v3156, %v3157
  %v3162 = vmul.u32 %v3156, %v3158
  %v3163 = vshll.u32 %v3160, 16
  %v3164 = vshrl.u32 %v3160, 16
  %v3165 = vshll.u32 %v3161, 16
  %v3166 = vshrl.u32 %v3161, 16
  %vm3167 = vc.u32 %v3159, %v3163
  %v3168 = vsel %vm3167, 1, 0
  %v3169 = vadd.s32 %v3159, %v3163
  %v3170 = vadd.s32 %v3162, %v3168
  %vm3171 = vc.u32 %v3169, %v3165
  %v3172 = vsel %vm3171, 1, 0
  %v3173 = vadd.s32 %v3169, %v3165
  %v3174 = vadd.s32 %v3170, %v3172
  %v3175 = vadd.s32 %v3174, %v3164
  %v3176 = vadd.s32 %v3175, %v3166
  %v3177 = vand.u32 %v3154, 65535
  %v3178 = vshrl.u32 %v3154, 16
  %v3179 = vand.u32 %v3149, 65535
  %v3180 = vshrl.u32 %v3149, 16
  %v3181 = vmul.u32 %v3177, %v3179
  %v3182 = vmul.u32 %v3177, %v3180
  %v3183 = vmul.u32 %v3178, %v3179
  %v3184 = vmul.u32 %v3178, %v3180
  %v3185 = vshll.u32 %v3182, 16
  %v3186 = vshrl.u32 %v3182, 16
  %v3187 = vshll.u32 %v3183, 16
  %v3188 = vshrl.u32 %v3183, 16
  %vm3189 = vc.u32 %v3181, %v3185
  %v3190 = vsel %vm3189, 1, 0
  %v3191 = vadd.s32 %v3181, %v3185
  %v3192 = vadd.s32 %v3184, %v3190
  %vm3193 = vc.u32 %v3191, %v3187
  %v3194 = vsel %vm3193, 1, 0
  %v3195 = vadd.s32 %v3191, %v3187
  %v3196 = vadd.s32 %v3192, %v3194
  %v3197 = vadd.s32 %v3196, %v3186
  %v3198 = vadd.s32 %v3197, %v3188
  %v3199 = vmul.u32 %v3154, %v3145
  %v3200 = vadd.s32 %v3176, %v3195
  %vm3201 = vc.u32 %v3176, %v3195
  %v3202 = vadd.s32 %v3198, 1
  %v3203 = vsel %vm3201, %v3202, %v3198
  %v3204 = vadd.s32 %v3199, %v3203
  %v3205 = vadd.s32 %v3204, 536870912
  %v3206 = vshrl.u32 %v3205, 30
  %v3207 = vshll.u32 %v3206, 30
  %v3208 = vsub.s32 %v3204, %v3207
  %vm3209 = vcmp.lt.s32.totalorder %v3208, 0
  %v3210 = vsub.s32 0, %v3208
  %v3211 = vsel %vm3209, %v3210, %v3208
  %v3212 = vclz %v3211
  %v3213 = vsub.s32 %v3212, 2
  %vm3214 = vcmp.gt.s32.totalorder 0, %v3213
  %v3215 = vsel %vm3214, 0, %v3213
  %v3216 = vsub.s32 32, %v3215
  %v3217 = vshll.u32 %v3208, %v3215
  %v3218 = vshrl.u32 %v3200, %v3216
  %v3219 = vor.u32 %v3217, %v3218
  %v3220 = vsub.s32 4294967266, %v3215
  %v3221 = vadd.s32 %v3220, 127
  %v3222 = vshll.u32 %v3221, 23
  %v3223 = vor.u32 4788187, %v3222
  %v3224 = vand.u32 2147483647, %v3223
  %v3226 = vcvt.s32.f32 %v3219
  %v3227 = vmul.f32 %v3226, %v3224
  %v3228 = vxor.u32 %v3227, 2147483648
  %v3229 = vsel %vm3108, %v3228, %v3227
  %v3230 = vsub.s32 4, %v3206
  %v3231 = vsel %vm3108, %v3230, %v3206
  %v3232 = vsel %vm3107, %v148, %v3229
  %v3233 = vsel %vm3107, 0, %v3231
  %v3234 = vmul.f32 %v3232, %v3232
  %v3235 = vmul.f32 %v3234, -0.001358992
  %v3236 = vadd.f32 %v3235, 0.041655596
  %v3237 = vmul.f32 %v3234, %v3236
  %v3238 = vadd.f32 %v3237, -0.4999988
  %v3239 = vmul.f32 %v3234, %v3238
  %v3240 = vadd.f32 1.0, %v3239
  %v3241 = vmul.f32 %v3232, %v3232
  %v3242 = vmul.f32 %v3241, -0.00019511016
  %v3243 = vadd.f32 %v3242, 0.008332121
  %v3244 = vmul.f32 %v3241, %v3243
  %v3245 = vadd.f32 %v3244, -0.16666654
  %v3246 = vmul.f32 %v3241, %v3245
  %v3247 = vadd.f32 %v3246, 1.0
  %v3248 = vmul.f32 %v3247, %v3232
  %vm3249 = vweird.f32 %v148
  %v3250 = vadd.s32 %v3233, 3
  %v3251 = vand.u32 %v3250, 3
  %vm3252 = vcmp.lt.s32.totalorder %v3251, 2
  %vm3253 = vcmp.eq.s32.totalorder %v3251, 0
  %v3254 = vxor.u32 %v3248, 2147483648
  %v3255 = vsel %vm3253, %v3240, %v3254
  %vm3256 = vcmp.eq.s32.totalorder %v3251, 2
  %v3257 = vxor.u32 %v3240, 2147483648
  %v3258 = vsel %vm3256, %v3257, %v3248
  %v3259 = vsel %vm3252, %v3255, %v3258
  %v3260 = vsel %vm3249, nan, %v3259
  %v3261 = vand.u32 2147483647, %v149
  %vm3262 = vcmp.le.f32.partialorder %v3261, 0.7853982
  %vm3263 = vcmp.lt.s32.totalorder %v149, 0
  %v3264 = vand.u32 %v149, 2139095040
  %v3265 = vshrl.u32 %v3264, 23
  %v3266 = vsub.s32 %v3265, 127
  %v3267 = vand.u32 2147483647, %v149
  %v3268 = vand.u32 %v3267, 8388607
  %v3269 = vor.u32 %v3268, 8388608
  %v3270 = vsub.s32 0, %v3269
  %v3271 = vadd.s32 %v3266, 1
  %vm3272 = vcmp.gt.s32.totalorder %v3271, 0
  %v3273 = vsel %vm3272, %v3271, 0
  %v3274 = vshrl.u32 %v3273, 5
  %v3275 = vand.u32 %v3273, 31
  %v3276 = vsub.s32 32, %v3275
  %v3277 = vshrl.u32 683565275, %v3276
  %v3278 = vshll.u32 683565275, %v3275
  %v3279 = vshrl.u32 2475754826, %v3276
  %v3280 = vor.u32 %v3278, %v3279
  %v3281 = vshll.u32 2475754826, %v3275
  %v3282 = vshrl.u32 2131351028, %v3276
  %v3283 = vor.u32 %v3281, %v3282
  %v3284 = vshll.u32 2131351028, %v3275
  %v3285 = vshrl.u32 2102212464, %v3276
  %v3286 = vor.u32 %v3284, %v3285
  %v3287 = vshll.u32 2102212464, %v3275
  %v3288 = vshrl.u32 920167782, %v3276
  %v3289 = vor.u32 %v3287, %v3288
  %v3290 = vshll.u32 920167782, %v3275
  %v3291 = vshrl.u32 1326507024, %v3276
  %v3292 = vor.u32 %v3290, %v3291
  %vm3293 = vcmp.lt.s32.totalorder %v3274, 1
  %vm3294 = vcmp.lt.s32.totalorder %v3274, 2
  %vm3295 = vcmp.lt.s32.totalorder %v3274, 3
  %vm3296 = vcmp.lt.s32.totalorder %v3274, 4
  %v3297 = vsel %vm3293, %v3277, %v3280
  %v3298 = vsel %vm3296, %v3286, 2102212464
  %v3299 = vsel %vm3295, %v3283, %v3298
  %v3300 = vsel %vm3294, %v3297, %v3299
  %v3301 = vsel %vm3293, %v3280, %v3283
  %v3302 = vsel %vm3296, %v3289, 920167782
  %v3303 = vsel %vm3295, %v3286, %v3302
  %v3304 = vsel %vm3294, %v3301, %v3303
  %v3305 = vsel %vm3293, %v3283, %v3286
  %v3306 = vsel %vm3296, %v3292, 1326507024
  %v3307 = vsel %vm3295, %v3289, %v3306
  %v3308 = vsel %vm3294, %v3305, %v3307
  %v3309 = vshll.u32 %v3269, 8
  %v3310 = vand.u32 %v3309, 65535
  %v3311 = vshrl.u32 %v3309, 16
  %v3312 = vand.u32 %v3308, 65535
  %v3313 = vshrl.u32 %v3308, 16
  %v3314 = vmul.u32 %v3310, %v3312
  %v3315 = vmul.u32 %v3310, %v3313
  %v3316 = vmul.u32 %v3311, %v3312
  %v3317 = vmul.u32 %v3311, %v3313
  %v3318 = vshll.u32 %v3315, 16
  %v3319 = vshrl.u32 %v3315, 16
  %v3320 = vshll.u32 %v3316, 16
  %v3321 = vshrl.u32 %v3316, 16
  %vm3322 = vc.u32 %v3314, %v3318
  %v3323 = vsel %vm3322, 1, 0
  %v3324 = vadd.s32 %v3314, %v3318
  %v3325 = vadd.s32 %v3317, %v3323
  %vm3326 = vc.u32 %v3324, %v3320
  %v3327 = vsel %vm3326, 1, 0
  %v3328 = vadd.s32 %v3324, %v3320
  %v3329 = vadd.s32 %v3325, %v3327
  %v3330 = vadd.s32 %v3329, %v3319
  %v3331 = vadd.s32 %v3330, %v3321
  %v3332 = vand.u32 %v3309, 65535
  %v3333 = vshrl.u32 %v3309, 16
  %v3334 = vand.u32 %v3304, 65535
  %v3335 = vshrl.u32 %v3304, 16
  %v3336 = vmul.u32 %v3332, %v3334
  %v3337 = vmul.u32 %v3332, %v3335
  %v3338 = vmul.u32 %v3333, %v3334
  %v3339 = vmul.u32 %v3333, %v3335
  %v3340 = vshll.u32 %v3337, 16
  %v3341 = vshrl.u32 %v3337, 16
  %v3342 = vshll.u32 %v3338, 16
  %v3343 = vshrl.u32 %v3338, 16
  %vm3344 = vc.u32 %v3336, %v3340
  %v3345 = vsel %vm3344, 1, 0
  %v3346 = vadd.s32 %v3336, %v3340
  %v3347 = vadd.s32 %v3339, %v3345
  %vm3348 = vc.u32 %v3346, %v3342
  %v3349 = vsel %vm3348, 1, 0
  %v3350 = vadd.s32 %v3346, %v3342
  %v3351 = vadd.s32 %v3347, %v3349
  %v3352 = vadd.s32 %v3351, %v3341
  %v3353 = vadd.s32 %v3352, %v3343
  %v3354 = vmul.u32 %v3309, %v3300
  %v3355 = vadd.s32 %v3331, %v3350
  %vm3356 = vc.u32 %v3331, %v3350
  %v3357 = vadd.s32 %v3353, 1
  %v3358 = vsel %vm3356, %v3357, %v3353
  %v3359 = vadd.s32 %v3354, %v3358
  %v3360 = vadd.s32 %v3359, 536870912
  %v3361 = vshrl.u32 %v3360, 30
  %v3362 = vshll.u32 %v3361, 30
  %v3363 = vsub.s32 %v3359, %v3362
  %vm3364 = vcmp.lt.s32.totalorder %v3363, 0
  %v3365 = vsub.s32 0, %v3363
  %v3366 = vsel %vm3364, %v3365, %v3363
  %v3367 = vclz %v3366
  %v3368 = vsub.s32 %v3367, 2
  %vm3369 = vcmp.gt.s32.totalorder 0, %v3368
  %v3370 = vsel %vm3369, 0, %v3368
  %v3371 = vsub.s32 32, %v3370
  %v3372 = vshll.u32 %v3363, %v3370
  %v3373 = vshrl.u32 %v3355, %v3371
  %v3374 = vor.u32 %v3372, %v3373
  %v3375 = vsub.s32 4294967266, %v3370
  %v3376 = vadd.s32 %v3375, 127
  %v3377 = vshll.u32 %v3376, 23
  %v3378 = vor.u32 4788187, %v3377
  %v3379 = vand.u32 2147483647, %v3378
  %v3381 = vcvt.s32.f32 %v3374
  %v3382 = vmul.f32 %v3381, %v3379
  %v3383 = vxor.u32 %v3382, 2147483648
  %v3384 = vsel %vm3263, %v3383, %v3382
  %v3385 = vsub.s32 4, %v3361
  %v3386 = vsel %vm3263, %v3385, %v3361
  %v3387 = vsel %vm3262, %v149, %v3384
  %v3388 = vsel %vm3262, 0, %v3386
  %v3389 = vmul.f32 %v3387, %v3387
  %v3390 = vmul.f32 %v3389, -0.001358992
  %v3391 = vadd.f32 %v3390, 0.041655596
  %v3392 = vmul.f32 %v3389, %v3391
  %v3393 = vadd.f32 %v3392, -0.4999988
  %v3394 = vmul.f32 %v3389, %v3393
  %v3395 = vadd.f32 1.0, %v3394
  %v3396 = vmul.f32 %v3387, %v3387
  %v3397 = vmul.f32 %v3396, -0.00019511016
  %v3398 = vadd.f32 %v3397, 0.008332121
  %v3399 = vmul.f32 %v3396, %v3398
  %v3400 = vadd.f32 %v3399, -0.16666654
  %v3401 = vmul.f32 %v3396, %v3400
  %v3402 = vadd.f32 %v3401, 1.0
  %v3403 = vmul.f32 %v3402, %v3387
  %vm3404 = vweird.f32 %v149
  %v3405 = vadd.s32 %v3388, 3
  %v3406 = vand.u32 %v3405, 3
  %vm3407 = vcmp.lt.s32.totalorder %v3406, 2
  %vm3408 = vcmp.eq.s32.totalorder %v3406, 0
  %v3409 = vxor.u32 %v3403, 2147483648
  %v3410 = vsel %vm3408, %v3395, %v3409
  %vm3411 = vcmp.eq.s32.totalorder %v3406, 2
  %v3412 = vxor.u32 %v3395, 2147483648
  %v3413 = vsel %vm3411, %v3412, %v3403
  %v3414 = vsel %vm3407, %v3410, %v3413
  %v3415 = vsel %vm3404, nan, %v3414
  %v3416 = vand.u32 2147483647, %v150
  %vm3417 = vcmp.le.f32.partialorder %v3416, 0.7853982
  %vm3418 = vcmp.lt.s32.totalorder %v150, 0
  %v3419 = vand.u32 %v150, 2139095040
  %v3420 = vshrl.u32 %v3419, 23
  %v3421 = vsub.s32 %v3420, 127
  %v3422 = vand.u32 2147483647, %v150
  %v3423 = vand.u32 %v3422, 8388607
  %v3424 = vor.u32 %v3423, 8388608
  %v3425 = vsub.s32 0, %v3424
  %v3426 = vadd.s32 %v3421, 1
  %vm3427 = vcmp.gt.s32.totalorder %v3426, 0
  %v3428 = vsel %vm3427, %v3426, 0
  %v3429 = vshrl.u32 %v3428, 5
  %v3430 = vand.u32 %v3428, 31
  %v3431 = vsub.s32 32, %v3430
  %v3432 = vshrl.u32 683565275, %v3431
  %v3433 = vshll.u32 683565275, %v3430
  %v3434 = vshrl.u32 2475754826, %v3431
  %v3435 = vor.u32 %v3433, %v3434
  %v3436 = vshll.u32 2475754826, %v3430
  %v3437 = vshrl.u32 2131351028, %v3431
  %v3438 = vor.u32 %v3436, %v3437
  %v3439 = vshll.u32 2131351028, %v3430
  %v3440 = vshrl.u32 2102212464, %v3431
  %v3441 = vor.u32 %v3439, %v3440
  %v3442 = vshll.u32 2102212464, %v3430
  %v3443 = vshrl.u32 920167782, %v3431
  %v3444 = vor.u32 %v3442, %v3443
  %v3445 = vshll.u32 920167782, %v3430
  %v3446 = vshrl.u32 1326507024, %v3431
  %v3447 = vor.u32 %v3445, %v3446
  %vm3448 = vcmp.lt.s32.totalorder %v3429, 1
  %vm3449 = vcmp.lt.s32.totalorder %v3429, 2
  %vm3450 = vcmp.lt.s32.totalorder %v3429, 3
  %vm3451 = vcmp.lt.s32.totalorder %v3429, 4
  %v3452 = vsel %vm3448, %v3432, %v3435
  %v3453 = vsel %vm3451, %v3441, 2102212464
  %v3454 = vsel %vm3450, %v3438, %v3453
  %v3455 = vsel %vm3449, %v3452, %v3454
  %v3456 = vsel %vm3448, %v3435, %v3438
  %v3457 = vsel %vm3451, %v3444, 920167782
  %v3458 = vsel %vm3450, %v3441, %v3457
  %v3459 = vsel %vm3449, %v3456, %v3458
  %v3460 = vsel %vm3448, %v3438, %v3441
  %v3461 = vsel %vm3451, %v3447, 1326507024
  %v3462 = vsel %vm3450, %v3444, %v3461
  %v3463 = vsel %vm3449, %v3460, %v3462
  %v3464 = vshll.u32 %v3424, 8
  %v3465 = vand.u32 %v3464, 65535
  %v3466 = vshrl.u32 %v3464, 16
  %v3467 = vand.u32 %v3463, 65535
  %v3468 = vshrl.u32 %v3463, 16
  %v3469 = vmul.u32 %v3465, %v3467
  %v3470 = vmul.u32 %v3465, %v3468
  %v3471 = vmul.u32 %v3466, %v3467
  %v3472 = vmul.u32 %v3466, %v3468
  %v3473 = vshll.u32 %v3470, 16
  %v3474 = vshrl.u32 %v3470, 16
  %v3475 = vshll.u32 %v3471, 16
  %v3476 = vshrl.u32 %v3471, 16
  %vm3477 = vc.u32 %v3469, %v3473
  %v3478 = vsel %vm3477, 1, 0
  %v3479 = vadd.s32 %v3469, %v3473
  %v3480 = vadd.s32 %v3472, %v3478
  %vm3481 = vc.u32 %v3479, %v3475
  %v3482 = vsel %vm3481, 1, 0
  %v3483 = vadd.s32 %v3479, %v3475
  %v3484 = vadd.s32 %v3480, %v3482
  %v3485 = vadd.s32 %v3484, %v3474
  %v3486 = vadd.s32 %v3485, %v3476
  %v3487 = vand.u32 %v3464, 65535
  %v3488 = vshrl.u32 %v3464, 16
  %v3489 = vand.u32 %v3459, 65535
  %v3490 = vshrl.u32 %v3459, 16
  %v3491 = vmul.u32 %v3487, %v3489
  %v3492 = vmul.u32 %v3487, %v3490
  %v3493 = vmul.u32 %v3488, %v3489
  %v3494 = vmul.u32 %v3488, %v3490
  %v3495 = vshll.u32 %v3492, 16
  %v3496 = vshrl.u32 %v3492, 16
  %v3497 = vshll.u32 %v3493, 16
  %v3498 = vshrl.u32 %v3493, 16
  %vm3499 = vc.u32 %v3491, %v3495
  %v3500 = vsel %vm3499, 1, 0
  %v3501 = vadd.s32 %v3491, %v3495
  %v3502 = vadd.s32 %v3494, %v3500
  %vm3503 = vc.u32 %v3501, %v3497
  %v3504 = vsel %vm3503, 1, 0
  %v3505 = vadd.s32 %v3501, %v3497
  %v3506 = vadd.s32 %v3502, %v3504
  %v3507 = vadd.s32 %v3506, %v3496
  %v3508 = vadd.s32 %v3507, %v3498
  %v3509 = vmul.u32 %v3464, %v3455
  %v3510 = vadd.s32 %v3486, %v3505
  %vm3511 = vc.u32 %v3486, %v3505
  %v3512 = vadd.s32 %v3508, 1
  %v3513 = vsel %vm3511, %v3512, %v3508
  %v3514 = vadd.s32 %v3509, %v3513
  %v3515 = vadd.s32 %v3514, 536870912
  %v3516 = vshrl.u32 %v3515, 30
  %v3517 = vshll.u32 %v3516, 30
  %v3518 = vsub.s32 %v3514, %v3517
  %vm3519 = vcmp.lt.s32.totalorder %v3518, 0
  %v3520 = vsub.s32 0, %v3518
  %v3521 = vsel %vm3519, %v3520, %v3518
  %v3522 = vclz %v3521
  %v3523 = vsub.s32 %v3522, 2
  %vm3524 = vcmp.gt.s32.totalorder 0, %v3523
  %v3525 = vsel %vm3524, 0, %v3523
  %v3526 = vsub.s32 32, %v3525
  %v3527 = vshll.u32 %v3518, %v3525
  %v3528 = vshrl.u32 %v3510, %v3526
  %v3529 = vor.u32 %v3527, %v3528
  %v3530 = vsub.s32 4294967266, %v3525
  %v3531 = vadd.s32 %v3530, 127
  %v3532 = vshll.u32 %v3531, 23
  %v3533 = vor.u32 4788187, %v3532
  %v3534 = vand.u32 2147483647, %v3533
  %v3536 = vcvt.s32.f32 %v3529
  %v3537 = vmul.f32 %v3536, %v3534
  %v3538 = vxor.u32 %v3537, 2147483648
  %v3539 = vsel %vm3418, %v3538, %v3537
  %v3540 = vsub.s32 4, %v3516
  %v3541 = vsel %vm3418, %v3540, %v3516
  %v3542 = vsel %vm3417, %v150, %v3539
  %v3543 = vsel %vm3417, 0, %v3541
  %v3544 = vmul.f32 %v3542, %v3542
  %v3545 = vmul.f32 %v3544, -0.001358992
  %v3546 = vadd.f32 %v3545, 0.041655596
  %v3547 = vmul.f32 %v3544, %v3546
  %v3548 = vadd.f32 %v3547, -0.4999988
  %v3549 = vmul.f32 %v3544, %v3548
  %v3550 = vadd.f32 1.0, %v3549
  %v3551 = vmul.f32 %v3542, %v3542
  %v3552 = vmul.f32 %v3551, -0.00019511016
  %v3553 = vadd.f32 %v3552, 0.008332121
  %v3554 = vmul.f32 %v3551, %v3553
  %v3555 = vadd.f32 %v3554, -0.16666654
  %v3556 = vmul.f32 %v3551, %v3555
  %v3557 = vadd.f32 %v3556, 1.0
  %v3558 = vmul.f32 %v3557, %v3542
  %vm3559 = vweird.f32 %v150
  %v3560 = vadd.s32 %v3543, 3
  %v3561 = vand.u32 %v3560, 3
  %vm3562 = vcmp.lt.s32.totalorder %v3561, 2
  %vm3563 = vcmp.eq.s32.totalorder %v3561, 0
  %v3564 = vxor.u32 %v3558, 2147483648
  %v3565 = vsel %vm3563, %v3550, %v3564
  %vm3566 = vcmp.eq.s32.totalorder %v3561, 2
  %v3567 = vxor.u32 %v3550, 2147483648
  %v3568 = vsel %vm3566, %v3567, %v3558
  %v3569 = vsel %vm3562, %v3565, %v3568
  %v3570 = vsel %vm3559, nan, %v3569
  %v3571 = vand.u32 2147483647, %v151
  %vm3572 = vcmp.le.f32.partialorder %v3571, 0.7853982
  %vm3573 = vcmp.lt.s32.totalorder %v151, 0
  %v3574 = vand.u32 %v151, 2139095040
  %v3575 = vshrl.u32 %v3574, 23
  %v3576 = vsub.s32 %v3575, 127
  %v3577 = vand.u32 2147483647, %v151
  %v3578 = vand.u32 %v3577, 8388607
  %v3579 = vor.u32 %v3578, 8388608
  %v3580 = vsub.s32 0, %v3579
  %v3581 = vadd.s32 %v3576, 1
  %vm3582 = vcmp.gt.s32.totalorder %v3581, 0
  %v3583 = vsel %vm3582, %v3581, 0
  %v3584 = vshrl.u32 %v3583, 5
  %v3585 = vand.u32 %v3583, 31
  %v3586 = vsub.s32 32, %v3585
  %v3587 = vshrl.u32 683565275, %v3586
  %v3588 = vshll.u32 683565275, %v3585
  %v3589 = vshrl.u32 2475754826, %v3586
  %v3590 = vor.u32 %v3588, %v3589
  %v3591 = vshll.u32 2475754826, %v3585
  %v3592 = vshrl.u32 2131351028, %v3586
  %v3593 = vor.u32 %v3591, %v3592
  %v3594 = vshll.u32 2131351028, %v3585
  %v3595 = vshrl.u32 2102212464, %v3586
  %v3596 = vor.u32 %v3594, %v3595
  %v3597 = vshll.u32 2102212464, %v3585
  %v3598 = vshrl.u32 920167782, %v3586
  %v3599 = vor.u32 %v3597, %v3598
  %v3600 = vshll.u32 920167782, %v3585
  %v3601 = vshrl.u32 1326507024, %v3586
  %v3602 = vor.u32 %v3600, %v3601
  %vm3603 = vcmp.lt.s32.totalorder %v3584, 1
  %vm3604 = vcmp.lt.s32.totalorder %v3584, 2
  %vm3605 = vcmp.lt.s32.totalorder %v3584, 3
  %vm3606 = vcmp.lt.s32.totalorder %v3584, 4
  %v3607 = vsel %vm3603, %v3587, %v3590
  %v3608 = vsel %vm3606, %v3596, 2102212464
  %v3609 = vsel %vm3605, %v3593, %v3608
  %v3610 = vsel %vm3604, %v3607, %v3609
  %v3611 = vsel %vm3603, %v3590, %v3593
  %v3612 = vsel %vm3606, %v3599, 920167782
  %v3613 = vsel %vm3605, %v3596, %v3612
  %v3614 = vsel %vm3604, %v3611, %v3613
  %v3615 = vsel %vm3603, %v3593, %v3596
  %v3616 = vsel %vm3606, %v3602, 1326507024
  %v3617 = vsel %vm3605, %v3599, %v3616
  %v3618 = vsel %vm3604, %v3615, %v3617
  %v3619 = vshll.u32 %v3579, 8
  %v3620 = vand.u32 %v3619, 65535
  %v3621 = vshrl.u32 %v3619, 16
  %v3622 = vand.u32 %v3618, 65535
  %v3623 = vshrl.u32 %v3618, 16
  %v3624 = vmul.u32 %v3620, %v3622
  %v3625 = vmul.u32 %v3620, %v3623
  %v3626 = vmul.u32 %v3621, %v3622
  %v3627 = vmul.u32 %v3621, %v3623
  %v3628 = vshll.u32 %v3625, 16
  %v3629 = vshrl.u32 %v3625, 16
  %v3630 = vshll.u32 %v3626, 16
  %v3631 = vshrl.u32 %v3626, 16
  %vm3632 = vc.u32 %v3624, %v3628
  %v3633 = vsel %vm3632, 1, 0
  %v3634 = vadd.s32 %v3624, %v3628
  %v3635 = vadd.s32 %v3627, %v3633
  %vm3636 = vc.u32 %v3634, %v3630
  %v3637 = vsel %vm3636, 1, 0
  %v3638 = vadd.s32 %v3634, %v3630
  %v3639 = vadd.s32 %v3635, %v3637
  %v3640 = vadd.s32 %v3639, %v3629
  %v3641 = vadd.s32 %v3640, %v3631
  %v3642 = vand.u32 %v3619, 65535
  %v3643 = vshrl.u32 %v3619, 16
  %v3644 = vand.u32 %v3614, 65535
  %v3645 = vshrl.u32 %v3614, 16
  %v3646 = vmul.u32 %v3642, %v3644
  %v3647 = vmul.u32 %v3642, %v3645
  %v3648 = vmul.u32 %v3643, %v3644
  %v3649 = vmul.u32 %v3643, %v3645
  %v3650 = vshll.u32 %v3647, 16
  %v3651 = vshrl.u32 %v3647, 16
  %v3652 = vshll.u32 %v3648, 16
  %v3653 = vshrl.u32 %v3648, 16
  %vm3654 = vc.u32 %v3646, %v3650
  %v3655 = vsel %vm3654, 1, 0
  %v3656 = vadd.s32 %v3646, %v3650
  %v3657 = vadd.s32 %v3649, %v3655
  %vm3658 = vc.u32 %v3656, %v3652
  %v3659 = vsel %vm3658, 1, 0
  %v3660 = vadd.s32 %v3656, %v3652
  %v3661 = vadd.s32 %v3657, %v3659
  %v3662 = vadd.s32 %v3661, %v3651
  %v3663 = vadd.s32 %v3662, %v3653
  %v3664 = vmul.u32 %v3619, %v3610
  %v3665 = vadd.s32 %v3641, %v3660
  %vm3666 = vc.u32 %v3641, %v3660
  %v3667 = vadd.s32 %v3663, 1
  %v3668 = vsel %vm3666, %v3667, %v3663
  %v3669 = vadd.s32 %v3664, %v3668
  %v3670 = vadd.s32 %v3669, 536870912
  %v3671 = vshrl.u32 %v3670, 30
  %v3672 = vshll.u32 %v3671, 30
  %v3673 = vsub.s32 %v3669, %v3672
  %vm3674 = vcmp.lt.s32.totalorder %v3673, 0
  %v3675 = vsub.s32 0, %v3673
  %v3676 = vsel %vm3674, %v3675, %v3673
  %v3677 = vclz %v3676
  %v3678 = vsub.s32 %v3677, 2
  %vm3679 = vcmp.gt.s32.totalorder 0, %v3678
  %v3680 = vsel %vm3679, 0, %v3678
  %v3681 = vsub.s32 32, %v3680
  %v3682 = vshll.u32 %v3673, %v3680
  %v3683 = vshrl.u32 %v3665, %v3681
  %v3684 = vor.u32 %v3682, %v3683
  %v3685 = vsub.s32 4294967266, %v3680
  %v3686 = vadd.s32 %v3685, 127
  %v3687 = vshll.u32 %v3686, 23
  %v3688 = vor.u32 4788187, %v3687
  %v3689 = vand.u32 2147483647, %v3688
  %v3691 = vcvt.s32.f32 %v3684
  %v3692 = vmul.f32 %v3691, %v3689
  %v3693 = vxor.u32 %v3692, 2147483648
  %v3694 = vsel %vm3573, %v3693, %v3692
  %v3695 = vsub.s32 4, %v3671
  %v3696 = vsel %vm3573, %v3695, %v3671
  %v3697 = vsel %vm3572, %v151, %v3694
  %v3698 = vsel %vm3572, 0, %v3696
  %v3699 = vmul.f32 %v3697, %v3697
  %v3700 = vmul.f32 %v3699, -0.001358992
  %v3701 = vadd.f32 %v3700, 0.041655596
  %v3702 = vmul.f32 %v3699, %v3701
  %v3703 = vadd.f32 %v3702, -0.4999988
  %v3704 = vmul.f32 %v3699, %v3703
  %v3705 = vadd.f32 1.0, %v3704
  %v3706 = vmul.f32 %v3697, %v3697
  %v3707 = vmul.f32 %v3706, -0.00019511016
  %v3708 = vadd.f32 %v3707, 0.008332121
  %v3709 = vmul.f32 %v3706, %v3708
  %v3710 = vadd.f32 %v3709, -0.16666654
  %v3711 = vmul.f32 %v3706, %v3710
  %v3712 = vadd.f32 %v3711, 1.0
  %v3713 = vmul.f32 %v3712, %v3697
  %vm3714 = vweird.f32 %v151
  %v3715 = vadd.s32 %v3698, 3
  %v3716 = vand.u32 %v3715, 3
  %vm3717 = vcmp.lt.s32.totalorder %v3716, 2
  %vm3718 = vcmp.eq.s32.totalorder %v3716, 0
  %v3719 = vxor.u32 %v3713, 2147483648
  %v3720 = vsel %vm3718, %v3705, %v3719
  %vm3721 = vcmp.eq.s32.totalorder %v3716, 2
  %v3722 = vxor.u32 %v3705, 2147483648
  %v3723 = vsel %vm3721, %v3722, %v3713
  %v3724 = vsel %vm3717, %v3720, %v3723
  %v3725 = vsel %vm3714, nan, %v3724
  %v3726 = vand.u32 2147483647, %v152
  %vm3727 = vcmp.le.f32.partialorder %v3726, 0.7853982
  %vm3728 = vcmp.lt.s32.totalorder %v152, 0
  %v3729 = vand.u32 %v152, 2139095040
  %v3730 = vshrl.u32 %v3729, 23
  %v3731 = vsub.s32 %v3730, 127
  %v3732 = vand.u32 2147483647, %v152
  %v3733 = vand.u32 %v3732, 8388607
  %v3734 = vor.u32 %v3733, 8388608
  %v3735 = vsub.s32 0, %v3734
  %v3736 = vadd.s32 %v3731, 1
  %vm3737 = vcmp.gt.s32.totalorder %v3736, 0
  %v3738 = vsel %vm3737, %v3736, 0
  %v3739 = vshrl.u32 %v3738, 5
  %v3740 = vand.u32 %v3738, 31
  %v3741 = vsub.s32 32, %v3740
  %v3742 = vshrl.u32 683565275, %v3741
  %v3743 = vshll.u32 683565275, %v3740
  %v3744 = vshrl.u32 2475754826, %v3741
  %v3745 = vor.u32 %v3743, %v3744
  %v3746 = vshll.u32 2475754826, %v3740
  %v3747 = vshrl.u32 2131351028, %v3741
  %v3748 = vor.u32 %v3746, %v3747
  %v3749 = vshll.u32 2131351028, %v3740
  %v3750 = vshrl.u32 2102212464, %v3741
  %v3751 = vor.u32 %v3749, %v3750
  %v3752 = vshll.u32 2102212464, %v3740
  %v3753 = vshrl.u32 920167782, %v3741
  %v3754 = vor.u32 %v3752, %v3753
  %v3755 = vshll.u32 920167782, %v3740
  %v3756 = vshrl.u32 1326507024, %v3741
  %v3757 = vor.u32 %v3755, %v3756
  %vm3758 = vcmp.lt.s32.totalorder %v3739, 1
  %vm3759 = vcmp.lt.s32.totalorder %v3739, 2
  %vm3760 = vcmp.lt.s32.totalorder %v3739, 3
  %vm3761 = vcmp.lt.s32.totalorder %v3739, 4
  %v3762 = vsel %vm3758, %v3742, %v3745
  %v3763 = vsel %vm3761, %v3751, 2102212464
  %v3764 = vsel %vm3760, %v3748, %v3763
  %v3765 = vsel %vm3759, %v3762, %v3764
  %v3766 = vsel %vm3758, %v3745, %v3748
  %v3767 = vsel %vm3761, %v3754, 920167782
  %v3768 = vsel %vm3760, %v3751, %v3767
  %v3769 = vsel %vm3759, %v3766, %v3768
  %v3770 = vsel %vm3758, %v3748, %v3751
  %v3771 = vsel %vm3761, %v3757, 1326507024
  %v3772 = vsel %vm3760, %v3754, %v3771
  %v3773 = vsel %vm3759, %v3770, %v3772
  %v3774 = vshll.u32 %v3734, 8
  %v3775 = vand.u32 %v3774, 65535
  %v3776 = vshrl.u32 %v3774, 16
  %v3777 = vand.u32 %v3773, 65535
  %v3778 = vshrl.u32 %v3773, 16
  %v3779 = vmul.u32 %v3775, %v3777
  %v3780 = vmul.u32 %v3775, %v3778
  %v3781 = vmul.u32 %v3776, %v3777
  %v3782 = vmul.u32 %v3776, %v3778
  %v3783 = vshll.u32 %v3780, 16
  %v3784 = vshrl.u32 %v3780, 16
  %v3785 = vshll.u32 %v3781, 16
  %v3786 = vshrl.u32 %v3781, 16
  %vm3787 = vc.u32 %v3779, %v3783
  %v3788 = vsel %vm3787, 1, 0
  %v3789 = vadd.s32 %v3779, %v3783
  %v3790 = vadd.s32 %v3782, %v3788
  %vm3791 = vc.u32 %v3789, %v3785
  %v3792 = vsel %vm3791, 1, 0
  %v3793 = vadd.s32 %v3789, %v3785
  %v3794 = vadd.s32 %v3790, %v3792
  %v3795 = vadd.s32 %v3794, %v3784
  %v3796 = vadd.s32 %v3795, %v3786
  %v3797 = vand.u32 %v3774, 65535
  %v3798 = vshrl.u32 %v3774, 16
  %v3799 = vand.u32 %v3769, 65535
  %v3800 = vshrl.u32 %v3769, 16
  %v3801 = vmul.u32 %v3797, %v3799
  %v3802 = vmul.u32 %v3797, %v3800
  %v3803 = vmul.u32 %v3798, %v3799
  %v3804 = vmul.u32 %v3798, %v3800
  %v3805 = vshll.u32 %v3802, 16
  %v3806 = vshrl.u32 %v3802, 16
  %v3807 = vshll.u32 %v3803, 16
  %v3808 = vshrl.u32 %v3803, 16
  %vm3809 = vc.u32 %v3801, %v3805
  %v3810 = vsel %vm3809, 1, 0
  %v3811 = vadd.s32 %v3801, %v3805
  %v3812 = vadd.s32 %v3804, %v3810
  %vm3813 = vc.u32 %v3811, %v3807
  %v3814 = vsel %vm3813, 1, 0
  %v3815 = vadd.s32 %v3811, %v3807
  %v3816 = vadd.s32 %v3812, %v3814
  %v3817 = vadd.s32 %v3816, %v3806
  %v3818 = vadd.s32 %v3817, %v3808
  %v3819 = vmul.u32 %v3774, %v3765
  %v3820 = vadd.s32 %v3796, %v3815
  %vm3821 = vc.u32 %v3796, %v3815
  %v3822 = vadd.s32 %v3818, 1
  %v3823 = vsel %vm3821, %v3822, %v3818
  %v3824 = vadd.s32 %v3819, %v3823
  %v3825 = vadd.s32 %v3824, 536870912
  %v3826 = vshrl.u32 %v3825, 30
  %v3827 = vshll.u32 %v3826, 30
  %v3828 = vsub.s32 %v3824, %v3827
  %vm3829 = vcmp.lt.s32.totalorder %v3828, 0
  %v3830 = vsub.s32 0, %v3828
  %v3831 = vsel %vm3829, %v3830, %v3828
  %v3832 = vclz %v3831
  %v3833 = vsub.s32 %v3832, 2
  %vm3834 = vcmp.gt.s32.totalorder 0, %v3833
  %v3835 = vsel %vm3834, 0, %v3833
  %v3836 = vsub.s32 32, %v3835
  %v3837 = vshll.u32 %v3828, %v3835
  %v3838 = vshrl.u32 %v3820, %v3836
  %v3839 = vor.u32 %v3837, %v3838
  %v3840 = vsub.s32 4294967266, %v3835
  %v3841 = vadd.s32 %v3840, 127
  %v3842 = vshll.u32 %v3841, 23
  %v3843 = vor.u32 4788187, %v3842
  %v3844 = vand.u32 2147483647, %v3843
  %v3846 = vcvt.s32.f32 %v3839
  %v3847 = vmul.f32 %v3846, %v3844
  %v3848 = vxor.u32 %v3847, 2147483648
  %v3849 = vsel %vm3728, %v3848, %v3847
  %v3850 = vsub.s32 4, %v3826
  %v3851 = vsel %vm3728, %v3850, %v3826
  %v3852 = vsel %vm3727, %v152, %v3849
  %v3853 = vsel %vm3727, 0, %v3851
  %v3854 = vmul.f32 %v3852, %v3852
  %v3855 = vmul.f32 %v3854, -0.001358992
  %v3856 = vadd.f32 %v3855, 0.041655596
  %v3857 = vmul.f32 %v3854, %v3856
  %v3858 = vadd.f32 %v3857, -0.4999988
  %v3859 = vmul.f32 %v3854, %v3858
  %v3860 = vadd.f32 1.0, %v3859
  %v3861 = vmul.f32 %v3852, %v3852
  %v3862 = vmul.f32 %v3861, -0.00019511016
  %v3863 = vadd.f32 %v3862, 0.008332121
  %v3864 = vmul.f32 %v3861, %v3863
  %v3865 = vadd.f32 %v3864, -0.16666654
  %v3866 = vmul.f32 %v3861, %v3865
  %v3867 = vadd.f32 %v3866, 1.0
  %v3868 = vmul.f32 %v3867, %v3852
  %vm3869 = vweird.f32 %v152
  %v3870 = vadd.s32 %v3853, 3
  %v3871 = vand.u32 %v3870, 3
  %vm3872 = vcmp.lt.s32.totalorder %v3871, 2
  %vm3873 = vcmp.eq.s32.totalorder %v3871, 0
  %v3874 = vxor.u32 %v3868, 2147483648
  %v3875 = vsel %vm3873, %v3860, %v3874
  %vm3876 = vcmp.eq.s32.totalorder %v3871, 2
  %v3877 = vxor.u32 %v3860, 2147483648
  %v3878 = vsel %vm3876, %v3877, %v3868
  %v3879 = vsel %vm3872, %v3875, %v3878
  %v3880 = vsel %vm3869, nan, %v3879
  %v3881 = vand.u32 2147483647, %v153
  %vm3882 = vcmp.le.f32.partialorder %v3881, 0.7853982
  %vm3883 = vcmp.lt.s32.totalorder %v153, 0
  %v3884 = vand.u32 %v153, 2139095040
  %v3885 = vshrl.u32 %v3884, 23
  %v3886 = vsub.s32 %v3885, 127
  %v3887 = vand.u32 2147483647, %v153
  %v3888 = vand.u32 %v3887, 8388607
  %v3889 = vor.u32 %v3888, 8388608
  %v3890 = vsub.s32 0, %v3889
  %v3891 = vadd.s32 %v3886, 1
  %vm3892 = vcmp.gt.s32.totalorder %v3891, 0
  %v3893 = vsel %vm3892, %v3891, 0
  %v3894 = vshrl.u32 %v3893, 5
  %v3895 = vand.u32 %v3893, 31
  %v3896 = vsub.s32 32, %v3895
  %v3897 = vshrl.u32 683565275, %v3896
  %v3898 = vshll.u32 683565275, %v3895
  %v3899 = vshrl.u32 2475754826, %v3896
  %v3900 = vor.u32 %v3898, %v3899
  %v3901 = vshll.u32 2475754826, %v3895
  %v3902 = vshrl.u32 2131351028, %v3896
  %v3903 = vor.u32 %v3901, %v3902
  %v3904 = vshll.u32 2131351028, %v3895
  %v3905 = vshrl.u32 2102212464, %v3896
  %v3906 = vor.u32 %v3904, %v3905
  %v3907 = vshll.u32 2102212464, %v3895
  %v3908 = vshrl.u32 920167782, %v3896
  %v3909 = vor.u32 %v3907, %v3908
  %v3910 = vshll.u32 920167782, %v3895
  %v3911 = vshrl.u32 1326507024, %v3896
  %v3912 = vor.u32 %v3910, %v3911
  %vm3913 = vcmp.lt.s32.totalorder %v3894, 1
  %vm3914 = vcmp.lt.s32.totalorder %v3894, 2
  %vm3915 = vcmp.lt.s32.totalorder %v3894, 3
  %vm3916 = vcmp.lt.s32.totalorder %v3894, 4
  %v3917 = vsel %vm3913, %v3897, %v3900
  %v3918 = vsel %vm3916, %v3906, 2102212464
  %v3919 = vsel %vm3915, %v3903, %v3918
  %v3920 = vsel %vm3914, %v3917, %v3919
  %v3921 = vsel %vm3913, %v3900, %v3903
  %v3922 = vsel %vm3916, %v3909, 920167782
  %v3923 = vsel %vm3915, %v3906, %v3922
  %v3924 = vsel %vm3914, %v3921, %v3923
  %v3925 = vsel %vm3913, %v3903, %v3906
  %v3926 = vsel %vm3916, %v3912, 1326507024
  %v3927 = vsel %vm3915, %v3909, %v3926
  %v3928 = vsel %vm3914, %v3925, %v3927
  %v3929 = vshll.u32 %v3889, 8
  %v3930 = vand.u32 %v3929, 65535
  %v3931 = vshrl.u32 %v3929, 16
  %v3932 = vand.u32 %v3928, 65535
  %v3933 = vshrl.u32 %v3928, 16
  %v3934 = vmul.u32 %v3930, %v3932
  %v3935 = vmul.u32 %v3930, %v3933
  %v3936 = vmul.u32 %v3931, %v3932
  %v3937 = vmul.u32 %v3931, %v3933
  %v3938 = vshll.u32 %v3935, 16
  %v3939 = vshrl.u32 %v3935, 16
  %v3940 = vshll.u32 %v3936, 16
  %v3941 = vshrl.u32 %v3936, 16
  %vm3942 = vc.u32 %v3934, %v3938
  %v3943 = vsel %vm3942, 1, 0
  %v3944 = vadd.s32 %v3934, %v3938
  %v3945 = vadd.s32 %v3937, %v3943
  %vm3946 = vc.u32 %v3944, %v3940
  %v3947 = vsel %vm3946, 1, 0
  %v3948 = vadd.s32 %v3944, %v3940
  %v3949 = vadd.s32 %v3945, %v3947
  %v3950 = vadd.s32 %v3949, %v3939
  %v3951 = vadd.s32 %v3950, %v3941
  %v3952 = vand.u32 %v3929, 65535
  %v3953 = vshrl.u32 %v3929, 16
  %v3954 = vand.u32 %v3924, 65535
  %v3955 = vshrl.u32 %v3924, 16
  %v3956 = vmul.u32 %v3952, %v3954
  %v3957 = vmul.u32 %v3952, %v3955
  %v3958 = vmul.u32 %v3953, %v3954
  %v3959 = vmul.u32 %v3953, %v3955
  %v3960 = vshll.u32 %v3957, 16
  %v3961 = vshrl.u32 %v3957, 16
  %v3962 = vshll.u32 %v3958, 16
  %v3963 = vshrl.u32 %v3958, 16
  %vm3964 = vc.u32 %v3956, %v3960
  %v3965 = vsel %vm3964, 1, 0
  %v3966 = vadd.s32 %v3956, %v3960
  %v3967 = vadd.s32 %v3959, %v3965
  %vm3968 = vc.u32 %v3966, %v3962
  %v3969 = vsel %vm3968, 1, 0
  %v3970 = vadd.s32 %v3966, %v3962
  %v3971 = vadd.s32 %v3967, %v3969
  %v3972 = vadd.s32 %v3971, %v3961
  %v3973 = vadd.s32 %v3972, %v3963
  %v3974 = vmul.u32 %v3929, %v3920
  %v3975 = vadd.s32 %v3951, %v3970
  %vm3976 = vc.u32 %v3951, %v3970
  %v3977 = vadd.s32 %v3973, 1
  %v3978 = vsel %vm3976, %v3977, %v3973
  %v3979 = vadd.s32 %v3974, %v3978
  %v3980 = vadd.s32 %v3979, 536870912
  %v3981 = vshrl.u32 %v3980, 30
  %v3982 = vshll.u32 %v3981, 30
  %v3983 = vsub.s32 %v3979, %v3982
  %vm3984 = vcmp.lt.s32.totalorder %v3983, 0
  %v3985 = vsub.s32 0, %v3983
  %v3986 = vsel %vm3984, %v3985, %v3983
  %v3987 = vclz %v3986
  %v3988 = vsub.s32 %v3987, 2
  %vm3989 = vcmp.gt.s32.totalorder 0, %v3988
  %v3990 = vsel %vm3989, 0, %v3988
  %v3991 = vsub.s32 32, %v3990
  %v3992 = vshll.u32 %v3983, %v3990
  %v3993 = vshrl.u32 %v3975, %v3991
  %v3994 = vor.u32 %v3992, %v3993
  %v3995 = vsub.s32 4294967266, %v3990
  %v3996 = vadd.s32 %v3995, 127
  %v3997 = vshll.u32 %v3996, 23
  %v3998 = vor.u32 4788187, %v3997
  %v3999 = vand.u32 2147483647, %v3998
  %v4001 = vcvt.s32.f32 %v3994
  %v4002 = vmul.f32 %v4001, %v3999
  %v4003 = vxor.u32 %v4002, 2147483648
  %v4004 = vsel %vm3883, %v4003, %v4002
  %v4005 = vsub.s32 4, %v3981
  %v4006 = vsel %vm3883, %v4005, %v3981
  %v4007 = vsel %vm3882, %v153, %v4004
  %v4008 = vsel %vm3882, 0, %v4006
  %v4009 = vmul.f32 %v4007, %v4007
  %v4010 = vmul.f32 %v4009, -0.001358992
  %v4011 = vadd.f32 %v4010, 0.041655596
  %v4012 = vmul.f32 %v4009, %v4011
  %v4013 = vadd.f32 %v4012, -0.4999988
  %v4014 = vmul.f32 %v4009, %v4013
  %v4015 = vadd.f32 1.0, %v4014
  %v4016 = vmul.f32 %v4007, %v4007
  %v4017 = vmul.f32 %v4016, -0.00019511016
  %v4018 = vadd.f32 %v4017, 0.008332121
  %v4019 = vmul.f32 %v4016, %v4018
  %v4020 = vadd.f32 %v4019, -0.16666654
  %v4021 = vmul.f32 %v4016, %v4020
  %v4022 = vadd.f32 %v4021, 1.0
  %v4023 = vmul.f32 %v4022, %v4007
  %vm4024 = vweird.f32 %v153
  %v4025 = vadd.s32 %v4008, 3
  %v4026 = vand.u32 %v4025, 3
  %vm4027 = vcmp.lt.s32.totalorder %v4026, 2
  %vm4028 = vcmp.eq.s32.totalorder %v4026, 0
  %v4029 = vxor.u32 %v4023, 2147483648
  %v4030 = vsel %vm4028, %v4015, %v4029
  %vm4031 = vcmp.eq.s32.totalorder %v4026, 2
  %v4032 = vxor.u32 %v4015, 2147483648
  %v4033 = vsel %vm4031, %v4032, %v4023
  %v4034 = vsel %vm4027, %v4030, %v4033
  %v4035 = vsel %vm4024, nan, %v4034
  %v4036 = vand.u32 2147483647, %v154
  %vm4037 = vcmp.le.f32.partialorder %v4036, 0.7853982
  %vm4038 = vcmp.lt.s32.totalorder %v154, 0
  %v4039 = vand.u32 %v154, 2139095040
  %v4040 = vshrl.u32 %v4039, 23
  %v4041 = vsub.s32 %v4040, 127
  %v4042 = vand.u32 2147483647, %v154
  %v4043 = vand.u32 %v4042, 8388607
  %v4044 = vor.u32 %v4043, 8388608
  %v4045 = vsub.s32 0, %v4044
  %v4046 = vadd.s32 %v4041, 1
  %vm4047 = vcmp.gt.s32.totalorder %v4046, 0
  %v4048 = vsel %vm4047, %v4046, 0
  %v4049 = vshrl.u32 %v4048, 5
  %v4050 = vand.u32 %v4048, 31
  %v4051 = vsub.s32 32, %v4050
  %v4052 = vshrl.u32 683565275, %v4051
  %v4053 = vshll.u32 683565275, %v4050
  %v4054 = vshrl.u32 2475754826, %v4051
  %v4055 = vor.u32 %v4053, %v4054
  %v4056 = vshll.u32 2475754826, %v4050
  %v4057 = vshrl.u32 2131351028, %v4051
  %v4058 = vor.u32 %v4056, %v4057
  %v4059 = vshll.u32 2131351028, %v4050
  %v4060 = vshrl.u32 2102212464, %v4051
  %v4061 = vor.u32 %v4059, %v4060
  %v4062 = vshll.u32 2102212464, %v4050
  %v4063 = vshrl.u32 920167782, %v4051
  %v4064 = vor.u32 %v4062, %v4063
  %v4065 = vshll.u32 920167782, %v4050
  %v4066 = vshrl.u32 1326507024, %v4051
  %v4067 = vor.u32 %v4065, %v4066
  %vm4068 = vcmp.lt.s32.totalorder %v4049, 1
  %vm4069 = vcmp.lt.s32.totalorder %v4049, 2
  %vm4070 = vcmp.lt.s32.totalorder %v4049, 3
  %vm4071 = vcmp.lt.s32.totalorder %v4049, 4
  %v4072 = vsel %vm4068, %v4052, %v4055
  %v4073 = vsel %vm4071, %v4061, 2102212464
  %v4074 = vsel %vm4070, %v4058, %v4073
  %v4075 = vsel %vm4069, %v4072, %v4074
  %v4076 = vsel %vm4068, %v4055, %v4058
  %v4077 = vsel %vm4071, %v4064, 920167782
  %v4078 = vsel %vm4070, %v4061, %v4077
  %v4079 = vsel %vm4069, %v4076, %v4078
  %v4080 = vsel %vm4068, %v4058, %v4061
  %v4081 = vsel %vm4071, %v4067, 1326507024
  %v4082 = vsel %vm4070, %v4064, %v4081
  %v4083 = vsel %vm4069, %v4080, %v4082
  %v4084 = vshll.u32 %v4044, 8
  %v4085 = vand.u32 %v4084, 65535
  %v4086 = vshrl.u32 %v4084, 16
  %v4087 = vand.u32 %v4083, 65535
  %v4088 = vshrl.u32 %v4083, 16
  %v4089 = vmul.u32 %v4085, %v4087
  %v4090 = vmul.u32 %v4085, %v4088
  %v4091 = vmul.u32 %v4086, %v4087
  %v4092 = vmul.u32 %v4086, %v4088
  %v4093 = vshll.u32 %v4090, 16
  %v4094 = vshrl.u32 %v4090, 16
  %v4095 = vshll.u32 %v4091, 16
  %v4096 = vshrl.u32 %v4091, 16
  %vm4097 = vc.u32 %v4089, %v4093
  %v4098 = vsel %vm4097, 1, 0
  %v4099 = vadd.s32 %v4089, %v4093
  %v4100 = vadd.s32 %v4092, %v4098
  %vm4101 = vc.u32 %v4099, %v4095
  %v4102 = vsel %vm4101, 1, 0
  %v4103 = vadd.s32 %v4099, %v4095
  %v4104 = vadd.s32 %v4100, %v4102
  %v4105 = vadd.s32 %v4104, %v4094
  %v4106 = vadd.s32 %v4105, %v4096
  %v4107 = vand.u32 %v4084, 65535
  %v4108 = vshrl.u32 %v4084, 16
  %v4109 = vand.u32 %v4079, 65535
  %v4110 = vshrl.u32 %v4079, 16
  %v4111 = vmul.u32 %v4107, %v4109
  %v4112 = vmul.u32 %v4107, %v4110
  %v4113 = vmul.u32 %v4108, %v4109
  %v4114 = vmul.u32 %v4108, %v4110
  %v4115 = vshll.u32 %v4112, 16
  %v4116 = vshrl.u32 %v4112, 16
  %v4117 = vshll.u32 %v4113, 16
  %v4118 = vshrl.u32 %v4113, 16
  %vm4119 = vc.u32 %v4111, %v4115
  %v4120 = vsel %vm4119, 1, 0
  %v4121 = vadd.s32 %v4111, %v4115
  %v4122 = vadd.s32 %v4114, %v4120
  %vm4123 = vc.u32 %v4121, %v4117
  %v4124 = vsel %vm4123, 1, 0
  %v4125 = vadd.s32 %v4121, %v4117
  %v4126 = vadd.s32 %v4122, %v4124
  %v4127 = vadd.s32 %v4126, %v4116
  %v4128 = vadd.s32 %v4127, %v4118
  %v4129 = vmul.u32 %v4084, %v4075
  %v4130 = vadd.s32 %v4106, %v4125
  %vm4131 = vc.u32 %v4106, %v4125
  %v4132 = vadd.s32 %v4128, 1
  %v4133 = vsel %vm4131, %v4132, %v4128
  %v4134 = vadd.s32 %v4129, %v4133
  %v4135 = vadd.s32 %v4134, 536870912
  %v4136 = vshrl.u32 %v4135, 30
  %v4137 = vshll.u32 %v4136, 30
  %v4138 = vsub.s32 %v4134, %v4137
  %vm4139 = vcmp.lt.s32.totalorder %v4138, 0
  %v4140 = vsub.s32 0, %v4138
  %v4141 = vsel %vm4139, %v4140, %v4138
  %v4142 = vclz %v4141
  %v4143 = vsub.s32 %v4142, 2
  %vm4144 = vcmp.gt.s32.totalorder 0, %v4143
  %v4145 = vsel %vm4144, 0, %v4143
  %v4146 = vsub.s32 32, %v4145
  %v4147 = vshll.u32 %v4138, %v4145
  %v4148 = vshrl.u32 %v4130, %v4146
  %v4149 = vor.u32 %v4147, %v4148
  %v4150 = vsub.s32 4294967266, %v4145
  %v4151 = vadd.s32 %v4150, 127
  %v4152 = vshll.u32 %v4151, 23
  %v4153 = vor.u32 4788187, %v4152
  %v4154 = vand.u32 2147483647, %v4153
  %v4156 = vcvt.s32.f32 %v4149
  %v4157 = vmul.f32 %v4156, %v4154
  %v4158 = vxor.u32 %v4157, 2147483648
  %v4159 = vsel %vm4038, %v4158, %v4157
  %v4160 = vsub.s32 4, %v4136
  %v4161 = vsel %vm4038, %v4160, %v4136
  %v4162 = vsel %vm4037, %v154, %v4159
  %v4163 = vsel %vm4037, 0, %v4161
  %v4164 = vmul.f32 %v4162, %v4162
  %v4165 = vmul.f32 %v4164, -0.001358992
  %v4166 = vadd.f32 %v4165, 0.041655596
  %v4167 = vmul.f32 %v4164, %v4166
  %v4168 = vadd.f32 %v4167, -0.4999988
  %v4169 = vmul.f32 %v4164, %v4168
  %v4170 = vadd.f32 1.0, %v4169
  %v4171 = vmul.f32 %v4162, %v4162
  %v4172 = vmul.f32 %v4171, -0.00019511016
  %v4173 = vadd.f32 %v4172, 0.008332121
  %v4174 = vmul.f32 %v4171, %v4173
  %v4175 = vadd.f32 %v4174, -0.16666654
  %v4176 = vmul.f32 %v4171, %v4175
  %v4177 = vadd.f32 %v4176, 1.0
  %v4178 = vmul.f32 %v4177, %v4162
  %vm4179 = vweird.f32 %v154
  %v4180 = vadd.s32 %v4163, 3
  %v4181 = vand.u32 %v4180, 3
  %vm4182 = vcmp.lt.s32.totalorder %v4181, 2
  %vm4183 = vcmp.eq.s32.totalorder %v4181, 0
  %v4184 = vxor.u32 %v4178, 2147483648
  %v4185 = vsel %vm4183, %v4170, %v4184
  %vm4186 = vcmp.eq.s32.totalorder %v4181, 2
  %v4187 = vxor.u32 %v4170, 2147483648
  %v4188 = vsel %vm4186, %v4187, %v4178
  %v4189 = vsel %vm4182, %v4185, %v4188
  %v4190 = vsel %vm4179, nan, %v4189
  %v4191 = vand.u32 2147483647, %v155
  %vm4192 = vcmp.le.f32.partialorder %v4191, 0.7853982
  %vm4193 = vcmp.lt.s32.totalorder %v155, 0
  %v4194 = vand.u32 %v155, 2139095040
  %v4195 = vshrl.u32 %v4194, 23
  %v4196 = vsub.s32 %v4195, 127
  %v4197 = vand.u32 2147483647, %v155
  %v4198 = vand.u32 %v4197, 8388607
  %v4199 = vor.u32 %v4198, 8388608
  %v4200 = vsub.s32 0, %v4199
  %v4201 = vadd.s32 %v4196, 1
  %vm4202 = vcmp.gt.s32.totalorder %v4201, 0
  %v4203 = vsel %vm4202, %v4201, 0
  %v4204 = vshrl.u32 %v4203, 5
  %v4205 = vand.u32 %v4203, 31
  %v4206 = vsub.s32 32, %v4205
  %v4207 = vshrl.u32 683565275, %v4206
  %v4208 = vshll.u32 683565275, %v4205
  %v4209 = vshrl.u32 2475754826, %v4206
  %v4210 = vor.u32 %v4208, %v4209
  %v4211 = vshll.u32 2475754826, %v4205
  %v4212 = vshrl.u32 2131351028, %v4206
  %v4213 = vor.u32 %v4211, %v4212
  %v4214 = vshll.u32 2131351028, %v4205
  %v4215 = vshrl.u32 2102212464, %v4206
  %v4216 = vor.u32 %v4214, %v4215
  %v4217 = vshll.u32 2102212464, %v4205
  %v4218 = vshrl.u32 920167782, %v4206
  %v4219 = vor.u32 %v4217, %v4218
  %v4220 = vshll.u32 920167782, %v4205
  %v4221 = vshrl.u32 1326507024, %v4206
  %v4222 = vor.u32 %v4220, %v4221
  %vm4223 = vcmp.lt.s32.totalorder %v4204, 1
  %vm4224 = vcmp.lt.s32.totalorder %v4204, 2
  %vm4225 = vcmp.lt.s32.totalorder %v4204, 3
  %vm4226 = vcmp.lt.s32.totalorder %v4204, 4
  %v4227 = vsel %vm4223, %v4207, %v4210
  %v4228 = vsel %vm4226, %v4216, 2102212464
  %v4229 = vsel %vm4225, %v4213, %v4228
  %v4230 = vsel %vm4224, %v4227, %v4229
  %v4231 = vsel %vm4223, %v4210, %v4213
  %v4232 = vsel %vm4226, %v4219, 920167782
  %v4233 = vsel %vm4225, %v4216, %v4232
  %v4234 = vsel %vm4224, %v4231, %v4233
  %v4235 = vsel %vm4223, %v4213, %v4216
  %v4236 = vsel %vm4226, %v4222, 1326507024
  %v4237 = vsel %vm4225, %v4219, %v4236
  %v4238 = vsel %vm4224, %v4235, %v4237
  %v4239 = vshll.u32 %v4199, 8
  %v4240 = vand.u32 %v4239, 65535
  %v4241 = vshrl.u32 %v4239, 16
  %v4242 = vand.u32 %v4238, 65535
  %v4243 = vshrl.u32 %v4238, 16
  %v4244 = vmul.u32 %v4240, %v4242
  %v4245 = vmul.u32 %v4240, %v4243
  %v4246 = vmul.u32 %v4241, %v4242
  %v4247 = vmul.u32 %v4241, %v4243
  %v4248 = vshll.u32 %v4245, 16
  %v4249 = vshrl.u32 %v4245, 16
  %v4250 = vshll.u32 %v4246, 16
  %v4251 = vshrl.u32 %v4246, 16
  %vm4252 = vc.u32 %v4244, %v4248
  %v4253 = vsel %vm4252, 1, 0
  %v4254 = vadd.s32 %v4244, %v4248
  %v4255 = vadd.s32 %v4247, %v4253
  %vm4256 = vc.u32 %v4254, %v4250
  %v4257 = vsel %vm4256, 1, 0
  %v4258 = vadd.s32 %v4254, %v4250
  %v4259 = vadd.s32 %v4255, %v4257
  %v4260 = vadd.s32 %v4259, %v4249
  %v4261 = vadd.s32 %v4260, %v4251
  %v4262 = vand.u32 %v4239, 65535
  %v4263 = vshrl.u32 %v4239, 16
  %v4264 = vand.u32 %v4234, 65535
  %v4265 = vshrl.u32 %v4234, 16
  %v4266 = vmul.u32 %v4262, %v4264
  %v4267 = vmul.u32 %v4262, %v4265
  %v4268 = vmul.u32 %v4263, %v4264
  %v4269 = vmul.u32 %v4263, %v4265
  %v4270 = vshll.u32 %v4267, 16
  %v4271 = vshrl.u32 %v4267, 16
  %v4272 = vshll.u32 %v4268, 16
  %v4273 = vshrl.u32 %v4268, 16
  %vm4274 = vc.u32 %v4266, %v4270
  %v4275 = vsel %vm4274, 1, 0
  %v4276 = vadd.s32 %v4266, %v4270
  %v4277 = vadd.s32 %v4269, %v4275
  %vm4278 = vc.u32 %v4276, %v4272
  %v4279 = vsel %vm4278, 1, 0
  %v4280 = vadd.s32 %v4276, %v4272
  %v4281 = vadd.s32 %v4277, %v4279
  %v4282 = vadd.s32 %v4281, %v4271
  %v4283 = vadd.s32 %v4282, %v4273
  %v4284 = vmul.u32 %v4239, %v4230
  %v4285 = vadd.s32 %v4261, %v4280
  %vm4286 = vc.u32 %v4261, %v4280
  %v4287 = vadd.s32 %v4283, 1
  %v4288 = vsel %vm4286, %v4287, %v4283
  %v4289 = vadd.s32 %v4284, %v4288
  %v4290 = vadd.s32 %v4289, 536870912
  %v4291 = vshrl.u32 %v4290, 30
  %v4292 = vshll.u32 %v4291, 30
  %v4293 = vsub.s32 %v4289, %v4292
  %vm4294 = vcmp.lt.s32.totalorder %v4293, 0
  %v4295 = vsub.s32 0, %v4293
  %v4296 = vsel %vm4294, %v4295, %v4293
  %v4297 = vclz %v4296
  %v4298 = vsub.s32 %v4297, 2
  %vm4299 = vcmp.gt.s32.totalorder 0, %v4298
  %v4300 = vsel %vm4299, 0, %v4298
  %v4301 = vsub.s32 32, %v4300
  %v4302 = vshll.u32 %v4293, %v4300
  %v4303 = vshrl.u32 %v4285, %v4301
  %v4304 = vor.u32 %v4302, %v4303
  %v4305 = vsub.s32 4294967266, %v4300
  %v4306 = vadd.s32 %v4305, 127
  %v4307 = vshll.u32 %v4306, 23
  %v4308 = vor.u32 4788187, %v4307
  %v4309 = vand.u32 2147483647, %v4308
  %v4311 = vcvt.s32.f32 %v4304
  %v4312 = vmul.f32 %v4311, %v4309
  %v4313 = vxor.u32 %v4312, 2147483648
  %v4314 = vsel %vm4193, %v4313, %v4312
  %v4315 = vsub.s32 4, %v4291
  %v4316 = vsel %vm4193, %v4315, %v4291
  %v4317 = vsel %vm4192, %v155, %v4314
  %v4318 = vsel %vm4192, 0, %v4316
  %v4319 = vmul.f32 %v4317, %v4317
  %v4320 = vmul.f32 %v4319, -0.001358992
  %v4321 = vadd.f32 %v4320, 0.041655596
  %v4322 = vmul.f32 %v4319, %v4321
  %v4323 = vadd.f32 %v4322, -0.4999988
  %v4324 = vmul.f32 %v4319, %v4323
  %v4325 = vadd.f32 1.0, %v4324
  %v4326 = vmul.f32 %v4317, %v4317
  %v4327 = vmul.f32 %v4326, -0.00019511016
  %v4328 = vadd.f32 %v4327, 0.008332121
  %v4329 = vmul.f32 %v4326, %v4328
  %v4330 = vadd.f32 %v4329, -0.16666654
  %v4331 = vmul.f32 %v4326, %v4330
  %v4332 = vadd.f32 %v4331, 1.0
  %v4333 = vmul.f32 %v4332, %v4317
  %vm4334 = vweird.f32 %v155
  %v4335 = vadd.s32 %v4318, 3
  %v4336 = vand.u32 %v4335, 3
  %vm4337 = vcmp.lt.s32.totalorder %v4336, 2
  %vm4338 = vcmp.eq.s32.totalorder %v4336, 0
  %v4339 = vxor.u32 %v4333, 2147483648
  %v4340 = vsel %vm4338, %v4325, %v4339
  %vm4341 = vcmp.eq.s32.totalorder %v4336, 2
  %v4342 = vxor.u32 %v4325, 2147483648
  %v4343 = vsel %vm4341, %v4342, %v4333
  %v4344 = vsel %vm4337, %v4340, %v4343
  %v4345 = vsel %vm4334, nan, %v4344
  %v4346 = vand.u32 2147483647, %v156
  %vm4347 = vcmp.le.f32.partialorder %v4346, 0.7853982
  %vm4348 = vcmp.lt.s32.totalorder %v156, 0
  %v4349 = vand.u32 %v156, 2139095040
  %v4350 = vshrl.u32 %v4349, 23
  %v4351 = vsub.s32 %v4350, 127
  %v4352 = vand.u32 2147483647, %v156
  %v4353 = vand.u32 %v4352, 8388607
  %v4354 = vor.u32 %v4353, 8388608
  %v4355 = vsub.s32 0, %v4354
  %v4356 = vadd.s32 %v4351, 1
  %vm4357 = vcmp.gt.s32.totalorder %v4356, 0
  %v4358 = vsel %vm4357, %v4356, 0
  %v4359 = vshrl.u32 %v4358, 5
  %v4360 = vand.u32 %v4358, 31
  %v4361 = vsub.s32 32, %v4360
  %v4362 = vshrl.u32 683565275, %v4361
  %v4363 = vshll.u32 683565275, %v4360
  %v4364 = vshrl.u32 2475754826, %v4361
  %v4365 = vor.u32 %v4363, %v4364
  %v4366 = vshll.u32 2475754826, %v4360
  %v4367 = vshrl.u32 2131351028, %v4361
  %v4368 = vor.u32 %v4366, %v4367
  %v4369 = vshll.u32 2131351028, %v4360
  %v4370 = vshrl.u32 2102212464, %v4361
  %v4371 = vor.u32 %v4369, %v4370
  %v4372 = vshll.u32 2102212464, %v4360
  %v4373 = vshrl.u32 920167782, %v4361
  %v4374 = vor.u32 %v4372, %v4373
  %v4375 = vshll.u32 920167782, %v4360
  %v4376 = vshrl.u32 1326507024, %v4361
  %v4377 = vor.u32 %v4375, %v4376
  %vm4378 = vcmp.lt.s32.totalorder %v4359, 1
  %vm4379 = vcmp.lt.s32.totalorder %v4359, 2
  %vm4380 = vcmp.lt.s32.totalorder %v4359, 3
  %vm4381 = vcmp.lt.s32.totalorder %v4359, 4
  %v4382 = vsel %vm4378, %v4362, %v4365
  %v4383 = vsel %vm4381, %v4371, 2102212464
  %v4384 = vsel %vm4380, %v4368, %v4383
  %v4385 = vsel %vm4379, %v4382, %v4384
  %v4386 = vsel %vm4378, %v4365, %v4368
  %v4387 = vsel %vm4381, %v4374, 920167782
  %v4388 = vsel %vm4380, %v4371, %v4387
  %v4389 = vsel %vm4379, %v4386, %v4388
  %v4390 = vsel %vm4378, %v4368, %v4371
  %v4391 = vsel %vm4381, %v4377, 1326507024
  %v4392 = vsel %vm4380, %v4374, %v4391
  %v4393 = vsel %vm4379, %v4390, %v4392
  %v4394 = vshll.u32 %v4354, 8
  %v4395 = vand.u32 %v4394, 65535
  %v4396 = vshrl.u32 %v4394, 16
  %v4397 = vand.u32 %v4393, 65535
  %v4398 = vshrl.u32 %v4393, 16
  %v4399 = vmul.u32 %v4395, %v4397
  %v4400 = vmul.u32 %v4395, %v4398
  %v4401 = vmul.u32 %v4396, %v4397
  %v4402 = vmul.u32 %v4396, %v4398
  %v4403 = vshll.u32 %v4400, 16
  %v4404 = vshrl.u32 %v4400, 16
  %v4405 = vshll.u32 %v4401, 16
  %v4406 = vshrl.u32 %v4401, 16
  %vm4407 = vc.u32 %v4399, %v4403
  %v4408 = vsel %vm4407, 1, 0
  %v4409 = vadd.s32 %v4399, %v4403
  %v4410 = vadd.s32 %v4402, %v4408
  %vm4411 = vc.u32 %v4409, %v4405
  %v4412 = vsel %vm4411, 1, 0
  %v4413 = vadd.s32 %v4409, %v4405
  %v4414 = vadd.s32 %v4410, %v4412
  %v4415 = vadd.s32 %v4414, %v4404
  %v4416 = vadd.s32 %v4415, %v4406
  %v4417 = vand.u32 %v4394, 65535
  %v4418 = vshrl.u32 %v4394, 16
  %v4419 = vand.u32 %v4389, 65535
  %v4420 = vshrl.u32 %v4389, 16
  %v4421 = vmul.u32 %v4417, %v4419
  %v4422 = vmul.u32 %v4417, %v4420
  %v4423 = vmul.u32 %v4418, %v4419
  %v4424 = vmul.u32 %v4418, %v4420
  %v4425 = vshll.u32 %v4422, 16
  %v4426 = vshrl.u32 %v4422, 16
  %v4427 = vshll.u32 %v4423, 16
  %v4428 = vshrl.u32 %v4423, 16
  %vm4429 = vc.u32 %v4421, %v4425
  %v4430 = vsel %vm4429, 1, 0
  %v4431 = vadd.s32 %v4421, %v4425
  %v4432 = vadd.s32 %v4424, %v4430
  %vm4433 = vc.u32 %v4431, %v4427
  %v4434 = vsel %vm4433, 1, 0
  %v4435 = vadd.s32 %v4431, %v4427
  %v4436 = vadd.s32 %v4432, %v4434
  %v4437 = vadd.s32 %v4436, %v4426
  %v4438 = vadd.s32 %v4437, %v4428
  %v4439 = vmul.u32 %v4394, %v4385
  %v4440 = vadd.s32 %v4416, %v4435
  %vm4441 = vc.u32 %v4416, %v4435
  %v4442 = vadd.s32 %v4438, 1
  %v4443 = vsel %vm4441, %v4442, %v4438
  %v4444 = vadd.s32 %v4439, %v4443
  %v4445 = vadd.s32 %v4444, 536870912
  %v4446 = vshrl.u32 %v4445, 30
  %v4447 = vshll.u32 %v4446, 30
  %v4448 = vsub.s32 %v4444, %v4447
  %vm4449 = vcmp.lt.s32.totalorder %v4448, 0
  %v4450 = vsub.s32 0, %v4448
  %v4451 = vsel %vm4449, %v4450, %v4448
  %v4452 = vclz %v4451
  %v4453 = vsub.s32 %v4452, 2
  %vm4454 = vcmp.gt.s32.totalorder 0, %v4453
  %v4455 = vsel %vm4454, 0, %v4453
  %v4456 = vsub.s32 32, %v4455
  %v4457 = vshll.u32 %v4448, %v4455
  %v4458 = vshrl.u32 %v4440, %v4456
  %v4459 = vor.u32 %v4457, %v4458
  %v4460 = vsub.s32 4294967266, %v4455
  %v4461 = vadd.s32 %v4460, 127
  %v4462 = vshll.u32 %v4461, 23
  %v4463 = vor.u32 4788187, %v4462
  %v4464 = vand.u32 2147483647, %v4463
  %v4466 = vcvt.s32.f32 %v4459
  %v4467 = vmul.f32 %v4466, %v4464
  %v4468 = vxor.u32 %v4467, 2147483648
  %v4469 = vsel %vm4348, %v4468, %v4467
  %v4470 = vsub.s32 4, %v4446
  %v4471 = vsel %vm4348, %v4470, %v4446
  %v4472 = vsel %vm4347, %v156, %v4469
  %v4473 = vsel %vm4347, 0, %v4471
  %v4474 = vmul.f32 %v4472, %v4472
  %v4475 = vmul.f32 %v4474, -0.001358992
  %v4476 = vadd.f32 %v4475, 0.041655596
  %v4477 = vmul.f32 %v4474, %v4476
  %v4478 = vadd.f32 %v4477, -0.4999988
  %v4479 = vmul.f32 %v4474, %v4478
  %v4480 = vadd.f32 1.0, %v4479
  %v4481 = vmul.f32 %v4472, %v4472
  %v4482 = vmul.f32 %v4481, -0.00019511016
  %v4483 = vadd.f32 %v4482, 0.008332121
  %v4484 = vmul.f32 %v4481, %v4483
  %v4485 = vadd.f32 %v4484, -0.16666654
  %v4486 = vmul.f32 %v4481, %v4485
  %v4487 = vadd.f32 %v4486, 1.0
  %v4488 = vmul.f32 %v4487, %v4472
  %vm4489 = vweird.f32 %v156
  %v4490 = vadd.s32 %v4473, 3
  %v4491 = vand.u32 %v4490, 3
  %vm4492 = vcmp.lt.s32.totalorder %v4491, 2
  %vm4493 = vcmp.eq.s32.totalorder %v4491, 0
  %v4494 = vxor.u32 %v4488, 2147483648
  %v4495 = vsel %vm4493, %v4480, %v4494
  %vm4496 = vcmp.eq.s32.totalorder %v4491, 2
  %v4497 = vxor.u32 %v4480, 2147483648
  %v4498 = vsel %vm4496, %v4497, %v4488
  %v4499 = vsel %vm4492, %v4495, %v4498
  %v4500 = vsel %vm4489, nan, %v4499
  %v4501 = vand.u32 2147483647, %v157
  %vm4502 = vcmp.le.f32.partialorder %v4501, 0.7853982
  %vm4503 = vcmp.lt.s32.totalorder %v157, 0
  %v4504 = vand.u32 %v157, 2139095040
  %v4505 = vshrl.u32 %v4504, 23
  %v4506 = vsub.s32 %v4505, 127
  %v4507 = vand.u32 2147483647, %v157
  %v4508 = vand.u32 %v4507, 8388607
  %v4509 = vor.u32 %v4508, 8388608
  %v4510 = vsub.s32 0, %v4509
  %v4511 = vadd.s32 %v4506, 1
  %vm4512 = vcmp.gt.s32.totalorder %v4511, 0
  %v4513 = vsel %vm4512, %v4511, 0
  %v4514 = vshrl.u32 %v4513, 5
  %v4515 = vand.u32 %v4513, 31
  %v4516 = vsub.s32 32, %v4515
  %v4517 = vshrl.u32 683565275, %v4516
  %v4518 = vshll.u32 683565275, %v4515
  %v4519 = vshrl.u32 2475754826, %v4516
  %v4520 = vor.u32 %v4518, %v4519
  %v4521 = vshll.u32 2475754826, %v4515
  %v4522 = vshrl.u32 2131351028, %v4516
  %v4523 = vor.u32 %v4521, %v4522
  %v4524 = vshll.u32 2131351028, %v4515
  %v4525 = vshrl.u32 2102212464, %v4516
  %v4526 = vor.u32 %v4524, %v4525
  %v4527 = vshll.u32 2102212464, %v4515
  %v4528 = vshrl.u32 920167782, %v4516
  %v4529 = vor.u32 %v4527, %v4528
  %v4530 = vshll.u32 920167782, %v4515
  %v4531 = vshrl.u32 1326507024, %v4516
  %v4532 = vor.u32 %v4530, %v4531
  %vm4533 = vcmp.lt.s32.totalorder %v4514, 1
  %vm4534 = vcmp.lt.s32.totalorder %v4514, 2
  %vm4535 = vcmp.lt.s32.totalorder %v4514, 3
  %vm4536 = vcmp.lt.s32.totalorder %v4514, 4
  %v4537 = vsel %vm4533, %v4517, %v4520
  %v4538 = vsel %vm4536, %v4526, 2102212464
  %v4539 = vsel %vm4535, %v4523, %v4538
  %v4540 = vsel %vm4534, %v4537, %v4539
  %v4541 = vsel %vm4533, %v4520, %v4523
  %v4542 = vsel %vm4536, %v4529, 920167782
  %v4543 = vsel %vm4535, %v4526, %v4542
  %v4544 = vsel %vm4534, %v4541, %v4543
  %v4545 = vsel %vm4533, %v4523, %v4526
  %v4546 = vsel %vm4536, %v4532, 1326507024
  %v4547 = vsel %vm4535, %v4529, %v4546
  %v4548 = vsel %vm4534, %v4545, %v4547
  %v4549 = vshll.u32 %v4509, 8
  %v4550 = vand.u32 %v4549, 65535
  %v4551 = vshrl.u32 %v4549, 16
  %v4552 = vand.u32 %v4548, 65535
  %v4553 = vshrl.u32 %v4548, 16
  %v4554 = vmul.u32 %v4550, %v4552
  %v4555 = vmul.u32 %v4550, %v4553
  %v4556 = vmul.u32 %v4551, %v4552
  %v4557 = vmul.u32 %v4551, %v4553
  %v4558 = vshll.u32 %v4555, 16
  %v4559 = vshrl.u32 %v4555, 16
  %v4560 = vshll.u32 %v4556, 16
  %v4561 = vshrl.u32 %v4556, 16
  %vm4562 = vc.u32 %v4554, %v4558
  %v4563 = vsel %vm4562, 1, 0
  %v4564 = vadd.s32 %v4554, %v4558
  %v4565 = vadd.s32 %v4557, %v4563
  %vm4566 = vc.u32 %v4564, %v4560
  %v4567 = vsel %vm4566, 1, 0
  %v4568 = vadd.s32 %v4564, %v4560
  %v4569 = vadd.s32 %v4565, %v4567
  %v4570 = vadd.s32 %v4569, %v4559
  %v4571 = vadd.s32 %v4570, %v4561
  %v4572 = vand.u32 %v4549, 65535
  %v4573 = vshrl.u32 %v4549, 16
  %v4574 = vand.u32 %v4544, 65535
  %v4575 = vshrl.u32 %v4544, 16
  %v4576 = vmul.u32 %v4572, %v4574
  %v4577 = vmul.u32 %v4572, %v4575
  %v4578 = vmul.u32 %v4573, %v4574
  %v4579 = vmul.u32 %v4573, %v4575
  %v4580 = vshll.u32 %v4577, 16
  %v4581 = vshrl.u32 %v4577, 16
  %v4582 = vshll.u32 %v4578, 16
  %v4583 = vshrl.u32 %v4578, 16
  %vm4584 = vc.u32 %v4576, %v4580
  %v4585 = vsel %vm4584, 1, 0
  %v4586 = vadd.s32 %v4576, %v4580
  %v4587 = vadd.s32 %v4579, %v4585
  %vm4588 = vc.u32 %v4586, %v4582
  %v4589 = vsel %vm4588, 1, 0
  %v4590 = vadd.s32 %v4586, %v4582
  %v4591 = vadd.s32 %v4587, %v4589
  %v4592 = vadd.s32 %v4591, %v4581
  %v4593 = vadd.s32 %v4592, %v4583
  %v4594 = vmul.u32 %v4549, %v4540
  %v4595 = vadd.s32 %v4571, %v4590
  %vm4596 = vc.u32 %v4571, %v4590
  %v4597 = vadd.s32 %v4593, 1
  %v4598 = vsel %vm4596, %v4597, %v4593
  %v4599 = vadd.s32 %v4594, %v4598
  %v4600 = vadd.s32 %v4599, 536870912
  %v4601 = vshrl.u32 %v4600, 30
  %v4602 = vshll.u32 %v4601, 30
  %v4603 = vsub.s32 %v4599, %v4602
  %vm4604 = vcmp.lt.s32.totalorder %v4603, 0
  %v4605 = vsub.s32 0, %v4603
  %v4606 = vsel %vm4604, %v4605, %v4603
  %v4607 = vclz %v4606
  %v4608 = vsub.s32 %v4607, 2
  %vm4609 = vcmp.gt.s32.totalorder 0, %v4608
  %v4610 = vsel %vm4609, 0, %v4608
  %v4611 = vsub.s32 32, %v4610
  %v4612 = vshll.u32 %v4603, %v4610
  %v4613 = vshrl.u32 %v4595, %v4611
  %v4614 = vor.u32 %v4612, %v4613
  %v4615 = vsub.s32 4294967266, %v4610
  %v4616 = vadd.s32 %v4615, 127
  %v4617 = vshll.u32 %v4616, 23
  %v4618 = vor.u32 4788187, %v4617
  %v4619 = vand.u32 2147483647, %v4618
  %v4621 = vcvt.s32.f32 %v4614
  %v4622 = vmul.f32 %v4621, %v4619
  %v4623 = vxor.u32 %v4622, 2147483648
  %v4624 = vsel %vm4503, %v4623, %v4622
  %v4625 = vsub.s32 4, %v4601
  %v4626 = vsel %vm4503, %v4625, %v4601
  %v4627 = vsel %vm4502, %v157, %v4624
  %v4628 = vsel %vm4502, 0, %v4626
  %v4629 = vmul.f32 %v4627, %v4627
  %v4630 = vmul.f32 %v4629, -0.001358992
  %v4631 = vadd.f32 %v4630, 0.041655596
  %v4632 = vmul.f32 %v4629, %v4631
  %v4633 = vadd.f32 %v4632, -0.4999988
  %v4634 = vmul.f32 %v4629, %v4633
  %v4635 = vadd.f32 1.0, %v4634
  %v4636 = vmul.f32 %v4627, %v4627
  %v4637 = vmul.f32 %v4636, -0.00019511016
  %v4638 = vadd.f32 %v4637, 0.008332121
  %v4639 = vmul.f32 %v4636, %v4638
  %v4640 = vadd.f32 %v4639, -0.16666654
  %v4641 = vmul.f32 %v4636, %v4640
  %v4642 = vadd.f32 %v4641, 1.0
  %v4643 = vmul.f32 %v4642, %v4627
  %vm4644 = vweird.f32 %v157
  %v4645 = vadd.s32 %v4628, 3
  %v4646 = vand.u32 %v4645, 3
  %vm4647 = vcmp.lt.s32.totalorder %v4646, 2
  %vm4648 = vcmp.eq.s32.totalorder %v4646, 0
  %v4649 = vxor.u32 %v4643, 2147483648
  %v4650 = vsel %vm4648, %v4635, %v4649
  %vm4651 = vcmp.eq.s32.totalorder %v4646, 2
  %v4652 = vxor.u32 %v4635, 2147483648
  %v4653 = vsel %vm4651, %v4652, %v4643
  %v4654 = vsel %vm4647, %v4650, %v4653
  %v4655 = vsel %vm4644, nan, %v4654
  %v4656 = vand.u32 2147483647, %v158
  %vm4657 = vcmp.le.f32.partialorder %v4656, 0.7853982
  %vm4658 = vcmp.lt.s32.totalorder %v158, 0
  %v4659 = vand.u32 %v158, 2139095040
  %v4660 = vshrl.u32 %v4659, 23
  %v4661 = vsub.s32 %v4660, 127
  %v4662 = vand.u32 2147483647, %v158
  %v4663 = vand.u32 %v4662, 8388607
  %v4664 = vor.u32 %v4663, 8388608
  %v4665 = vsub.s32 0, %v4664
  %v4666 = vadd.s32 %v4661, 1
  %vm4667 = vcmp.gt.s32.totalorder %v4666, 0
  %v4668 = vsel %vm4667, %v4666, 0
  %v4669 = vshrl.u32 %v4668, 5
  %v4670 = vand.u32 %v4668, 31
  %v4671 = vsub.s32 32, %v4670
  %v4672 = vshrl.u32 683565275, %v4671
  %v4673 = vshll.u32 683565275, %v4670
  %v4674 = vshrl.u32 2475754826, %v4671
  %v4675 = vor.u32 %v4673, %v4674
  %v4676 = vshll.u32 2475754826, %v4670
  %v4677 = vshrl.u32 2131351028, %v4671
  %v4678 = vor.u32 %v4676, %v4677
  %v4679 = vshll.u32 2131351028, %v4670
  %v4680 = vshrl.u32 2102212464, %v4671
  %v4681 = vor.u32 %v4679, %v4680
  %v4682 = vshll.u32 2102212464, %v4670
  %v4683 = vshrl.u32 920167782, %v4671
  %v4684 = vor.u32 %v4682, %v4683
  %v4685 = vshll.u32 920167782, %v4670
  %v4686 = vshrl.u32 1326507024, %v4671
  %v4687 = vor.u32 %v4685, %v4686
  %vm4688 = vcmp.lt.s32.totalorder %v4669, 1
  %vm4689 = vcmp.lt.s32.totalorder %v4669, 2
  %vm4690 = vcmp.lt.s32.totalorder %v4669, 3
  %vm4691 = vcmp.lt.s32.totalorder %v4669, 4
  %v4692 = vsel %vm4688, %v4672, %v4675
  %v4693 = vsel %vm4691, %v4681, 2102212464
  %v4694 = vsel %vm4690, %v4678, %v4693
  %v4695 = vsel %vm4689, %v4692, %v4694
  %v4696 = vsel %vm4688, %v4675, %v4678
  %v4697 = vsel %vm4691, %v4684, 920167782
  %v4698 = vsel %vm4690, %v4681, %v4697
  %v4699 = vsel %vm4689, %v4696, %v4698
  %v4700 = vsel %vm4688, %v4678, %v4681
  %v4701 = vsel %vm4691, %v4687, 1326507024
  %v4702 = vsel %vm4690, %v4684, %v4701
  %v4703 = vsel %vm4689, %v4700, %v4702
  %v4704 = vshll.u32 %v4664, 8
  %v4705 = vand.u32 %v4704, 65535
  %v4706 = vshrl.u32 %v4704, 16
  %v4707 = vand.u32 %v4703, 65535
  %v4708 = vshrl.u32 %v4703, 16
  %v4709 = vmul.u32 %v4705, %v4707
  %v4710 = vmul.u32 %v4705, %v4708
  %v4711 = vmul.u32 %v4706, %v4707
  %v4712 = vmul.u32 %v4706, %v4708
  %v4713 = vshll.u32 %v4710, 16
  %v4714 = vshrl.u32 %v4710, 16
  %v4715 = vshll.u32 %v4711, 16
  %v4716 = vshrl.u32 %v4711, 16
  %vm4717 = vc.u32 %v4709, %v4713
  %v4718 = vsel %vm4717, 1, 0
  %v4719 = vadd.s32 %v4709, %v4713
  %v4720 = vadd.s32 %v4712, %v4718
  %vm4721 = vc.u32 %v4719, %v4715
  %v4722 = vsel %vm4721, 1, 0
  %v4723 = vadd.s32 %v4719, %v4715
  %v4724 = vadd.s32 %v4720, %v4722
  %v4725 = vadd.s32 %v4724, %v4714
  %v4726 = vadd.s32 %v4725, %v4716
  %v4727 = vand.u32 %v4704, 65535
  %v4728 = vshrl.u32 %v4704, 16
  %v4729 = vand.u32 %v4699, 65535
  %v4730 = vshrl.u32 %v4699, 16
  %v4731 = vmul.u32 %v4727, %v4729
  %v4732 = vmul.u32 %v4727, %v4730
  %v4733 = vmul.u32 %v4728, %v4729
  %v4734 = vmul.u32 %v4728, %v4730
  %v4735 = vshll.u32 %v4732, 16
  %v4736 = vshrl.u32 %v4732, 16
  %v4737 = vshll.u32 %v4733, 16
  %v4738 = vshrl.u32 %v4733, 16
  %vm4739 = vc.u32 %v4731, %v4735
  %v4740 = vsel %vm4739, 1, 0
  %v4741 = vadd.s32 %v4731, %v4735
  %v4742 = vadd.s32 %v4734, %v4740
  %vm4743 = vc.u32 %v4741, %v4737
  %v4744 = vsel %vm4743, 1, 0
  %v4745 = vadd.s32 %v4741, %v4737
  %v4746 = vadd.s32 %v4742, %v4744
  %v4747 = vadd.s32 %v4746, %v4736
  %v4748 = vadd.s32 %v4747, %v4738
  %v4749 = vmul.u32 %v4704, %v4695
  %v4750 = vadd.s32 %v4726, %v4745
  %vm4751 = vc.u32 %v4726, %v4745
  %v4752 = vadd.s32 %v4748, 1
  %v4753 = vsel %vm4751, %v4752, %v4748
  %v4754 = vadd.s32 %v4749, %v4753
  %v4755 = vadd.s32 %v4754, 536870912
  %v4756 = vshrl.u32 %v4755, 30
  %v4757 = vshll.u32 %v4756, 30
  %v4758 = vsub.s32 %v4754, %v4757
  %vm4759 = vcmp.lt.s32.totalorder %v4758, 0
  %v4760 = vsub.s32 0, %v4758
  %v4761 = vsel %vm4759, %v4760, %v4758
  %v4762 = vclz %v4761
  %v4763 = vsub.s32 %v4762, 2
  %vm4764 = vcmp.gt.s32.totalorder 0, %v4763
  %v4765 = vsel %vm4764, 0, %v4763
  %v4766 = vsub.s32 32, %v4765
  %v4767 = vshll.u32 %v4758, %v4765
  %v4768 = vshrl.u32 %v4750, %v4766
  %v4769 = vor.u32 %v4767, %v4768
  %v4770 = vsub.s32 4294967266, %v4765
  %v4771 = vadd.s32 %v4770, 127
  %v4772 = vshll.u32 %v4771, 23
  %v4773 = vor.u32 4788187, %v4772
  %v4774 = vand.u32 2147483647, %v4773
  %v4776 = vcvt.s32.f32 %v4769
  %v4777 = vmul.f32 %v4776, %v4774
  %v4778 = vxor.u32 %v4777, 2147483648
  %v4779 = vsel %vm4658, %v4778, %v4777
  %v4780 = vsub.s32 4, %v4756
  %v4781 = vsel %vm4658, %v4780, %v4756
  %v4782 = vsel %vm4657, %v158, %v4779
  %v4783 = vsel %vm4657, 0, %v4781
  %v4784 = vmul.f32 %v4782, %v4782
  %v4785 = vmul.f32 %v4784, -0.001358992
  %v4786 = vadd.f32 %v4785, 0.041655596
  %v4787 = vmul.f32 %v4784, %v4786
  %v4788 = vadd.f32 %v4787, -0.4999988
  %v4789 = vmul.f32 %v4784, %v4788
  %v4790 = vadd.f32 1.0, %v4789
  %v4791 = vmul.f32 %v4782, %v4782
  %v4792 = vmul.f32 %v4791, -0.00019511016
  %v4793 = vadd.f32 %v4792, 0.008332121
  %v4794 = vmul.f32 %v4791, %v4793
  %v4795 = vadd.f32 %v4794, -0.16666654
  %v4796 = vmul.f32 %v4791, %v4795
  %v4797 = vadd.f32 %v4796, 1.0
  %v4798 = vmul.f32 %v4797, %v4782
  %vm4799 = vweird.f32 %v158
  %v4800 = vadd.s32 %v4783, 3
  %v4801 = vand.u32 %v4800, 3
  %vm4802 = vcmp.lt.s32.totalorder %v4801, 2
  %vm4803 = vcmp.eq.s32.totalorder %v4801, 0
  %v4804 = vxor.u32 %v4798, 2147483648
  %v4805 = vsel %vm4803, %v4790, %v4804
  %vm4806 = vcmp.eq.s32.totalorder %v4801, 2
  %v4807 = vxor.u32 %v4790, 2147483648
  %v4808 = vsel %vm4806, %v4807, %v4798
  %v4809 = vsel %vm4802, %v4805, %v4808
  %v4810 = vsel %vm4799, nan, %v4809
  %v4811 = vand.u32 2147483647, %v159
  %vm4812 = vcmp.le.f32.partialorder %v4811, 0.7853982
  %vm4813 = vcmp.lt.s32.totalorder %v159, 0
  %v4814 = vand.u32 %v159, 2139095040
  %v4815 = vshrl.u32 %v4814, 23
  %v4816 = vsub.s32 %v4815, 127
  %v4817 = vand.u32 2147483647, %v159
  %v4818 = vand.u32 %v4817, 8388607
  %v4819 = vor.u32 %v4818, 8388608
  %v4820 = vsub.s32 0, %v4819
  %v4821 = vadd.s32 %v4816, 1
  %vm4822 = vcmp.gt.s32.totalorder %v4821, 0
  %v4823 = vsel %vm4822, %v4821, 0
  %v4824 = vshrl.u32 %v4823, 5
  %v4825 = vand.u32 %v4823, 31
  %v4826 = vsub.s32 32, %v4825
  %v4827 = vshrl.u32 683565275, %v4826
  %v4828 = vshll.u32 683565275, %v4825
  %v4829 = vshrl.u32 2475754826, %v4826
  %v4830 = vor.u32 %v4828, %v4829
  %v4831 = vshll.u32 2475754826, %v4825
  %v4832 = vshrl.u32 2131351028, %v4826
  %v4833 = vor.u32 %v4831, %v4832
  %v4834 = vshll.u32 2131351028, %v4825
  %v4835 = vshrl.u32 2102212464, %v4826
  %v4836 = vor.u32 %v4834, %v4835
  %v4837 = vshll.u32 2102212464, %v4825
  %v4838 = vshrl.u32 920167782, %v4826
  %v4839 = vor.u32 %v4837, %v4838
  %v4840 = vshll.u32 920167782, %v4825
  %v4841 = vshrl.u32 1326507024, %v4826
  %v4842 = vor.u32 %v4840, %v4841
  %vm4843 = vcmp.lt.s32.totalorder %v4824, 1
  %vm4844 = vcmp.lt.s32.totalorder %v4824, 2
  %vm4845 = vcmp.lt.s32.totalorder %v4824, 3
  %vm4846 = vcmp.lt.s32.totalorder %v4824, 4
  %v4847 = vsel %vm4843, %v4827, %v4830
  %v4848 = vsel %vm4846, %v4836, 2102212464
  %v4849 = vsel %vm4845, %v4833, %v4848
  %v4850 = vsel %vm4844, %v4847, %v4849
  %v4851 = vsel %vm4843, %v4830, %v4833
  %v4852 = vsel %vm4846, %v4839, 920167782
  %v4853 = vsel %vm4845, %v4836, %v4852
  %v4854 = vsel %vm4844, %v4851, %v4853
  %v4855 = vsel %vm4843, %v4833, %v4836
  %v4856 = vsel %vm4846, %v4842, 1326507024
  %v4857 = vsel %vm4845, %v4839, %v4856
  %v4858 = vsel %vm4844, %v4855, %v4857
  %v4859 = vshll.u32 %v4819, 8
  %v4860 = vand.u32 %v4859, 65535
  %v4861 = vshrl.u32 %v4859, 16
  %v4862 = vand.u32 %v4858, 65535
  %v4863 = vshrl.u32 %v4858, 16
  %v4864 = vmul.u32 %v4860, %v4862
  %v4865 = vmul.u32 %v4860, %v4863
  %v4866 = vmul.u32 %v4861, %v4862
  %v4867 = vmul.u32 %v4861, %v4863
  %v4868 = vshll.u32 %v4865, 16
  %v4869 = vshrl.u32 %v4865, 16
  %v4870 = vshll.u32 %v4866, 16
  %v4871 = vshrl.u32 %v4866, 16
  %vm4872 = vc.u32 %v4864, %v4868
  %v4873 = vsel %vm4872, 1, 0
  %v4874 = vadd.s32 %v4864, %v4868
  %v4875 = vadd.s32 %v4867, %v4873
  %vm4876 = vc.u32 %v4874, %v4870
  %v4877 = vsel %vm4876, 1, 0
  %v4878 = vadd.s32 %v4874, %v4870
  %v4879 = vadd.s32 %v4875, %v4877
  %v4880 = vadd.s32 %v4879, %v4869
  %v4881 = vadd.s32 %v4880, %v4871
  %v4882 = vand.u32 %v4859, 65535
  %v4883 = vshrl.u32 %v4859, 16
  %v4884 = vand.u32 %v4854, 65535
  %v4885 = vshrl.u32 %v4854, 16
  %v4886 = vmul.u32 %v4882, %v4884
  %v4887 = vmul.u32 %v4882, %v4885
  %v4888 = vmul.u32 %v4883, %v4884
  %v4889 = vmul.u32 %v4883, %v4885
  %v4890 = vshll.u32 %v4887, 16
  %v4891 = vshrl.u32 %v4887, 16
  %v4892 = vshll.u32 %v4888, 16
  %v4893 = vshrl.u32 %v4888, 16
  %vm4894 = vc.u32 %v4886, %v4890
  %v4895 = vsel %vm4894, 1, 0
  %v4896 = vadd.s32 %v4886, %v4890
  %v4897 = vadd.s32 %v4889, %v4895
  %vm4898 = vc.u32 %v4896, %v4892
  %v4899 = vsel %vm4898, 1, 0
  %v4900 = vadd.s32 %v4896, %v4892
  %v4901 = vadd.s32 %v4897, %v4899
  %v4902 = vadd.s32 %v4901, %v4891
  %v4903 = vadd.s32 %v4902, %v4893
  %v4904 = vmul.u32 %v4859, %v4850
  %v4905 = vadd.s32 %v4881, %v4900
  %vm4906 = vc.u32 %v4881, %v4900
  %v4907 = vadd.s32 %v4903, 1
  %v4908 = vsel %vm4906, %v4907, %v4903
  %v4909 = vadd.s32 %v4904, %v4908
  %v4910 = vadd.s32 %v4909, 536870912
  %v4911 = vshrl.u32 %v4910, 30
  %v4912 = vshll.u32 %v4911, 30
  %v4913 = vsub.s32 %v4909, %v4912
  %vm4914 = vcmp.lt.s32.totalorder %v4913, 0
  %v4915 = vsub.s32 0, %v4913
  %v4916 = vsel %vm4914, %v4915, %v4913
  %v4917 = vclz %v4916
  %v4918 = vsub.s32 %v4917, 2
  %vm4919 = vcmp.gt.s32.totalorder 0, %v4918
  %v4920 = vsel %vm4919, 0, %v4918
  %v4921 = vsub.s32 32, %v4920
  %v4922 = vshll.u32 %v4913, %v4920
  %v4923 = vshrl.u32 %v4905, %v4921
  %v4924 = vor.u32 %v4922, %v4923
  %v4925 = vsub.s32 4294967266, %v4920
  %v4926 = vadd.s32 %v4925, 127
  %v4927 = vshll.u32 %v4926, 23
  %v4928 = vor.u32 4788187, %v4927
  %v4929 = vand.u32 2147483647, %v4928
  %v4931 = vcvt.s32.f32 %v4924
  %v4932 = vmul.f32 %v4931, %v4929
  %v4933 = vxor.u32 %v4932, 2147483648
  %v4934 = vsel %vm4813, %v4933, %v4932
  %v4935 = vsub.s32 4, %v4911
  %v4936 = vsel %vm4813, %v4935, %v4911
  %v4937 = vsel %vm4812, %v159, %v4934
  %v4938 = vsel %vm4812, 0, %v4936
  %v4939 = vmul.f32 %v4937, %v4937
  %v4940 = vmul.f32 %v4939, -0.001358992
  %v4941 = vadd.f32 %v4940, 0.041655596
  %v4942 = vmul.f32 %v4939, %v4941
  %v4943 = vadd.f32 %v4942, -0.4999988
  %v4944 = vmul.f32 %v4939, %v4943
  %v4945 = vadd.f32 1.0, %v4944
  %v4946 = vmul.f32 %v4937, %v4937
  %v4947 = vmul.f32 %v4946, -0.00019511016
  %v4948 = vadd.f32 %v4947, 0.008332121
  %v4949 = vmul.f32 %v4946, %v4948
  %v4950 = vadd.f32 %v4949, -0.16666654
  %v4951 = vmul.f32 %v4946, %v4950
  %v4952 = vadd.f32 %v4951, 1.0
  %v4953 = vmul.f32 %v4952, %v4937
  %vm4954 = vweird.f32 %v159
  %v4955 = vadd.s32 %v4938, 3
  %v4956 = vand.u32 %v4955, 3
  %vm4957 = vcmp.lt.s32.totalorder %v4956, 2
  %vm4958 = vcmp.eq.s32.totalorder %v4956, 0
  %v4959 = vxor.u32 %v4953, 2147483648
  %v4960 = vsel %vm4958, %v4945, %v4959
  %vm4961 = vcmp.eq.s32.totalorder %v4956, 2
  %v4962 = vxor.u32 %v4945, 2147483648
  %v4963 = vsel %vm4961, %v4962, %v4953
  %v4964 = vsel %vm4957, %v4960, %v4963
  %v4965 = vsel %vm4954, nan, %v4964
  %v4966 = vand.u32 2147483647, %v160
  %vm4967 = vcmp.le.f32.partialorder %v4966, 0.7853982
  %vm4968 = vcmp.lt.s32.totalorder %v160, 0
  %v4969 = vand.u32 %v160, 2139095040
  %v4970 = vshrl.u32 %v4969, 23
  %v4971 = vsub.s32 %v4970, 127
  %v4972 = vand.u32 2147483647, %v160
  %v4973 = vand.u32 %v4972, 8388607
  %v4974 = vor.u32 %v4973, 8388608
  %v4975 = vsub.s32 0, %v4974
  %v4976 = vadd.s32 %v4971, 1
  %vm4977 = vcmp.gt.s32.totalorder %v4976, 0
  %v4978 = vsel %vm4977, %v4976, 0
  %v4979 = vshrl.u32 %v4978, 5
  %v4980 = vand.u32 %v4978, 31
  %v4981 = vsub.s32 32, %v4980
  %v4982 = vshrl.u32 683565275, %v4981
  %v4983 = vshll.u32 683565275, %v4980
  %v4984 = vshrl.u32 2475754826, %v4981
  %v4985 = vor.u32 %v4983, %v4984
  %v4986 = vshll.u32 2475754826, %v4980
  %v4987 = vshrl.u32 2131351028, %v4981
  %v4988 = vor.u32 %v4986, %v4987
  %v4989 = vshll.u32 2131351028, %v4980
  %v4990 = vshrl.u32 2102212464, %v4981
  %v4991 = vor.u32 %v4989, %v4990
  %v4992 = vshll.u32 2102212464, %v4980
  %v4993 = vshrl.u32 920167782, %v4981
  %v4994 = vor.u32 %v4992, %v4993
  %v4995 = vshll.u32 920167782, %v4980
  %v4996 = vshrl.u32 1326507024, %v4981
  %v4997 = vor.u32 %v4995, %v4996
  %vm4998 = vcmp.lt.s32.totalorder %v4979, 1
  %vm4999 = vcmp.lt.s32.totalorder %v4979, 2
  %vm5000 = vcmp.lt.s32.totalorder %v4979, 3
  %vm5001 = vcmp.lt.s32.totalorder %v4979, 4
  %v5002 = vsel %vm4998, %v4982, %v4985
  %v5003 = vsel %vm5001, %v4991, 2102212464
  %v5004 = vsel %vm5000, %v4988, %v5003
  %v5005 = vsel %vm4999, %v5002, %v5004
  %v5006 = vsel %vm4998, %v4985, %v4988
  %v5007 = vsel %vm5001, %v4994, 920167782
  %v5008 = vsel %vm5000, %v4991, %v5007
  %v5009 = vsel %vm4999, %v5006, %v5008
  %v5010 = vsel %vm4998, %v4988, %v4991
  %v5011 = vsel %vm5001, %v4997, 1326507024
  %v5012 = vsel %vm5000, %v4994, %v5011
  %v5013 = vsel %vm4999, %v5010, %v5012
  %v5014 = vshll.u32 %v4974, 8
  %v5015 = vand.u32 %v5014, 65535
  %v5016 = vshrl.u32 %v5014, 16
  %v5017 = vand.u32 %v5013, 65535
  %v5018 = vshrl.u32 %v5013, 16
  %v5019 = vmul.u32 %v5015, %v5017
  %v5020 = vmul.u32 %v5015, %v5018
  %v5021 = vmul.u32 %v5016, %v5017
  %v5022 = vmul.u32 %v5016, %v5018
  %v5023 = vshll.u32 %v5020, 16
  %v5024 = vshrl.u32 %v5020, 16
  %v5025 = vshll.u32 %v5021, 16
  %v5026 = vshrl.u32 %v5021, 16
  %vm5027 = vc.u32 %v5019, %v5023
  %v5028 = vsel %vm5027, 1, 0
  %v5029 = vadd.s32 %v5019, %v5023
  %v5030 = vadd.s32 %v5022, %v5028
  %vm5031 = vc.u32 %v5029, %v5025
  %v5032 = vsel %vm5031, 1, 0
  %v5033 = vadd.s32 %v5029, %v5025
  %v5034 = vadd.s32 %v5030, %v5032
  %v5035 = vadd.s32 %v5034, %v5024
  %v5036 = vadd.s32 %v5035, %v5026
  %v5037 = vand.u32 %v5014, 65535
  %v5038 = vshrl.u32 %v5014, 16
  %v5039 = vand.u32 %v5009, 65535
  %v5040 = vshrl.u32 %v5009, 16
  %v5041 = vmul.u32 %v5037, %v5039
  %v5042 = vmul.u32 %v5037, %v5040
  %v5043 = vmul.u32 %v5038, %v5039
  %v5044 = vmul.u32 %v5038, %v5040
  %v5045 = vshll.u32 %v5042, 16
  %v5046 = vshrl.u32 %v5042, 16
  %v5047 = vshll.u32 %v5043, 16
  %v5048 = vshrl.u32 %v5043, 16
  %vm5049 = vc.u32 %v5041, %v5045
  %v5050 = vsel %vm5049, 1, 0
  %v5051 = vadd.s32 %v5041, %v5045
  %v5052 = vadd.s32 %v5044, %v5050
  %vm5053 = vc.u32 %v5051, %v5047
  %v5054 = vsel %vm5053, 1, 0
  %v5055 = vadd.s32 %v5051, %v5047
  %v5056 = vadd.s32 %v5052, %v5054
  %v5057 = vadd.s32 %v5056, %v5046
  %v5058 = vadd.s32 %v5057, %v5048
  %v5059 = vmul.u32 %v5014, %v5005
  %v5060 = vadd.s32 %v5036, %v5055
  %vm5061 = vc.u32 %v5036, %v5055
  %v5062 = vadd.s32 %v5058, 1
  %v5063 = vsel %vm5061, %v5062, %v5058
  %v5064 = vadd.s32 %v5059, %v5063
  %v5065 = vadd.s32 %v5064, 536870912
  %v5066 = vshrl.u32 %v5065, 30
  %v5067 = vshll.u32 %v5066, 30
  %v5068 = vsub.s32 %v5064, %v5067
  %vm5069 = vcmp.lt.s32.totalorder %v5068, 0
  %v5070 = vsub.s32 0, %v5068
  %v5071 = vsel %vm5069, %v5070, %v5068
  %v5072 = vclz %v5071
  %v5073 = vsub.s32 %v5072, 2
  %vm5074 = vcmp.gt.s32.totalorder 0, %v5073
  %v5075 = vsel %vm5074, 0, %v5073
  %v5076 = vsub.s32 32, %v5075
  %v5077 = vshll.u32 %v5068, %v5075
  %v5078 = vshrl.u32 %v5060, %v5076
  %v5079 = vor.u32 %v5077, %v5078
  %v5080 = vsub.s32 4294967266, %v5075
  %v5081 = vadd.s32 %v5080, 127
  %v5082 = vshll.u32 %v5081, 23
  %v5083 = vor.u32 4788187, %v5082
  %v5084 = vand.u32 2147483647, %v5083
  %v5086 = vcvt.s32.f32 %v5079
  %v5087 = vmul.f32 %v5086, %v5084
  %v5088 = vxor.u32 %v5087, 2147483648
  %v5089 = vsel %vm4968, %v5088, %v5087
  %v5090 = vsub.s32 4, %v5066
  %v5091 = vsel %vm4968, %v5090, %v5066
  %v5092 = vsel %vm4967, %v160, %v5089
  %v5093 = vsel %vm4967, 0, %v5091
  %v5094 = vmul.f32 %v5092, %v5092
  %v5095 = vmul.f32 %v5094, -0.001358992
  %v5096 = vadd.f32 %v5095, 0.041655596
  %v5097 = vmul.f32 %v5094, %v5096
  %v5098 = vadd.f32 %v5097, -0.4999988
  %v5099 = vmul.f32 %v5094, %v5098
  %v5100 = vadd.f32 1.0, %v5099
  %v5101 = vmul.f32 %v5092, %v5092
  %v5102 = vmul.f32 %v5101, -0.00019511016
  %v5103 = vadd.f32 %v5102, 0.008332121
  %v5104 = vmul.f32 %v5101, %v5103
  %v5105 = vadd.f32 %v5104, -0.16666654
  %v5106 = vmul.f32 %v5101, %v5105
  %v5107 = vadd.f32 %v5106, 1.0
  %v5108 = vmul.f32 %v5107, %v5092
  %vm5109 = vweird.f32 %v160
  %v5110 = vadd.s32 %v5093, 3
  %v5111 = vand.u32 %v5110, 3
  %vm5112 = vcmp.lt.s32.totalorder %v5111, 2
  %vm5113 = vcmp.eq.s32.totalorder %v5111, 0
  %v5114 = vxor.u32 %v5108, 2147483648
  %v5115 = vsel %vm5113, %v5100, %v5114
  %vm5116 = vcmp.eq.s32.totalorder %v5111, 2
  %v5117 = vxor.u32 %v5100, 2147483648
  %v5118 = vsel %vm5116, %v5117, %v5108
  %v5119 = vsel %vm5112, %v5115, %v5118
  %v5120 = vsel %vm5109, nan, %v5119
  %5121 = vst [vmem:[%s1] sm:$0xff] %v315
  %5122 = vst [vmem:[%s1 + $0x8] sm:$0xff] %v470
  %5123 = vst [vmem:[%s1 + $0x10] sm:$0xff] %v625
  %5124 = vst [vmem:[%s1 + $0x18] sm:$0xff] %v780
  %5125 = vst [vmem:[%s1 + $0x20] sm:$0xff] %v935
  %5126 = vst [vmem:[%s1 + $0x28] sm:$0xff] %v1090
  %5127 = vst [vmem:[%s1 + $0x30] sm:$0xff] %v1245
  %5128 = vst [vmem:[%s1 + $0x38] sm:$0xff] %v1400
  %5129 = vst [vmem:[%s1 + $0x40] sm:$0xff] %v1555
  %5130 = vst [vmem:[%s1 + $0x48] sm:$0xff] %v1710
  %5131 = vst [vmem:[%s1 + $0x50] sm:$0xff] %v1865
  %5132 = vst [vmem:[%s1 + $0x58] sm:$0xff] %v2020
  %5133 = vst [vmem:[%s1 + $0x60] sm:$0xff] %v2175
  %5134 = vst [vmem:[%s1 + $0x68] sm:$0xff] %v2330
  %5135 = vst [vmem:[%s1 + $0x70] sm:$0xff] %v2485
  %5136 = vst [vmem:[%s1 + $0x78] sm:$0xff] %v2640
  %5137 = vst [vmem:[%s1 + $0x80] sm:$0xff] %v2795
  %5138 = vst [vmem:[%s1 + $0x88] sm:$0xff] %v2950
  %5139 = vst [vmem:[%s1 + $0x90] sm:$0xff] %v3105
  %5140 = vst [vmem:[%s1 + $0x98] sm:$0xff] %v3260
  %5141 = vst [vmem:[%s1 + $0xa0] sm:$0xff] %v3415
  %5142 = vst [vmem:[%s1 + $0xa8] sm:$0xff] %v3570
  %5143 = vst [vmem:[%s1 + $0xb0] sm:$0xff] %v3725
  %5144 = vst [vmem:[%s1 + $0xb8] sm:$0xff] %v3880
  %5145 = vst [vmem:[%s1 + $0xc0] sm:$0xff] %v4035
  %5146 = vst [vmem:[%s1 + $0xc8] sm:$0xff] %v4190
  %5147 = vst [vmem:[%s1 + $0xd0] sm:$0xff] %v4345
  %5148 = vst [vmem:[%s1 + $0xd8] sm:$0xff] %v4500
  %5149 = vst [vmem:[%s1 + $0xe0] sm:$0xff] %v4655
  %5150 = vst [vmem:[%s1 + $0xe8] sm:$0xff] %v4810
  %5151 = vst [vmem:[%s1 + $0xf0] sm:$0xff] %v4965
  %5152 = vst [vmem:[%s1 + $0xf8] sm:$0xff] %v5120
  // Predicated region
  $region6: #{positional_encoding_2d.1} parent=0 // pred_check
    _
  $region7: #{positional_encoding_2d.1} parent=0 // pred_check_branch
    %5154 = sbr.rel (0) target = $region9
  $region8: #{positional_encoding_2d.1} parent=0 // pred_region
    _
  $region9: #{positional_encoding_2d.1} parent=0 // pred_fallthru
    _
  // Predicated region
  $region10: #{positional_encoding_2d.1} parent=0 // pred_check
    _
  $region11: #{positional_encoding_2d.1} parent=0 // pred_check_branch
    %5156 = sbr.rel (0) target = $region13
  $region12: #{positional_encoding_2d.1} parent=0 // pred_region
    _
  $region13: #{positional_encoding_2d.1} parent=0 // pred_fallthru
    _

</llo_original>
